<compile_context>
chip_gen: v6e
topology: v6e:2x2x1
jax: 0.10.0
libtpu: 0.0.40
codegen_flags: <defaults>
</compile_context>

<pallas_src>
import jax
import jax.numpy as jnp
from jax.experimental import pallas as pl
from jax.experimental.pallas import tpu as pltpu

_PAD = 8  # sublane-aligned zero border on each side of the time axis


# ---------------------------------------------------------------------------
# Fused kernel: 3 x (conv1d k=3 'same' + folded-BN + ReLU + maxpool4) + head
# ---------------------------------------------------------------------------
def _m5_fused_kernel(x_ref, w2_ref, b2_ref, w3_ref, b3_ref, w4_ref, b4_ref,
                     fcw_ref, fcb_ref, o_ref, xp1_ref, xp2_ref, xp3_ref):
    f32 = jnp.float32

    def fill_padded(xp_ref, val):
        # xp_ref: (t + 2*_PAD, c) VMEM scratch.
        # Zero borders (aligned 8-row stores) + interior at offset _PAD
        # (aligned store since it starts at a multiple of 8).
        t, c = val.shape
        xp_ref[pl.ds(0, _PAD), :] = jnp.zeros((_PAD, c), f32)
        xp_ref[pl.ds(t + _PAD, _PAD), :] = jnp.zeros((_PAD, c), f32)
        xp_ref[pl.ds(_PAD, t), :] = val

    def conv_bn_relu_pool(xp_ref, w_ref, b_ref):
        # xp_ref: (t + 2*_PAD, cin) zero-bordered activation, interior at _PAD.
        # w_ref:  (3, cin, cout) with BN scale folded in.
        # b_ref:  (1, cout) conv bias + BN shift folded in.
        # Returns pooled activation (t//4, cout) as a register value.
        t = xp_ref.shape[0] - 2 * _PAD
        tq = t // 4
        # Hoist the three tap weights out of the phase loop (single vreg loads).
        w0, w1, w2 = w_ref[0], w_ref[1], w_ref[2]

        def phase(p):
            # y[4q+p] = sum_k x[4q+p-1+k] @ W_k ;  x[i] lives at scratch row i+_PAD
            acc = jnp.dot(xp_ref[pl.ds(_PAD - 1 + p, tq, stride=4), :], w0,
                          preferred_element_type=f32)
            acc = acc + jnp.dot(xp_ref[pl.ds(_PAD + p, tq, stride=4), :], w1,
                                preferred_element_type=f32)
            acc = acc + jnp.dot(xp_ref[pl.ds(_PAD + 1 + p, tq, stride=4), :], w2,
                                preferred_element_type=f32)
            return acc

        # maxpool(4) == max over the four phases (bias/ReLU commute with max).
        y = jnp.maximum(jnp.maximum(phase(0), phase(1)),
                        jnp.maximum(phase(2), phase(3)))
        return jnp.maximum(y + b_ref[...], 0.0)        # folded BN bias + ReLU

    # Layer 1: conv(80->32) + BN + ReLU + pool4
    fill_padded(xp1_ref, x_ref[0].astype(f32))
    a1 = conv_bn_relu_pool(xp1_ref, w2_ref, b2_ref)    # (T/4, 32)

    # Layer 2: conv(32->64) + BN + ReLU + pool4
    fill_padded(xp2_ref, a1)
    a2 = conv_bn_relu_pool(xp2_ref, w3_ref, b3_ref)    # (T/16, 64)

    # Layer 3: conv(64->64) + BN + ReLU + pool4
    fill_padded(xp3_ref, a2)
    a3 = conv_bn_relu_pool(xp3_ref, w4_ref, b4_ref)    # (T/64, 64)

    # Head: avg_pool over remaining time + Linear + log_softmax
    xm = jnp.mean(a3, axis=0, keepdims=True)                         # (1, 64)
    logits = jnp.dot(xm, fcw_ref[...],
                     preferred_element_type=f32) + fcb_ref[...]      # (1, 35)
    m = jnp.max(logits, axis=-1, keepdims=True)
    z = logits - m
    lse = jnp.log(jnp.sum(jnp.exp(z), axis=-1, keepdims=True))
    o_ref[0] = (z - lse).astype(o_ref.dtype)                         # log_softmax


def m5_fused(x, params):
    """x: (B, T, Cin) channels-last.  Returns (B, 1, n_output) log-probs."""
    B, T, cin = x.shape
    # TODO(synk): for T % 64 != 0 PyTorch's floor-division pooling drops the
    # remainder; only the exact-division case is implemented here.
    assert T % 64 == 0, "T must be divisible by 64 (three maxpool(4) stages)"
    c1 = params["w2"].shape[-1]
    c2 = params["w3"].shape[-1]
    c3 = params["w4"].shape[-1]
    n_out = params["fc_w"].shape[-1]
    T1, T2 = T // 4, T // 16

    grid_spec = pltpu.PrefetchScalarGridSpec(
        num_scalar_prefetch=0,
        grid=(B,),
        in_specs=[
            pl.BlockSpec((1, T, cin), lambda b: (b, 0, 0)),      # x (per batch)
            pl.BlockSpec((3, cin, c1), lambda b: (0, 0, 0)),     # w2 (resident)
            pl.BlockSpec((1, c1), lambda b: (0, 0)),             # b2
            pl.BlockSpec((3, c1, c2), lambda b: (0, 0, 0)),      # w3
            pl.BlockSpec((1, c2), lambda b: (0, 0)),             # b3
            pl.BlockSpec((3, c2, c3), lambda b: (0, 0, 0)),      # w4
            pl.BlockSpec((1, c3), lambda b: (0, 0)),             # b4
            pl.BlockSpec((c3, n_out), lambda b: (0, 0)),         # fc_w
            pl.BlockSpec((1, n_out), lambda b: (0, 0)),          # fc_b
        ],
        out_specs=pl.BlockSpec((1, 1, n_out), lambda b: (b, 0, 0)),
        scratch_shapes=[
            pltpu.VMEM((T + 2 * _PAD, cin), jnp.float32),   # padded input, L1
            pltpu.VMEM((T1 + 2 * _PAD, c1), jnp.float32),   # padded act,   L2
            pltpu.VMEM((T2 + 2 * _PAD, c2), jnp.float32),   # padded act,   L3
        ],
    )
    return pl.pallas_call(
        _m5_fused_kernel,
        out_shape=jax.ShapeDtypeStruct((B, 1, n_out), x.dtype),
        grid_spec=grid_spec,
        compiler_params=pltpu.CompilerParams(dimension_semantics=("parallel",)),
    )(x, params["w2"], params["b2"], params["w3"], params["b3"],
      params["w4"], params["b4"], params["fc_w"], params["fc_b"])


# ---------------------------------------------------------------------------
# Parameters (deterministic, synthetic) with BN folded into conv weight/bias
# ---------------------------------------------------------------------------
def make_params(key, n_input=80, n_output=35, n_channel=32):
    eps = 1e-5

    def conv_block_params(k, cin, cout):
        k1, k2, k3, k4, k5, k6 = jax.random.split(k, 6)
        w = 0.1 * jax.random.normal(k1, (3, cin, cout), jnp.float32)  # (K,Cin,Cout)
        conv_b = 0.1 * jax.random.normal(k2, (cout,), jnp.float32)
        gamma = 1.0 + 0.1 * jax.random.normal(k3, (cout,), jnp.float32)
        beta = 0.1 * jax.random.normal(k4, (cout,), jnp.float32)
        r_mean = 0.1 * jax.random.normal(k5, (cout,), jnp.float32)
        r_var = 1.0 + 0.1 * jnp.abs(jax.random.normal(k6, (cout,), jnp.float32))
        scale = gamma / jnp.sqrt(r_var + eps)
        w_folded = w * scale[None, None, :]
        b_folded = ((conv_b - r_mean) * scale + beta)[None, :]        # (1, Cout)
        return w_folded, b_folded

    ks = jax.random.split(key, 4)
    w2, b2 = conv_block_params(ks[0], n_input, n_channel)
    w3, b3 = conv_block_params(ks[1], n_channel, 2 * n_channel)
    w4, b4 = conv_block_params(ks[2], 2 * n_channel, 2 * n_channel)
    kf1, kf2 = jax.random.split(ks[3])
    fc_w = 0.1 * jax.random.normal(kf1, (2 * n_channel, n_output), jnp.float32)
    fc_b = (0.1 * jax.random.normal(kf2, (n_output,), jnp.float32))[None, :]
    return dict(w2=w2, b2=b2, w3=w3, b3=b3, w4=w4, b4=b4, fc_w=fc_w, fc_b=fc_b)


# ---------------------------------------------------------------------------
# Full forward (matches M5.forward with inference-mode BatchNorm)
# ---------------------------------------------------------------------------
def m5_forward(x, params):
    # x: (B, 1, n_input, T) like the PyTorch input; squeeze(1) -> (B, n_input, T)
    x = jnp.squeeze(x, axis=1)
    x = jnp.transpose(x, (0, 2, 1))        # NCW -> (B, T, C) channels-last
    return m5_fused(x, params)             # (B, 1, n_output) log-probs


# Pure-JAX reference (structural check only; loose tolerance for MXU precision)
def _ref_forward(x, params):
    hi = jax.lax.Precision.HIGHEST
    x = jnp.transpose(jnp.squeeze(x, axis=1), (0, 2, 1))   # (B, T, Cin)

    def block(x, w, b):
        xp = jnp.pad(x, ((0, 0), (1, 1), (0, 0)))
        y = (jnp.einsum("btc,cd->btd", xp[:, :-2], w[0], precision=hi)
             + jnp.einsum("btc,cd->btd", xp[:, 1:-1], w[1], precision=hi)
             + jnp.einsum("btc,cd->btd", xp[:, 2:], w[2], precision=hi)
             + b[None])
        y = jnp.maximum(y, 0.0)
        B, T, C = y.shape
        return jnp.max(y.reshape(B, T // 4, 4, C), axis=2)

    x = block(x, params["w2"], params["b2"])
    x = block(x, params["w3"], params["b3"])
    x = block(x, params["w4"], params["b4"])
    xm = jnp.mean(x, axis=1, keepdims=True)                 # (B, 1, 64)
    logits = jnp.einsum("bic,cd->bid", xm, params["fc_w"],
                        precision=hi) + params["fc_b"][None]
    return jax.nn.log_softmax(logits, axis=-1)


if __name__ == "__main__":
    key = jax.random.PRNGKey(0)
    kx, kp = jax.random.split(key)
    B, n_input, n_output, T = 2, 80, 35, 128
    x = jax.random.normal(kx, (B, 1, n_input, T), jnp.float32)
    params = make_params(kp, n_input=n_input, n_output=n_output, n_channel=32)

    y = jax.jit(m5_forward)(x, params)
    y = jax.block_until_ready(y)

    assert y.shape == (B, 1, n_output), y.shape
    # log_softmax rows must (approximately) exponentiate-sum to 1
    assert jnp.allclose(jnp.sum(jnp.exp(y), axis=-1), 1.0, atol=1e-4)
    # structural check against a pure-JAX reference (loose tol: MXU vs XLA paths)
    y_ref = _ref_forward(x, params)
    assert jnp.allclose(y, y_ref, atol=1e-1), float(jnp.max(jnp.abs(y - y_ref)))
    print("KERNEL_OK")
</pallas_src>

<mosaic_0001>
module attributes {stable_mosaic.version = 11 : i64} {
  func.func @_m5_fused_kernel(%arg0: i32, %arg1: memref<1x128x80xf32, #tpu.memory_space<vmem>>, %arg2: memref<3x80x32xf32, #tpu.memory_space<vmem>>, %arg3: memref<1x32xf32, #tpu.memory_space<vmem>>, %arg4: memref<3x32x64xf32, #tpu.memory_space<vmem>>, %arg5: memref<1x64xf32, #tpu.memory_space<vmem>>, %arg6: memref<3x64x64xf32, #tpu.memory_space<vmem>>, %arg7: memref<1x64xf32, #tpu.memory_space<vmem>>, %arg8: memref<64x35xf32, #tpu.memory_space<vmem>>, %arg9: memref<1x35xf32, #tpu.memory_space<vmem>>, %arg10: memref<1x1x35xf32, #tpu.memory_space<vmem>>, %arg11: memref<144x80xf32, #tpu.memory_space<vmem>>, %arg12: memref<48x32xf32, #tpu.memory_space<vmem>>, %arg13: memref<24x64xf32, #tpu.memory_space<vmem>>) attributes {dimension_semantics = [#tpu.dimension_semantics<parallel>], iteration_bounds = array<i64: 2>, scalar_prefetch = 0 : i64, scratch_operands = 3 : i64, tpu.core_type = #tpu.core_type<tc>, window_params = [{transform_indices = @transform_0, window_bounds = array<i64: 1, 128, 80>}, {pipeline_mode = #tpu.pipeline_mode<synchronous>, transform_indices = @transform_1, window_bounds = array<i64: 3, 80, 32>}, {pipeline_mode = #tpu.pipeline_mode<synchronous>, transform_indices = @transform_2, window_bounds = array<i64: 1, 32>}, {pipeline_mode = #tpu.pipeline_mode<synchronous>, transform_indices = @transform_3, window_bounds = array<i64: 3, 32, 64>}, {pipeline_mode = #tpu.pipeline_mode<synchronous>, transform_indices = @transform_4, window_bounds = array<i64: 1, 64>}, {pipeline_mode = #tpu.pipeline_mode<synchronous>, transform_indices = @transform_5, window_bounds = array<i64: 3, 64, 64>}, {pipeline_mode = #tpu.pipeline_mode<synchronous>, transform_indices = @transform_6, window_bounds = array<i64: 1, 64>}, {pipeline_mode = #tpu.pipeline_mode<synchronous>, transform_indices = @transform_7, window_bounds = array<i64: 64, 35>}, {pipeline_mode = #tpu.pipeline_mode<synchronous>, transform_indices = @transform_8, window_bounds = array<i64: 1, 35>}, {transform_indices = @transform_9, window_bounds = array<i64: 1, 1, 35>}]} {
    %c0 = arith.constant 0 : index
    %c0_0 = arith.constant 0 : index
    %c0_1 = arith.constant 0 : index
    %0 = vector.load %arg1[%c0, %c0_0, %c0_1] : memref<1x128x80xf32, #tpu.memory_space<vmem>>, vector<1x128x80xf32>
    %1 = vector.shape_cast %0 : vector<1x128x80xf32> to vector<128x80xf32>
    %cst = arith.constant 0.000000e+00 : f32
    %2 = vector.broadcast %cst : f32 to vector<8x80xf32>
    %c0_2 = arith.constant 0 : index
    %c0_3 = arith.constant 0 : index
    %3 = vector.load %arg11[%c0_2, %c0_3] : memref<144x80xf32, #tpu.memory_space<vmem>>, vector<8x80xf32>
    tpu.vector_store %arg11[%c0_2, %c0_3], %2 {strides = array<i32>} : memref<144x80xf32, #tpu.memory_space<vmem>>, vector<8x80xf32>,
    %cst_4 = arith.constant 0.000000e+00 : f32
    %4 = vector.broadcast %cst_4 : f32 to vector<8x80xf32>
    %c136 = arith.constant 136 : index
    %c0_5 = arith.constant 0 : index
    %5 = vector.load %arg11[%c136, %c0_5] : memref<144x80xf32, #tpu.memory_space<vmem>>, vector<8x80xf32>
    tpu.vector_store %arg11[%c136, %c0_5], %4 {strides = array<i32>} : memref<144x80xf32, #tpu.memory_space<vmem>>, vector<8x80xf32>,
    %c8 = arith.constant 8 : index
    %c0_6 = arith.constant 0 : index
    %6 = vector.load %arg11[%c8, %c0_6] : memref<144x80xf32, #tpu.memory_space<vmem>>, vector<128x80xf32>
    tpu.vector_store %arg11[%c8, %c0_6], %1 {strides = array<i32>} : memref<144x80xf32, #tpu.memory_space<vmem>>, vector<128x80xf32>,
    %c0_7 = arith.constant 0 : index
    %c0_8 = arith.constant 0 : index
    %c0_9 = arith.constant 0 : index
    %7 = vector.load %arg2[%c0_7, %c0_8, %c0_9] : memref<3x80x32xf32, #tpu.memory_space<vmem>>, vector<1x80x32xf32>
    %8 = vector.shape_cast %7 : vector<1x80x32xf32> to vector<80x32xf32>
    %c1 = arith.constant 1 : index
    %c0_10 = arith.constant 0 : index
    %c0_11 = arith.constant 0 : index
    %9 = vector.load %arg2[%c1, %c0_10, %c0_11] : memref<3x80x32xf32, #tpu.memory_space<vmem>>, vector<1x80x32xf32>
    %10 = vector.shape_cast %9 : vector<1x80x32xf32> to vector<80x32xf32>
    %c2 = arith.constant 2 : index
    %c0_12 = arith.constant 0 : index
    %c0_13 = arith.constant 0 : index
    %11 = vector.load %arg2[%c2, %c0_12, %c0_13] : memref<3x80x32xf32, #tpu.memory_space<vmem>>, vector<1x80x32xf32>
    %12 = vector.shape_cast %11 : vector<1x80x32xf32> to vector<80x32xf32>
    %c7 = arith.constant 7 : index
    %c0_14 = arith.constant 0 : index
    %13 = tpu.strided_load %arg11[%c7, %c0_14] {strides = array<i32: 4, 1>} : memref<144x80xf32, #tpu.memory_space<vmem>>, vector<32x80xf32>
    %cst_15 = arith.constant dense<0.000000e+00> : vector<32x32xf32>
    %14 = tpu.matmul %13, %8, %cst_15 {dimension_numbers = #tpu.dot_dimension_numbers<[1], [0], [0], [1], [0, 0, 1, 1], [], []>} : vector<32x80xf32>, vector<80x32xf32>, vector<32x32xf32> -> vector<32x32xf32>
    %c8_16 = arith.constant 8 : index
    %c0_17 = arith.constant 0 : index
    %15 = tpu.strided_load %arg11[%c8_16, %c0_17] {strides = array<i32: 4, 1>} : memref<144x80xf32, #tpu.memory_space<vmem>>, vector<32x80xf32>
    %cst_18 = arith.constant dense<0.000000e+00> : vector<32x32xf32>
    %16 = tpu.matmul %15, %10, %cst_18 {dimension_numbers = #tpu.dot_dimension_numbers<[1], [0], [0], [1], [0, 0, 1, 1], [], []>} : vector<32x80xf32>, vector<80x32xf32>, vector<32x32xf32> -> vector<32x32xf32>
    %17 = arith.addf %14, %16 : vector<32x32xf32>
    %c9 = arith.constant 9 : index
    %c0_19 = arith.constant 0 : index
    %18 = tpu.strided_load %arg11[%c9, %c0_19] {strides = array<i32: 4, 1>} : memref<144x80xf32, #tpu.memory_space<vmem>>, vector<32x80xf32>
    %cst_20 = arith.constant dense<0.000000e+00> : vector<32x32xf32>
    %19 = tpu.matmul %18, %12, %cst_20 {dimension_numbers = #tpu.dot_dimension_numbers<[1], [0], [0], [1], [0, 0, 1, 1], [], []>} : vector<32x80xf32>, vector<80x32xf32>, vector<32x32xf32> -> vector<32x32xf32>
    %20 = arith.addf %17, %19 : vector<32x32xf32>
    %c8_21 = arith.constant 8 : index
    %c0_22 = arith.constant 0 : index
    %21 = tpu.strided_load %arg11[%c8_21, %c0_22] {strides = array<i32: 4, 1>} : memref<144x80xf32, #tpu.memory_space<vmem>>, vector<32x80xf32>
    %cst_23 = arith.constant dense<0.000000e+00> : vector<32x32xf32>
    %22 = tpu.matmul %21, %8, %cst_23 {dimension_numbers = #tpu.dot_dimension_numbers<[1], [0], [0], [1], [0, 0, 1, 1], [], []>} : vector<32x80xf32>, vector<80x32xf32>, vector<32x32xf32> -> vector<32x32xf32>
    %c9_24 = arith.constant 9 : index
    %c0_25 = arith.constant 0 : index
    %23 = tpu.strided_load %arg11[%c9_24, %c0_25] {strides = array<i32: 4, 1>} : memref<144x80xf32, #tpu.memory_space<vmem>>, vector<32x80xf32>
    %cst_26 = arith.constant dense<0.000000e+00> : vector<32x32xf32>
    %24 = tpu.matmul %23, %10, %cst_26 {dimension_numbers = #tpu.dot_dimension_numbers<[1], [0], [0], [1], [0, 0, 1, 1], [], []>} : vector<32x80xf32>, vector<80x32xf32>, vector<32x32xf32> -> vector<32x32xf32>
    %25 = arith.addf %22, %24 : vector<32x32xf32>
    %c10 = arith.constant 10 : index
    %c0_27 = arith.constant 0 : index
    %26 = tpu.strided_load %arg11[%c10, %c0_27] {strides = array<i32: 4, 1>} : memref<144x80xf32, #tpu.memory_space<vmem>>, vector<32x80xf32>
    %cst_28 = arith.constant dense<0.000000e+00> : vector<32x32xf32>
    %27 = tpu.matmul %26, %12, %cst_28 {dimension_numbers = #tpu.dot_dimension_numbers<[1], [0], [0], [1], [0, 0, 1, 1], [], []>} : vector<32x80xf32>, vector<80x32xf32>, vector<32x32xf32> -> vector<32x32xf32>
    %28 = arith.addf %25, %27 : vector<32x32xf32>
    %29 = arith.maximumf %20, %28 : vector<32x32xf32>
    %c9_29 = arith.constant 9 : index
    %c0_30 = arith.constant 0 : index
    %30 = tpu.strided_load %arg11[%c9_29, %c0_30] {strides = array<i32: 4, 1>} : memref<144x80xf32, #tpu.memory_space<vmem>>, vector<32x80xf32>
    %cst_31 = arith.constant dense<0.000000e+00> : vector<32x32xf32>
    %31 = tpu.matmul %30, %8, %cst_31 {dimension_numbers = #tpu.dot_dimension_numbers<[1], [0], [0], [1], [0, 0, 1, 1], [], []>} : vector<32x80xf32>, vector<80x32xf32>, vector<32x32xf32> -> vector<32x32xf32>
    %c10_32 = arith.constant 10 : index
    %c0_33 = arith.constant 0 : index
    %32 = tpu.strided_load %arg11[%c10_32, %c0_33] {strides = array<i32: 4, 1>} : memref<144x80xf32, #tpu.memory_space<vmem>>, vector<32x80xf32>
    %cst_34 = arith.constant dense<0.000000e+00> : vector<32x32xf32>
    %33 = tpu.matmul %32, %10, %cst_34 {dimension_numbers = #tpu.dot_dimension_numbers<[1], [0], [0], [1], [0, 0, 1, 1], [], []>} : vector<32x80xf32>, vector<80x32xf32>, vector<32x32xf32> -> vector<32x32xf32>
    %34 = arith.addf %31, %33 : vector<32x32xf32>
    %c11 = arith.constant 11 : index
    %c0_35 = arith.constant 0 : index
    %35 = tpu.strided_load %arg11[%c11, %c0_35] {strides = array<i32: 4, 1>} : memref<144x80xf32, #tpu.memory_space<vmem>>, vector<32x80xf32>
    %cst_36 = arith.constant dense<0.000000e+00> : vector<32x32xf32>
    %36 = tpu.matmul %35, %12, %cst_36 {dimension_numbers = #tpu.dot_dimension_numbers<[1], [0], [0], [1], [0, 0, 1, 1], [], []>} : vector<32x80xf32>, vector<80x32xf32>, vector<32x32xf32> -> vector<32x32xf32>
    %37 = arith.addf %34, %36 : vector<32x32xf32>
    %c10_37 = arith.constant 10 : index
    %c0_38 = arith.constant 0 : index
    %38 = tpu.strided_load %arg11[%c10_37, %c0_38] {strides = array<i32: 4, 1>} : memref<144x80xf32, #tpu.memory_space<vmem>>, vector<32x80xf32>
    %cst_39 = arith.constant dense<0.000000e+00> : vector<32x32xf32>
    %39 = tpu.matmul %38, %8, %cst_39 {dimension_numbers = #tpu.dot_dimension_numbers<[1], [0], [0], [1], [0, 0, 1, 1], [], []>} : vector<32x80xf32>, vector<80x32xf32>, vector<32x32xf32> -> vector<32x32xf32>
    %c11_40 = arith.constant 11 : index
    %c0_41 = arith.constant 0 : index
    %40 = tpu.strided_load %arg11[%c11_40, %c0_41] {strides = array<i32: 4, 1>} : memref<144x80xf32, #tpu.memory_space<vmem>>, vector<32x80xf32>
    %cst_42 = arith.constant dense<0.000000e+00> : vector<32x32xf32>
    %41 = tpu.matmul %40, %10, %cst_42 {dimension_numbers = #tpu.dot_dimension_numbers<[1], [0], [0], [1], [0, 0, 1, 1], [], []>} : vector<32x80xf32>, vector<80x32xf32>, vector<32x32xf32> -> vector<32x32xf32>
    %42 = arith.addf %39, %41 : vector<32x32xf32>
    %c12 = arith.constant 12 : index
    %c0_43 = arith.constant 0 : index
    %43 = tpu.strided_load %arg11[%c12, %c0_43] {strides = array<i32: 4, 1>} : memref<144x80xf32, #tpu.memory_space<vmem>>, vector<32x80xf32>
    %cst_44 = arith.constant dense<0.000000e+00> : vector<32x32xf32>
    %44 = tpu.matmul %43, %12, %cst_44 {dimension_numbers = #tpu.dot_dimension_numbers<[1], [0], [0], [1], [0, 0, 1, 1], [], []>} : vector<32x80xf32>, vector<80x32xf32>, vector<32x32xf32> -> vector<32x32xf32>
    %45 = arith.addf %42, %44 : vector<32x32xf32>
    %46 = arith.maximumf %37, %45 : vector<32x32xf32>
    %47 = arith.maximumf %29, %46 : vector<32x32xf32>
    %c0_45 = arith.constant 0 : index
    %c0_46 = arith.constant 0 : index
    %48 = vector.load %arg3[%c0_45, %c0_46] : memref<1x32xf32, #tpu.memory_space<vmem>>, vector<1x32xf32>
    %49 = vector.broadcast %48 : vector<1x32xf32> to vector<32x32xf32>
    %50 = arith.addf %47, %49 : vector<32x32xf32>
    %cst_47 = arith.constant 0.000000e+00 : f32
    %51 = vector.broadcast %cst_47 : f32 to vector<32x32xf32>
    %52 = arith.maximumf %50, %51 : vector<32x32xf32>
    %cst_48 = arith.constant 0.000000e+00 : f32
    %53 = vector.broadcast %cst_48 : f32 to vector<8x32xf32>
    %c0_49 = arith.constant 0 : index
    %c0_50 = arith.constant 0 : index
    %54 = vector.load %arg12[%c0_49, %c0_50] : memref<48x32xf32, #tpu.memory_space<vmem>>, vector<8x32xf32>
    tpu.vector_store %arg12[%c0_49, %c0_50], %53 {strides = array<i32>} : memref<48x32xf32, #tpu.memory_space<vmem>>, vector<8x32xf32>,
    %cst_51 = arith.constant 0.000000e+00 : f32
    %55 = vector.broadcast %cst_51 : f32 to vector<8x32xf32>
    %c40 = arith.constant 40 : index
    %c0_52 = arith.constant 0 : index
    %56 = vector.load %arg12[%c40, %c0_52] : memref<48x32xf32, #tpu.memory_space<vmem>>, vector<8x32xf32>
    tpu.vector_store %arg12[%c40, %c0_52], %55 {strides = array<i32>} : memref<48x32xf32, #tpu.memory_space<vmem>>, vector<8x32xf32>,
    %c8_53 = arith.constant 8 : index
    %c0_54 = arith.constant 0 : index
    %57 = vector.load %arg12[%c8_53, %c0_54] : memref<48x32xf32, #tpu.memory_space<vmem>>, vector<32x32xf32>
    tpu.vector_store %arg12[%c8_53, %c0_54], %52 {strides = array<i32>} : memref<48x32xf32, #tpu.memory_space<vmem>>, vector<32x32xf32>,
    %c0_55 = arith.constant 0 : index
    %c0_56 = arith.constant 0 : index
    %c0_57 = arith.constant 0 : index
    %58 = vector.load %arg4[%c0_55, %c0_56, %c0_57] : memref<3x32x64xf32, #tpu.memory_space<vmem>>, vector<1x32x64xf32>
    %59 = vector.shape_cast %58 : vector<1x32x64xf32> to vector<32x64xf32>
    %c1_58 = arith.constant 1 : index
    %c0_59 = arith.constant 0 : index
    %c0_60 = arith.constant 0 : index
    %60 = vector.load %arg4[%c1_58, %c0_59, %c0_60] : memref<3x32x64xf32, #tpu.memory_space<vmem>>, vector<1x32x64xf32>
    %61 = vector.shape_cast %60 : vector<1x32x64xf32> to vector<32x64xf32>
    %c2_61 = arith.constant 2 : index
    %c0_62 = arith.constant 0 : index
    %c0_63 = arith.constant 0 : index
    %62 = vector.load %arg4[%c2_61, %c0_62, %c0_63] : memref<3x32x64xf32, #tpu.memory_space<vmem>>, vector<1x32x64xf32>
    %63 = vector.shape_cast %62 : vector<1x32x64xf32> to vector<32x64xf32>
    %c7_64 = arith.constant 7 : index
    %c0_65 = arith.constant 0 : index
    %64 = tpu.strided_load %arg12[%c7_64, %c0_65] {strides = array<i32: 4, 1>} : memref<48x32xf32, #tpu.memory_space<vmem>>, vector<8x32xf32>
    %cst_66 = arith.constant dense<0.000000e+00> : vector<8x64xf32>
    %65 = tpu.matmul %64, %59, %cst_66 {dimension_numbers = #tpu.dot_dimension_numbers<[1], [0], [0], [1], [0, 0, 1, 1], [], []>} : vector<8x32xf32>, vector<32x64xf32>, vector<8x64xf32> -> vector<8x64xf32>
    %c8_67 = arith.constant 8 : index
    %c0_68 = arith.constant 0 : index
    %66 = tpu.strided_load %arg12[%c8_67, %c0_68] {strides = array<i32: 4, 1>} : memref<48x32xf32, #tpu.memory_space<vmem>>, vector<8x32xf32>
    %cst_69 = arith.constant dense<0.000000e+00> : vector<8x64xf32>
    %67 = tpu.matmul %66, %61, %cst_69 {dimension_numbers = #tpu.dot_dimension_numbers<[1], [0], [0], [1], [0, 0, 1, 1], [], []>} : vector<8x32xf32>, vector<32x64xf32>, vector<8x64xf32> -> vector<8x64xf32>
    %68 = arith.addf %65, %67 : vector<8x64xf32>
    %c9_70 = arith.constant 9 : index
    %c0_71 = arith.constant 0 : index
    %69 = tpu.strided_load %arg12[%c9_70, %c0_71] {strides = array<i32: 4, 1>} : memref<48x32xf32, #tpu.memory_space<vmem>>, vector<8x32xf32>
    %cst_72 = arith.constant dense<0.000000e+00> : vector<8x64xf32>
    %70 = tpu.matmul %69, %63, %cst_72 {dimension_numbers = #tpu.dot_dimension_numbers<[1], [0], [0], [1], [0, 0, 1, 1], [], []>} : vector<8x32xf32>, vector<32x64xf32>, vector<8x64xf32> -> vector<8x64xf32>
    %71 = arith.addf %68, %70 : vector<8x64xf32>
    %c8_73 = arith.constant 8 : index
    %c0_74 = arith.constant 0 : index
    %72 = tpu.strided_load %arg12[%c8_73, %c0_74] {strides = array<i32: 4, 1>} : memref<48x32xf32, #tpu.memory_space<vmem>>, vector<8x32xf32>
    %cst_75 = arith.constant dense<0.000000e+00> : vector<8x64xf32>
    %73 = tpu.matmul %72, %59, %cst_75 {dimension_numbers = #tpu.dot_dimension_numbers<[1], [0], [0], [1], [0, 0, 1, 1], [], []>} : vector<8x32xf32>, vector<32x64xf32>, vector<8x64xf32> -> vector<8x64xf32>
    %c9_76 = arith.constant 9 : index
    %c0_77 = arith.constant 0 : index
    %74 = tpu.strided_load %arg12[%c9_76, %c0_77] {strides = array<i32: 4, 1>} : memref<48x32xf32, #tpu.memory_space<vmem>>, vector<8x32xf32>
    %cst_78 = arith.constant dense<0.000000e+00> : vector<8x64xf32>
    %75 = tpu.matmul %74, %61, %cst_78 {dimension_numbers = #tpu.dot_dimension_numbers<[1], [0], [0], [1], [0, 0, 1, 1], [], []>} : vector<8x32xf32>, vector<32x64xf32>, vector<8x64xf32> -> vector<8x64xf32>
    %76 = arith.addf %73, %75 : vector<8x64xf32>
    %c10_79 = arith.constant 10 : index
    %c0_80 = arith.constant 0 : index
    %77 = tpu.strided_load %arg12[%c10_79, %c0_80] {strides = array<i32: 4, 1>} : memref<48x32xf32, #tpu.memory_space<vmem>>, vector<8x32xf32>
    %cst_81 = arith.constant dense<0.000000e+00> : vector<8x64xf32>
    %78 = tpu.matmul %77, %63, %cst_81 {dimension_numbers = #tpu.dot_dimension_numbers<[1], [0], [0], [1], [0, 0, 1, 1], [], []>} : vector<8x32xf32>, vector<32x64xf32>, vector<8x64xf32> -> vector<8x64xf32>
    %79 = arith.addf %76, %78 : vector<8x64xf32>
    %80 = arith.maximumf %71, %79 : vector<8x64xf32>
    %c9_82 = arith.constant 9 : index
    %c0_83 = arith.constant 0 : index
    %81 = tpu.strided_load %arg12[%c9_82, %c0_83] {strides = array<i32: 4, 1>} : memref<48x32xf32, #tpu.memory_space<vmem>>, vector<8x32xf32>
    %cst_84 = arith.constant dense<0.000000e+00> : vector<8x64xf32>
    %82 = tpu.matmul %81, %59, %cst_84 {dimension_numbers = #tpu.dot_dimension_numbers<[1], [0], [0], [1], [0, 0, 1, 1], [], []>} : vector<8x32xf32>, vector<32x64xf32>, vector<8x64xf32> -> vector<8x64xf32>
    %c10_85 = arith.constant 10 : index
    %c0_86 = arith.constant 0 : index
    %83 = tpu.strided_load %arg12[%c10_85, %c0_86] {strides = array<i32: 4, 1>} : memref<48x32xf32, #tpu.memory_space<vmem>>, vector<8x32xf32>
    %cst_87 = arith.constant dense<0.000000e+00> : vector<8x64xf32>
    %84 = tpu.matmul %83, %61, %cst_87 {dimension_numbers = #tpu.dot_dimension_numbers<[1], [0], [0], [1], [0, 0, 1, 1], [], []>} : vector<8x32xf32>, vector<32x64xf32>, vector<8x64xf32> -> vector<8x64xf32>
    %85 = arith.addf %82, %84 : vector<8x64xf32>
    %c11_88 = arith.constant 11 : index
    %c0_89 = arith.constant 0 : index
    %86 = tpu.strided_load %arg12[%c11_88, %c0_89] {strides = array<i32: 4, 1>} : memref<48x32xf32, #tpu.memory_space<vmem>>, vector<8x32xf32>
    %cst_90 = arith.constant dense<0.000000e+00> : vector<8x64xf32>
    %87 = tpu.matmul %86, %63, %cst_90 {dimension_numbers = #tpu.dot_dimension_numbers<[1], [0], [0], [1], [0, 0, 1, 1], [], []>} : vector<8x32xf32>, vector<32x64xf32>, vector<8x64xf32> -> vector<8x64xf32>
    %88 = arith.addf %85, %87 : vector<8x64xf32>
    %c10_91 = arith.constant 10 : index
    %c0_92 = arith.constant 0 : index
    %89 = tpu.strided_load %arg12[%c10_91, %c0_92] {strides = array<i32: 4, 1>} : memref<48x32xf32, #tpu.memory_space<vmem>>, vector<8x32xf32>
    %cst_93 = arith.constant dense<0.000000e+00> : vector<8x64xf32>
    %90 = tpu.matmul %89, %59, %cst_93 {dimension_numbers = #tpu.dot_dimension_numbers<[1], [0], [0], [1], [0, 0, 1, 1], [], []>} : vector<8x32xf32>, vector<32x64xf32>, vector<8x64xf32> -> vector<8x64xf32>
    %c11_94 = arith.constant 11 : index
    %c0_95 = arith.constant 0 : index
    %91 = tpu.strided_load %arg12[%c11_94, %c0_95] {strides = array<i32: 4, 1>} : memref<48x32xf32, #tpu.memory_space<vmem>>, vector<8x32xf32>
    %cst_96 = arith.constant dense<0.000000e+00> : vector<8x64xf32>
    %92 = tpu.matmul %91, %61, %cst_96 {dimension_numbers = #tpu.dot_dimension_numbers<[1], [0], [0], [1], [0, 0, 1, 1], [], []>} : vector<8x32xf32>, vector<32x64xf32>, vector<8x64xf32> -> vector<8x64xf32>
    %93 = arith.addf %90, %92 : vector<8x64xf32>
    %c12_97 = arith.constant 12 : index
    %c0_98 = arith.constant 0 : index
    %94 = tpu.strided_load %arg12[%c12_97, %c0_98] {strides = array<i32: 4, 1>} : memref<48x32xf32, #tpu.memory_space<vmem>>, vector<8x32xf32>
    %cst_99 = arith.constant dense<0.000000e+00> : vector<8x64xf32>
    %95 = tpu.matmul %94, %63, %cst_99 {dimension_numbers = #tpu.dot_dimension_numbers<[1], [0], [0], [1], [0, 0, 1, 1], [], []>} : vector<8x32xf32>, vector<32x64xf32>, vector<8x64xf32> -> vector<8x64xf32>
    %96 = arith.addf %93, %95 : vector<8x64xf32>
    %97 = arith.maximumf %88, %96 : vector<8x64xf32>
    %98 = arith.maximumf %80, %97 : vector<8x64xf32>
    %c0_100 = arith.constant 0 : index
    %c0_101 = arith.constant 0 : index
    %99 = vector.load %arg5[%c0_100, %c0_101] : memref<1x64xf32, #tpu.memory_space<vmem>>, vector<1x64xf32>
    %100 = vector.broadcast %99 : vector<1x64xf32> to vector<8x64xf32>
    %101 = arith.addf %98, %100 : vector<8x64xf32>
    %cst_102 = arith.constant 0.000000e+00 : f32
    %102 = vector.broadcast %cst_102 : f32 to vector<8x64xf32>
    %103 = arith.maximumf %101, %102 : vector<8x64xf32>
    %cst_103 = arith.constant 0.000000e+00 : f32
    %104 = vector.broadcast %cst_103 : f32 to vector<8x64xf32>
    %c0_104 = arith.constant 0 : index
    %c0_105 = arith.constant 0 : index
    %105 = vector.load %arg13[%c0_104, %c0_105] : memref<24x64xf32, #tpu.memory_space<vmem>>, vector<8x64xf32>
    tpu.vector_store %arg13[%c0_104, %c0_105], %104 {strides = array<i32>} : memref<24x64xf32, #tpu.memory_space<vmem>>, vector<8x64xf32>,
    %cst_106 = arith.constant 0.000000e+00 : f32
    %106 = vector.broadcast %cst_106 : f32 to vector<8x64xf32>
    %c16 = arith.constant 16 : index
    %c0_107 = arith.constant 0 : index
    %107 = vector.load %arg13[%c16, %c0_107] : memref<24x64xf32, #tpu.memory_space<vmem>>, vector<8x64xf32>
    tpu.vector_store %arg13[%c16, %c0_107], %106 {strides = array<i32>} : memref<24x64xf32, #tpu.memory_space<vmem>>, vector<8x64xf32>,
    %c8_108 = arith.constant 8 : index
    %c0_109 = arith.constant 0 : index
    %108 = vector.load %arg13[%c8_108, %c0_109] : memref<24x64xf32, #tpu.memory_space<vmem>>, vector<8x64xf32>
    tpu.vector_store %arg13[%c8_108, %c0_109], %103 {strides = array<i32>} : memref<24x64xf32, #tpu.memory_space<vmem>>, vector<8x64xf32>,
    %c0_110 = arith.constant 0 : index
    %c0_111 = arith.constant 0 : index
    %c0_112 = arith.constant 0 : index
    %109 = vector.load %arg6[%c0_110, %c0_111, %c0_112] : memref<3x64x64xf32, #tpu.memory_space<vmem>>, vector<1x64x64xf32>
    %110 = vector.shape_cast %109 : vector<1x64x64xf32> to vector<64x64xf32>
    %c1_113 = arith.constant 1 : index
    %c0_114 = arith.constant 0 : index
    %c0_115 = arith.constant 0 : index
    %111 = vector.load %arg6[%c1_113, %c0_114, %c0_115] : memref<3x64x64xf32, #tpu.memory_space<vmem>>, vector<1x64x64xf32>
    %112 = vector.shape_cast %111 : vector<1x64x64xf32> to vector<64x64xf32>
    %c2_116 = arith.constant 2 : index
    %c0_117 = arith.constant 0 : index
    %c0_118 = arith.constant 0 : index
    %113 = vector.load %arg6[%c2_116, %c0_117, %c0_118] : memref<3x64x64xf32, #tpu.memory_space<vmem>>, vector<1x64x64xf32>
    %114 = vector.shape_cast %113 : vector<1x64x64xf32> to vector<64x64xf32>
    %c7_119 = arith.constant 7 : index
    %c0_120 = arith.constant 0 : index
    %115 = tpu.strided_load %arg13[%c7_119, %c0_120] {strides = array<i32: 4, 1>} : memref<24x64xf32, #tpu.memory_space<vmem>>, vector<2x64xf32>
    %cst_121 = arith.constant dense<0.000000e+00> : vector<2x64xf32>
    %116 = tpu.matmul %115, %110, %cst_121 {dimension_numbers = #tpu.dot_dimension_numbers<[1], [0], [0], [1], [0, 0, 1, 1], [], []>} : vector<2x64xf32>, vector<64x64xf32>, vector<2x64xf32> -> vector<2x64xf32>
    %c8_122 = arith.constant 8 : index
    %c0_123 = arith.constant 0 : index
    %117 = tpu.strided_load %arg13[%c8_122, %c0_123] {strides = array<i32: 4, 1>} : memref<24x64xf32, #tpu.memory_space<vmem>>, vector<2x64xf32>
    %cst_124 = arith.constant dense<0.000000e+00> : vector<2x64xf32>
    %118 = tpu.matmul %117, %112, %cst_124 {dimension_numbers = #tpu.dot_dimension_numbers<[1], [0], [0], [1], [0, 0, 1, 1], [], []>} : vector<2x64xf32>, vector<64x64xf32>, vector<2x64xf32> -> vector<2x64xf32>
    %119 = arith.addf %116, %118 : vector<2x64xf32>
    %c9_125 = arith.constant 9 : index
    %c0_126 = arith.constant 0 : index
    %120 = tpu.strided_load %arg13[%c9_125, %c0_126] {strides = array<i32: 4, 1>} : memref<24x64xf32, #tpu.memory_space<vmem>>, vector<2x64xf32>
    %cst_127 = arith.constant dense<0.000000e+00> : vector<2x64xf32>
    %121 = tpu.matmul %120, %114, %cst_127 {dimension_numbers = #tpu.dot_dimension_numbers<[1], [0], [0], [1], [0, 0, 1, 1], [], []>} : vector<2x64xf32>, vector<64x64xf32>, vector<2x64xf32> -> vector<2x64xf32>
    %122 = arith.addf %119, %121 : vector<2x64xf32>
    %c8_128 = arith.constant 8 : index
    %c0_129 = arith.constant 0 : index
    %123 = tpu.strided_load %arg13[%c8_128, %c0_129] {strides = array<i32: 4, 1>} : memref<24x64xf32, #tpu.memory_space<vmem>>, vector<2x64xf32>
    %cst_130 = arith.constant dense<0.000000e+00> : vector<2x64xf32>
    %124 = tpu.matmul %123, %110, %cst_130 {dimension_numbers = #tpu.dot_dimension_numbers<[1], [0], [0], [1], [0, 0, 1, 1], [], []>} : vector<2x64xf32>, vector<64x64xf32>, vector<2x64xf32> -> vector<2x64xf32>
    %c9_131 = arith.constant 9 : index
    %c0_132 = arith.constant 0 : index
    %125 = tpu.strided_load %arg13[%c9_131, %c0_132] {strides = array<i32: 4, 1>} : memref<24x64xf32, #tpu.memory_space<vmem>>, vector<2x64xf32>
    %cst_133 = arith.constant dense<0.000000e+00> : vector<2x64xf32>
    %126 = tpu.matmul %125, %112, %cst_133 {dimension_numbers = #tpu.dot_dimension_numbers<[1], [0], [0], [1], [0, 0, 1, 1], [], []>} : vector<2x64xf32>, vector<64x64xf32>, vector<2x64xf32> -> vector<2x64xf32>
    %127 = arith.addf %124, %126 : vector<2x64xf32>
    %c10_134 = arith.constant 10 : index
    %c0_135 = arith.constant 0 : index
    %128 = tpu.strided_load %arg13[%c10_134, %c0_135] {strides = array<i32: 4, 1>} : memref<24x64xf32, #tpu.memory_space<vmem>>, vector<2x64xf32>
    %cst_136 = arith.constant dense<0.000000e+00> : vector<2x64xf32>
    %129 = tpu.matmul %128, %114, %cst_136 {dimension_numbers = #tpu.dot_dimension_numbers<[1], [0], [0], [1], [0, 0, 1, 1], [], []>} : vector<2x64xf32>, vector<64x64xf32>, vector<2x64xf32> -> vector<2x64xf32>
    %130 = arith.addf %127, %129 : vector<2x64xf32>
    %131 = arith.maximumf %122, %130 : vector<2x64xf32>
    %c9_137 = arith.constant 9 : index
    %c0_138 = arith.constant 0 : index
    %132 = tpu.strided_load %arg13[%c9_137, %c0_138] {strides = array<i32: 4, 1>} : memref<24x64xf32, #tpu.memory_space<vmem>>, vector<2x64xf32>
    %cst_139 = arith.constant dense<0.000000e+00> : vector<2x64xf32>
    %133 = tpu.matmul %132, %110, %cst_139 {dimension_numbers = #tpu.dot_dimension_numbers<[1], [0], [0], [1], [0, 0, 1, 1], [], []>} : vector<2x64xf32>, vector<64x64xf32>, vector<2x64xf32> -> vector<2x64xf32>
    %c10_140 = arith.constant 10 : index
    %c0_141 = arith.constant 0 : index
    %134 = tpu.strided_load %arg13[%c10_140, %c0_141] {strides = array<i32: 4, 1>} : memref<24x64xf32, #tpu.memory_space<vmem>>, vector<2x64xf32>
    %cst_142 = arith.constant dense<0.000000e+00> : vector<2x64xf32>
    %135 = tpu.matmul %134, %112, %cst_142 {dimension_numbers = #tpu.dot_dimension_numbers<[1], [0], [0], [1], [0, 0, 1, 1], [], []>} : vector<2x64xf32>, vector<64x64xf32>, vector<2x64xf32> -> vector<2x64xf32>
    %136 = arith.addf %133, %135 : vector<2x64xf32>
    %c11_143 = arith.constant 11 : index
    %c0_144 = arith.constant 0 : index
    %137 = tpu.strided_load %arg13[%c11_143, %c0_144] {strides = array<i32: 4, 1>} : memref<24x64xf32, #tpu.memory_space<vmem>>, vector<2x64xf32>
    %cst_145 = arith.constant dense<0.000000e+00> : vector<2x64xf32>
    %138 = tpu.matmul %137, %114, %cst_145 {dimension_numbers = #tpu.dot_dimension_numbers<[1], [0], [0], [1], [0, 0, 1, 1], [], []>} : vector<2x64xf32>, vector<64x64xf32>, vector<2x64xf32> -> vector<2x64xf32>
    %139 = arith.addf %136, %138 : vector<2x64xf32>
    %c10_146 = arith.constant 10 : index
    %c0_147 = arith.constant 0 : index
    %140 = tpu.strided_load %arg13[%c10_146, %c0_147] {strides = array<i32: 4, 1>} : memref<24x64xf32, #tpu.memory_space<vmem>>, vector<2x64xf32>
    %cst_148 = arith.constant dense<0.000000e+00> : vector<2x64xf32>
    %141 = tpu.matmul %140, %110, %cst_148 {dimension_numbers = #tpu.dot_dimension_numbers<[1], [0], [0], [1], [0, 0, 1, 1], [], []>} : vector<2x64xf32>, vector<64x64xf32>, vector<2x64xf32> -> vector<2x64xf32>
    %c11_149 = arith.constant 11 : index
    %c0_150 = arith.constant 0 : index
    %142 = tpu.strided_load %arg13[%c11_149, %c0_150] {strides = array<i32: 4, 1>} : memref<24x64xf32, #tpu.memory_space<vmem>>, vector<2x64xf32>
    %cst_151 = arith.constant dense<0.000000e+00> : vector<2x64xf32>
    %143 = tpu.matmul %142, %112, %cst_151 {dimension_numbers = #tpu.dot_dimension_numbers<[1], [0], [0], [1], [0, 0, 1, 1], [], []>} : vector<2x64xf32>, vector<64x64xf32>, vector<2x64xf32> -> vector<2x64xf32>
    %144 = arith.addf %141, %143 : vector<2x64xf32>
    %c12_152 = arith.constant 12 : index
    %c0_153 = arith.constant 0 : index
    %145 = tpu.strided_load %arg13[%c12_152, %c0_153] {strides = array<i32: 4, 1>} : memref<24x64xf32, #tpu.memory_space<vmem>>, vector<2x64xf32>
    %cst_154 = arith.constant dense<0.000000e+00> : vector<2x64xf32>
    %146 = tpu.matmul %145, %114, %cst_154 {dimension_numbers = #tpu.dot_dimension_numbers<[1], [0], [0], [1], [0, 0, 1, 1], [], []>} : vector<2x64xf32>, vector<64x64xf32>, vector<2x64xf32> -> vector<2x64xf32>
    %147 = arith.addf %144, %146 : vector<2x64xf32>
    %148 = arith.maximumf %139, %147 : vector<2x64xf32>
    %149 = arith.maximumf %131, %148 : vector<2x64xf32>
    %c0_155 = arith.constant 0 : index
    %c0_156 = arith.constant 0 : index
    %150 = vector.load %arg7[%c0_155, %c0_156] : memref<1x64xf32, #tpu.memory_space<vmem>>, vector<1x64xf32>
    %151 = vector.broadcast %150 : vector<1x64xf32> to vector<2x64xf32>
    %152 = arith.addf %149, %151 : vector<2x64xf32>
    %cst_157 = arith.constant 0.000000e+00 : f32
    %153 = vector.broadcast %cst_157 : f32 to vector<2x64xf32>
    %154 = arith.maximumf %152, %153 : vector<2x64xf32>
    %cst_158 = arith.constant dense<0.000000e+00> : vector<64xf32>
    %155 = vector.multi_reduction <add>, %154, %cst_158 [0] : vector<2x64xf32> to vector<64xf32>
    %156 = vector.shape_cast %155 : vector<64xf32> to vector<1x64xf32>
    %cst_159 = arith.constant 2.000000e+00 : f32
    %157 = vector.broadcast %cst_159 : f32 to vector<1x64xf32>
    %158 = arith.divf %156, %157 : vector<1x64xf32>
    %c0_160 = arith.constant 0 : index
    %c0_161 = arith.constant 0 : index
    %159 = vector.load %arg8[%c0_160, %c0_161] : memref<64x35xf32, #tpu.memory_space<vmem>>, vector<64x35xf32>
    %cst_162 = arith.constant dense<0.000000e+00> : vector<1x35xf32>
    %160 = tpu.matmul %158, %159, %cst_162 {dimension_numbers = #tpu.dot_dimension_numbers<[1], [0], [0], [1], [0, 0, 1, 1], [], []>} : vector<1x64xf32>, vector<64x35xf32>, vector<1x35xf32> -> vector<1x35xf32>
    %c0_163 = arith.constant 0 : index
    %c0_164 = arith.constant 0 : index
    %161 = vector.load %arg9[%c0_163, %c0_164] : memref<1x35xf32, #tpu.memory_space<vmem>>, vector<1x35xf32>
    %162 = arith.addf %160, %161 : vector<1x35xf32>
    %cst_165 = arith.constant dense<0xFF800000> : vector<1xf32>
    %163 = vector.multi_reduction <maximumf>, %162, %cst_165 [1] : vector<1x35xf32> to vector<1xf32>
    %164 = vector.shape_cast %163 : vector<1xf32> to vector<1x1xf32>
    %165 = vector.broadcast %164 : vector<1x1xf32> to vector<1x35xf32>
    %166 = arith.subf %162, %165 : vector<1x35xf32>
    %167 = math.exp %166 : vector<1x35xf32>
    %cst_166 = arith.constant dense<0.000000e+00> : vector<1xf32>
    %168 = vector.multi_reduction <add>, %167, %cst_166 [1] : vector<1x35xf32> to vector<1xf32>
    %169 = vector.shape_cast %168 : vector<1xf32> to vector<1x1xf32>
    %170 = math.log %169 : vector<1x1xf32>
    %171 = vector.broadcast %170 : vector<1x1xf32> to vector<1x35xf32>
    %172 = arith.subf %166, %171 : vector<1x35xf32>
    %c0_167 = arith.constant 0 : index
    %c0_168 = arith.constant 0 : index
    %c0_169 = arith.constant 0 : index
    %173 = vector.load %arg10[%c0_167, %c0_168, %c0_169] : memref<1x1x35xf32, #tpu.memory_space<vmem>>, vector<1x1x35xf32>
    %174 = vector.shape_cast %173 : vector<1x1x35xf32> to vector<1x35xf32>
    %175 = vector.shape_cast %172 : vector<1x35xf32> to vector<1x1x35xf32>
    tpu.vector_store %arg10[%c0_167, %c0_168, %c0_169], %175 {strides = array<i32>} : memref<1x1x35xf32, #tpu.memory_space<vmem>>, vector<1x1x35xf32>,
    return
  }
  func.func @transform_0(%arg0: i32) -> (i32, i32, i32) {
    %c0_i32 = arith.constant 0 : i32
    %c0_i32_0 = arith.constant 0 : i32
    %c0_i32_1 = arith.constant 0 : i32
    return %arg0, %c0_i32, %c0_i32_0 : i32, i32, i32
  }
  func.func @transform_1(%arg0: i32) -> (i32, i32, i32) {
    %c0_i32 = arith.constant 0 : i32
    %c0_i32_0 = arith.constant 0 : i32
    %c0_i32_1 = arith.constant 0 : i32
    %c0_i32_2 = arith.constant 0 : i32
    return %c0_i32, %c0_i32_0, %c0_i32_1 : i32, i32, i32
  }
  func.func @transform_2(%arg0: i32) -> (i32, i32) {
    %c0_i32 = arith.constant 0 : i32
    %c0_i32_0 = arith.constant 0 : i32
    %c0_i32_1 = arith.constant 0 : i32
    return %c0_i32, %c0_i32_0 : i32, i32
  }
  func.func @transform_3(%arg0: i32) -> (i32, i32, i32) {
    %c0_i32 = arith.constant 0 : i32
    %c0_i32_0 = arith.constant 0 : i32
    %c0_i32_1 = arith.constant 0 : i32
    %c0_i32_2 = arith.constant 0 : i32
    return %c0_i32, %c0_i32_0, %c0_i32_1 : i32, i32, i32
  }
  func.func @transform_4(%arg0: i32) -> (i32, i32) {
    %c0_i32 = arith.constant 0 : i32
    %c0_i32_0 = arith.constant 0 : i32
    %c0_i32_1 = arith.constant 0 : i32
    return %c0_i32, %c0_i32_0 : i32, i32
  }
  func.func @transform_5(%arg0: i32) -> (i32, i32, i32) {
    %c0_i32 = arith.constant 0 : i32
    %c0_i32_0 = arith.constant 0 : i32
    %c0_i32_1 = arith.constant 0 : i32
    %c0_i32_2 = arith.constant 0 : i32
    return %c0_i32, %c0_i32_0, %c0_i32_1 : i32, i32, i32
  }
  func.func @transform_6(%arg0: i32) -> (i32, i32) {
    %c0_i32 = arith.constant 0 : i32
    %c0_i32_0 = arith.constant 0 : i32
    %c0_i32_1 = arith.constant 0 : i32
    return %c0_i32, %c0_i32_0 : i32, i32
  }
  func.func @transform_7(%arg0: i32) -> (i32, i32) {
    %c0_i32 = arith.constant 0 : i32
    %c0_i32_0 = arith.constant 0 : i32
    %c0_i32_1 = arith.constant 0 : i32
    return %c0_i32, %c0_i32_0 : i32, i32
  }
  func.func @transform_8(%arg0: i32) -> (i32, i32) {
    %c0_i32 = arith.constant 0 : i32
    %c0_i32_0 = arith.constant 0 : i32
    %c0_i32_1 = arith.constant 0 : i32
    return %c0_i32, %c0_i32_0 : i32, i32
  }
  func.func @transform_9(%arg0: i32) -> (i32, i32, i32) {
    %c0_i32 = arith.constant 0 : i32
    %c0_i32_0 = arith.constant 0 : i32
    %c0_i32_1 = arith.constant 0 : i32
    return %arg0, %c0_i32, %c0_i32_0 : i32, i32, i32
  }
}

</mosaic_0001>

<llo_original>
// kernel: m5_forward.1
$region0: #{m5_forward.1}
  #allocation0 [shape = 'u32[]', space=smem, size = 0x4, offset = 0x4, fixed_abs, tag = 'smem constant byte address 0x4 - core index']
  #allocation1 [shape = 'u32[144,128]{1,0:T(1,128)}', space=vmem, size = 0x12000, scoped, tag = 'internal scratch']
  #allocation2 [shape = 'f32[144,80]{1,0:T(8,128)}', space=vmem, size = 0x12000, scoped, tag = 'scratch operand']
  #allocation3 [shape = 'f32[48,32]{1,0:T(8,128)}', space=vmem, size = 0x6000, scoped, tag = 'scratch operand']
  #allocation4 [shape = 'f32[24,64]{1,0:T(8,128)}', space=vmem, size = 0x3000, scoped, tag = 'scratch operand']
  %s0 = inlined_call_operand.vmem [shape: f32[2,128,80], index: 0, kind: input, shape index: {}]
  %s1 = inlined_call_operand.vmem [shape: f32[3,80,32], index: 1, kind: input, shape index: {}]
  %s2 = inlined_call_operand.vmem [shape: f32[1,32], index: 2, kind: input, shape index: {}]
  %s3 = inlined_call_operand.vmem [shape: f32[3,32,64], index: 3, kind: input, shape index: {}]
  %s4 = inlined_call_operand.vmem [shape: f32[1,64], index: 4, kind: input, shape index: {}]
  %s5 = inlined_call_operand.vmem [shape: f32[3,64,64], index: 5, kind: input, shape index: {}]
  %s6 = inlined_call_operand.vmem [shape: f32[1,64], index: 6, kind: input, shape index: {}]
  %s7 = inlined_call_operand.vmem [shape: f32[64,35], index: 7, kind: input, shape index: {}]
  %s8 = inlined_call_operand.vmem [shape: f32[1,35], index: 8, kind: input, shape index: {}]
  %s9 = inlined_call_operand.hbm [shape: f32[2,1,35], index: 9, kind: output, shape index: {}]
  %s10 = sld [smem:[#allocation0]]
  $region69: #{m5_forward.1} parent=0
    _
  %s12 = ssub.s32 1, %s10
  %s13 = scalar_select 0, %s12, %s10
  $region1: #{m5_forward.1} parent=0
    #allocation5 [shape = 'u8[1024]{0}', space=vmem, size = 0x400, scoped, tag = 'output window, operand 0']
    #allocation6 [shape = 's32[2]{0}', space=sflag, size = 0x8, scoped, tag = 'scoped memory for m5_forward.1']
    %14 = vsyncpa [#allocation6], 0
    %s15 = scalar_lea.sflag [#allocation6], 1
    %16 = vsyncpa %s15, 0
    loop: start=0, step=1, limit=4
    $region2: #{m5_forward.1} parent=1 // loop_pre_header
      _
    $region3: #{m5_forward.1} parent=1 // loop_header
      %s18 = sphi 0, %s22
      %p19 = scmp.ge.s32.totalorder %s18, 4
      %s28 = sphi 0, %s30
      %s31 = sphi 0, %s28
      %s32 = sphi 0, %s31
      %s48 = sphi 0, %s32
      %s52 = sphi 0, %s52
      %s54 = sphi 0, %s52
      %s55 = sphi 0, %s54
      %s69 = sphi 0, %s55
      %s73 = sphi 0, %s73
      %s75 = sphi 0, %s73
      %s76 = sphi 0, %s75
      %s90 = sphi 0, %s76
      %s94 = sphi 0, %s94
      %s96 = sphi 0, %s94
      %s97 = sphi 0, %s96
      %s111 = sphi 0, %s97
      %s115 = sphi 0, %s115
      %s117 = sphi 0, %s115
      %s118 = sphi 0, %s117
      %s132 = sphi 0, %s118
      %s136 = sphi 0, %s136
      %s138 = sphi 0, %s136
      %s139 = sphi 0, %s138
      %s153 = sphi 0, %s139
      %s157 = sphi 0, %s157
      %s159 = sphi 0, %s157
      %s160 = sphi 0, %s159
      %s174 = sphi 0, %s160
      %s178 = sphi 0, %s178
      %s180 = sphi 0, %s178
      %s181 = sphi 0, %s180
      %s195 = sphi 0, %s181
      %s199 = sphi 0, %s199
      %s201 = sphi 0, %s199
      %s202 = sphi 0, %s201
      %s216 = sphi 0, %s202
      %s222 = sphi 0, %s224
      %s225 = sphi 0, %s222
      %s226 = sphi 0, %s225
      %s242 = sphi 0, %s226
    $region4: #{m5_forward.1} parent=1 // loop_header_branch
      %21 = sbr.rel (%p19) target = $region8
    $region5: #{m5_forward.1} parent=1 // loop_body
      %s23 = ssub.s32 %s18, 1
      %s24 = ssub.s32 %s18, 2
      %s25 = sadd.s32 %s18, 1
      %s26 = ssub.s32 %s18, %s25
      %p27 = scmp.eq.s32.totalorder %s26, 0
      %s29 = sadd.s32 %s28, 1
      %s30 = scalar_select %p27, %s28, %s29
      %p33 = pneg %p27
      %p34 = scmp.eq.s32.totalorder %s18, 1
      %p35 = por %p33, %p34
      %p36 = scmp.ne.s32.totalorder %s28, %s31
      %p37 = scmp.eq.s32.totalorder %s18, 0
      %p38 = por %p36, %p37
      %p39 = scmp.ne.s32.totalorder %s28, %s31
      %p40 = scmp.eq.s32.totalorder %s23, 1
      %p41 = por %p39, %p40
      %p42 = scmp.ne.s32.totalorder %s31, %s32
      %p43 = scmp.eq.s32.totalorder %s23, 0
      %p44 = por %p42, %p43
      %p45 = scmp.ne.s32.totalorder %s31, %s32
      %p46 = scmp.eq.s32.totalorder %s24, 1
      %p47 = por %p45, %p46
      %p49 = scmp.ne.s32.totalorder %s32, %s48
      %p50 = scmp.eq.s32.totalorder %s24, 0
      %p51 = por %p49, %p50
      %s53 = sadd.s32 %s52, 1
      %p56 = scmp.eq.s32.totalorder %s18, 1
      %p57 = scmp.ne.s32.totalorder %s52, %s54
      %p58 = scmp.eq.s32.totalorder %s18, 0
      %p59 = por %p57, %p58
      %p60 = scmp.ne.s32.totalorder %s52, %s54
      %p61 = scmp.eq.s32.totalorder %s23, 1
      %p62 = por %p60, %p61
      %p63 = scmp.ne.s32.totalorder %s54, %s55
      %p64 = scmp.eq.s32.totalorder %s23, 0
      %p65 = por %p63, %p64
      %p66 = scmp.ne.s32.totalorder %s54, %s55
      %p67 = scmp.eq.s32.totalorder %s24, 1
      %p68 = por %p66, %p67
      %p70 = scmp.ne.s32.totalorder %s55, %s69
      %p71 = scmp.eq.s32.totalorder %s24, 0
      %p72 = por %p70, %p71
      %s74 = sadd.s32 %s73, 1
      %p77 = scmp.eq.s32.totalorder %s18, 1
      %p78 = scmp.ne.s32.totalorder %s73, %s75
      %p79 = scmp.eq.s32.totalorder %s18, 0
      %p80 = por %p78, %p79
      %p81 = scmp.ne.s32.totalorder %s73, %s75
      %p82 = scmp.eq.s32.totalorder %s23, 1
      %p83 = por %p81, %p82
      %p84 = scmp.ne.s32.totalorder %s75, %s76
      %p85 = scmp.eq.s32.totalorder %s23, 0
      %p86 = por %p84, %p85
      %p87 = scmp.ne.s32.totalorder %s75, %s76
      %p88 = scmp.eq.s32.totalorder %s24, 1
      %p89 = por %p87, %p88
      %p91 = scmp.ne.s32.totalorder %s76, %s90
      %p92 = scmp.eq.s32.totalorder %s24, 0
      %p93 = por %p91, %p92
      %s95 = sadd.s32 %s94, 1
      %p98 = scmp.eq.s32.totalorder %s18, 1
      %p99 = scmp.ne.s32.totalorder %s94, %s96
      %p100 = scmp.eq.s32.totalorder %s18, 0
      %p101 = por %p99, %p100
      %p102 = scmp.ne.s32.totalorder %s94, %s96
      %p103 = scmp.eq.s32.totalorder %s23, 1
      %p104 = por %p102, %p103
      %p105 = scmp.ne.s32.totalorder %s96, %s97
      %p106 = scmp.eq.s32.totalorder %s23, 0
      %p107 = por %p105, %p106
      %p108 = scmp.ne.s32.totalorder %s96, %s97
      %p109 = scmp.eq.s32.totalorder %s24, 1
      %p110 = por %p108, %p109
      %p112 = scmp.ne.s32.totalorder %s97, %s111
      %p113 = scmp.eq.s32.totalorder %s24, 0
      %p114 = por %p112, %p113
      %s116 = sadd.s32 %s115, 1
      %p119 = scmp.eq.s32.totalorder %s18, 1
      %p120 = scmp.ne.s32.totalorder %s115, %s117
      %p121 = scmp.eq.s32.totalorder %s18, 0
      %p122 = por %p120, %p121
      %p123 = scmp.ne.s32.totalorder %s115, %s117
      %p124 = scmp.eq.s32.totalorder %s23, 1
      %p125 = por %p123, %p124
      %p126 = scmp.ne.s32.totalorder %s117, %s118
      %p127 = scmp.eq.s32.totalorder %s23, 0
      %p128 = por %p126, %p127
      %p129 = scmp.ne.s32.totalorder %s117, %s118
      %p130 = scmp.eq.s32.totalorder %s24, 1
      %p131 = por %p129, %p130
      %p133 = scmp.ne.s32.totalorder %s118, %s132
      %p134 = scmp.eq.s32.totalorder %s24, 0
      %p135 = por %p133, %p134
      %s137 = sadd.s32 %s136, 1
      %p140 = scmp.eq.s32.totalorder %s18, 1
      %p141 = scmp.ne.s32.totalorder %s136, %s138
      %p142 = scmp.eq.s32.totalorder %s18, 0
      %p143 = por %p141, %p142
      %p144 = scmp.ne.s32.totalorder %s136, %s138
      %p145 = scmp.eq.s32.totalorder %s23, 1
      %p146 = por %p144, %p145
      %p147 = scmp.ne.s32.totalorder %s138, %s139
      %p148 = scmp.eq.s32.totalorder %s23, 0
      %p149 = por %p147, %p148
      %p150 = scmp.ne.s32.totalorder %s138, %s139
      %p151 = scmp.eq.s32.totalorder %s24, 1
      %p152 = por %p150, %p151
      %p154 = scmp.ne.s32.totalorder %s139, %s153
      %p155 = scmp.eq.s32.totalorder %s24, 0
      %p156 = por %p154, %p155
      %s158 = sadd.s32 %s157, 1
      %p161 = scmp.eq.s32.totalorder %s18, 1
      %p162 = scmp.ne.s32.totalorder %s157, %s159
      %p163 = scmp.eq.s32.totalorder %s18, 0
      %p164 = por %p162, %p163
      %p165 = scmp.ne.s32.totalorder %s157, %s159
      %p166 = scmp.eq.s32.totalorder %s23, 1
      %p167 = por %p165, %p166
      %p168 = scmp.ne.s32.totalorder %s159, %s160
      %p169 = scmp.eq.s32.totalorder %s23, 0
      %p170 = por %p168, %p169
      %p171 = scmp.ne.s32.totalorder %s159, %s160
      %p172 = scmp.eq.s32.totalorder %s24, 1
      %p173 = por %p171, %p172
      %p175 = scmp.ne.s32.totalorder %s160, %s174
      %p176 = scmp.eq.s32.totalorder %s24, 0
      %p177 = por %p175, %p176
      %s179 = sadd.s32 %s178, 1
      %p182 = scmp.eq.s32.totalorder %s18, 1
      %p183 = scmp.ne.s32.totalorder %s178, %s180
      %p184 = scmp.eq.s32.totalorder %s18, 0
      %p185 = por %p183, %p184
      %p186 = scmp.ne.s32.totalorder %s178, %s180
      %p187 = scmp.eq.s32.totalorder %s23, 1
      %p188 = por %p186, %p187
      %p189 = scmp.ne.s32.totalorder %s180, %s181
      %p190 = scmp.eq.s32.totalorder %s23, 0
      %p191 = por %p189, %p190
      %p192 = scmp.ne.s32.totalorder %s180, %s181
      %p193 = scmp.eq.s32.totalorder %s24, 1
      %p194 = por %p192, %p193
      %p196 = scmp.ne.s32.totalorder %s181, %s195
      %p197 = scmp.eq.s32.totalorder %s24, 0
      %p198 = por %p196, %p197
      %s200 = sadd.s32 %s199, 1
      %p203 = scmp.eq.s32.totalorder %s18, 1
      %p204 = scmp.ne.s32.totalorder %s199, %s201
      %p205 = scmp.eq.s32.totalorder %s18, 0
      %p206 = por %p204, %p205
      %p207 = scmp.ne.s32.totalorder %s199, %s201
      %p208 = scmp.eq.s32.totalorder %s23, 1
      %p209 = por %p207, %p208
      %p210 = scmp.ne.s32.totalorder %s201, %s202
      %p211 = scmp.eq.s32.totalorder %s23, 0
      %p212 = por %p210, %p211
      %p213 = scmp.ne.s32.totalorder %s201, %s202
      %p214 = scmp.eq.s32.totalorder %s24, 1
      %p215 = por %p213, %p214
      %p217 = scmp.ne.s32.totalorder %s202, %s216
      %p218 = scmp.eq.s32.totalorder %s24, 0
      %p219 = por %p217, %p218
      %s220 = ssub.s32 %s18, %s25
      %p221 = scmp.eq.s32.totalorder %s220, 0
      %s223 = sadd.s32 %s222, 1
      %s224 = scalar_select %p221, %s222, %s223
      %p227 = pneg %p221
      %p228 = scmp.eq.s32.totalorder %s18, 1
      %p229 = por %p227, %p228
      %p230 = scmp.ne.s32.totalorder %s222, %s225
      %p231 = scmp.eq.s32.totalorder %s18, 0
      %p232 = por %p230, %p231
      %p233 = scmp.ne.s32.totalorder %s222, %s225
      %p234 = scmp.eq.s32.totalorder %s23, 1
      %p235 = por %p233, %p234
      %p236 = scmp.ne.s32.totalorder %s225, %s226
      %p237 = scmp.eq.s32.totalorder %s23, 0
      %p238 = por %p236, %p237
      %p239 = scmp.ne.s32.totalorder %s225, %s226
      %p240 = scmp.eq.s32.totalorder %s24, 1
      %p241 = por %p239, %p240
      %p243 = scmp.ne.s32.totalorder %s226, %s242
      %p244 = scmp.eq.s32.totalorder %s24, 0
      %p245 = por %p243, %p244
      %p246 = scmp.le.s32.totalorder 1, %s18
      %p247 = scmp.lt.s32.totalorder %s18, 3
      %p248 = pnand %p246, %p247
      %p249 = pneg %p248
      // Predicated region
      $region9: #{m5_forward.1} parent=5 // pred_check
        _
      $region10: #{m5_forward.1} parent=5 // pred_check_branch
        %251 = sbr.rel (%p248) target = $region12
      $region11: #{m5_forward.1} parent=5 // pred_region
        %s252 = ssub.s32 %s18, 1
        // Predicated region
        $region13: #{m5_forward.1} parent=11 // pred_check
          %p253 = pneg %p65
        $region14: #{m5_forward.1} parent=11 // pred_check_branch
          %255 = sbr.rel (%p253) target = $region16
        $region15: #{m5_forward.1} parent=11 // pred_region
          _
        $region16: #{m5_forward.1} parent=11 // pred_fallthru
          _
        // Predicated region
        $region17: #{m5_forward.1} parent=11 // pred_check
          %p256 = pneg %p86
        $region18: #{m5_forward.1} parent=11 // pred_check_branch
          %258 = sbr.rel (%p256) target = $region20
        $region19: #{m5_forward.1} parent=11 // pred_region
          _
        $region20: #{m5_forward.1} parent=11 // pred_fallthru
          _
        // Predicated region
        $region21: #{m5_forward.1} parent=11 // pred_check
          %p259 = pneg %p107
        $region22: #{m5_forward.1} parent=11 // pred_check_branch
          %261 = sbr.rel (%p259) target = $region24
        $region23: #{m5_forward.1} parent=11 // pred_region
          _
        $region24: #{m5_forward.1} parent=11 // pred_fallthru
          _
        // Predicated region
        $region25: #{m5_forward.1} parent=11 // pred_check
          %p262 = pneg %p128
        $region26: #{m5_forward.1} parent=11 // pred_check_branch
          %264 = sbr.rel (%p262) target = $region28
        $region27: #{m5_forward.1} parent=11 // pred_region
          _
        $region28: #{m5_forward.1} parent=11 // pred_fallthru
          _
        // Predicated region
        $region29: #{m5_forward.1} parent=11 // pred_check
          %p265 = pneg %p149
        $region30: #{m5_forward.1} parent=11 // pred_check_branch
          %267 = sbr.rel (%p265) target = $region32
        $region31: #{m5_forward.1} parent=11 // pred_region
          _
        $region32: #{m5_forward.1} parent=11 // pred_fallthru
          _
        // Predicated region
        $region33: #{m5_forward.1} parent=11 // pred_check
          %p268 = pneg %p170
        $region34: #{m5_forward.1} parent=11 // pred_check_branch
          %270 = sbr.rel (%p268) target = $region36
        $region35: #{m5_forward.1} parent=11 // pred_region
          _
        $region36: #{m5_forward.1} parent=11 // pred_fallthru
          _
        // Predicated region
        $region37: #{m5_forward.1} parent=11 // pred_check
          %p271 = pneg %p191
        $region38: #{m5_forward.1} parent=11 // pred_check_branch
          %273 = sbr.rel (%p271) target = $region40
        $region39: #{m5_forward.1} parent=11 // pred_region
          _
        $region40: #{m5_forward.1} parent=11 // pred_fallthru
          _
        // Predicated region
        $region41: #{m5_forward.1} parent=11 // pred_check
          %p274 = pneg %p212
        $region42: #{m5_forward.1} parent=11 // pred_check_branch
          %276 = sbr.rel (%p274) target = $region44
        $region43: #{m5_forward.1} parent=11 // pred_region
          _
        $region44: #{m5_forward.1} parent=11 // pred_fallthru
          _
      $region12: #{m5_forward.1} parent=5 // pred_fallthru
        _
      %p277 = scmp.lt.s32.totalorder %s18, 2
      // Predicated region
      $region45: #{m5_forward.1} parent=5 // pred_check
        %p278 = pneg %p277
      $region46: #{m5_forward.1} parent=5 // pred_check_branch
        %280 = sbr.rel (%p278) target = $region48
      $region47: #{m5_forward.1} parent=5 // pred_region
        // Predicated region
        $region49: #{m5_forward.1} parent=47 // pred_check
          %p281 = pneg %p38
        $region50: #{m5_forward.1} parent=47 // pred_check_branch
          %283 = sbr.rel (%p281) target = $region52
        $region51: #{m5_forward.1} parent=47 // pred_region
          %p284 = scmp.lt.s32.totalorder %s18, 1
          %s285 = scalar_select %p284, %s18, 1
          %s286 = smul.addr %s285, 16
          %s287 = smul.addr %s286, 8
          %s288 = scalar_lea.vmem %s0, %s287
        $region52: #{m5_forward.1} parent=47 // pred_fallthru
          _
      $region48: #{m5_forward.1} parent=5 // pred_fallthru
        _
      %p289 = scmp.le.s32.totalorder 1, %s18
      %p290 = scmp.lt.s32.totalorder %s18, 3
      %p291 = pnand %p289, %p290
      %p292 = pneg %p291
      // Predicated region
      $region53: #{m5_forward.1} parent=5 // pred_check
        _
      $region54: #{m5_forward.1} parent=5 // pred_check_branch
        %294 = sbr.rel (%p291) target = $region56
      $region55: #{m5_forward.1} parent=5 // pred_region
        %s295 = ssub.s32 %s18, 1
        %p296 = scmp.lt.s32.totalorder %s23, 1
        %s297 = scalar_select %p296, %s23, 1
        %s298 = smul.addr %s297, 16
        %s299 = smul.addr %s298, 8
        %s300 = scalar_lea.vmem %s0, %s299
        %p301 = pneg %p44
        %p302 = pneg %p41
        %p303 = pneg %p65
        %p304 = pneg %p62
        %p305 = pneg %p86
        %p306 = pneg %p83
        %p307 = pneg %p107
        %p308 = pneg %p104
        %p309 = pneg %p128
        %p310 = pneg %p125
        %p311 = pneg %p149
        %p312 = pneg %p146
        %p313 = pneg %p170
        %p314 = pneg %p167
        %p315 = pneg %p191
        %p316 = pneg %p188
        %p317 = pneg %p212
        %p318 = pneg %p209
        %p319 = pneg %p238
        %p320 = pneg %p235
        %s321 = sand.u32 %s225, 1
        %s322 = scalar_lea.sflag [#allocation6], %s321
        %s323 = sand.u32 %s225, 1
        %s324 = scalar_lea.vmem [#allocation5], %s323
        %p325 = scmp.lt.s32.totalorder %s23, 1
        %s326 = scalar_select %p325, %s23, 1
        %s327 = smul.addr %s326, 16
        %s328 = smul.addr %s327, 8
        %s329 = scalar_lea.vmem %s0, %s328
        %v330 = vld [vmem:[%s329] sm:$0xff]
        %v331 = vld [vmem:[%s329 + $0x8] sm:$0xff]
        %v332 = vld [vmem:[%s329 + $0x10] sm:$0xff]
        %v333 = vld [vmem:[%s329 + $0x18] sm:$0xff]
        %v334 = vld [vmem:[%s329 + $0x20] sm:$0xff]
        %v335 = vld [vmem:[%s329 + $0x28] sm:$0xff]
        %v336 = vld [vmem:[%s329 + $0x30] sm:$0xff]
        %v337 = vld [vmem:[%s329 + $0x38] sm:$0xff]
        %v338 = vld [vmem:[%s329 + $0x40] sm:$0xff]
        %v339 = vld [vmem:[%s329 + $0x48] sm:$0xff]
        %v340 = vld [vmem:[%s329 + $0x50] sm:$0xff]
        %v341 = vld [vmem:[%s329 + $0x58] sm:$0xff]
        %v342 = vld [vmem:[%s329 + $0x60] sm:$0xff]
        %v343 = vld [vmem:[%s329 + $0x68] sm:$0xff]
        %v344 = vld [vmem:[%s329 + $0x70] sm:$0xff]
        %v345 = vld [vmem:[%s329 + $0x78] sm:$0xff]
        %vm346 = vcmask 654336
        %347 = vst.msk [vmem:[#allocation2] sm:$0xff] %vm346, 0.0
        %348 = vst.msk [vmem:[#allocation2 + $0x88] sm:$0xff] %vm346, 0.0
        %349 = vst.msk [vmem:[#allocation2 + $0x8] sm:$0xff] %vm346, %v330
        %350 = vst.msk [vmem:[#allocation2 + $0x10] sm:$0xff] %vm346, %v331
        %351 = vst.msk [vmem:[#allocation2 + $0x18] sm:$0xff] %vm346, %v332
        %352 = vst.msk [vmem:[#allocation2 + $0x20] sm:$0xff] %vm346, %v333
        %353 = vst.msk [vmem:[#allocation2 + $0x28] sm:$0xff] %vm346, %v334
        %354 = vst.msk [vmem:[#allocation2 + $0x30] sm:$0xff] %vm346, %v335
        %355 = vst.msk [vmem:[#allocation2 + $0x38] sm:$0xff] %vm346, %v336
        %356 = vst.msk [vmem:[#allocation2 + $0x40] sm:$0xff] %vm346, %v337
        %357 = vst.msk [vmem:[#allocation2 + $0x48] sm:$0xff] %vm346, %v338
        %358 = vst.msk [vmem:[#allocation2 + $0x50] sm:$0xff] %vm346, %v339
        %359 = vst.msk [vmem:[#allocation2 + $0x58] sm:$0xff] %vm346, %v340
        %360 = vst.msk [vmem:[#allocation2 + $0x60] sm:$0xff] %vm346, %v341
        %361 = vst.msk [vmem:[#allocation2 + $0x68] sm:$0xff] %vm346, %v342
        %362 = vst.msk [vmem:[#allocation2 + $0x70] sm:$0xff] %vm346, %v343
        %363 = vst.msk [vmem:[#allocation2 + $0x78] sm:$0xff] %vm346, %v344
        %364 = vst.msk [vmem:[#allocation2 + $0x80] sm:$0xff] %vm346, %v345
        %v365 = vld [vmem:[%s1] sm:$0xff]
        %v366 = vld [vmem:[%s1 + $0x8] sm:$0xff]
        %v367 = vld [vmem:[%s1 + $0x10] sm:$0xff]
        %v368 = vld [vmem:[%s1 + $0x18] sm:$0xff]
        %v369 = vld [vmem:[%s1 + $0x20] sm:$0xff]
        %v370 = vld [vmem:[%s1 + $0x28] sm:$0xff]
        %v371 = vld [vmem:[%s1 + $0x30] sm:$0xff]
        %v372 = vld [vmem:[%s1 + $0x38] sm:$0xff]
        %v373 = vld [vmem:[%s1 + $0x40] sm:$0xff]
        %v374 = vld [vmem:[%s1 + $0x48] sm:$0xff]
        %s375 = scalar_lea.vmem %s1, 80
        %v376 = vld [vmem:[%s375] sm:$0xff]
        %v377 = vld [vmem:[%s375 + $0x8] sm:$0xff]
        %v378 = vld [vmem:[%s375 + $0x10] sm:$0xff]
        %v379 = vld [vmem:[%s375 + $0x18] sm:$0xff]
        %v380 = vld [vmem:[%s375 + $0x20] sm:$0xff]
        %v381 = vld [vmem:[%s375 + $0x28] sm:$0xff]
        %v382 = vld [vmem:[%s375 + $0x30] sm:$0xff]
        %v383 = vld [vmem:[%s375 + $0x38] sm:$0xff]
        %v384 = vld [vmem:[%s375 + $0x40] sm:$0xff]
        %v385 = vld [vmem:[%s375 + $0x48] sm:$0xff]
        %s386 = scalar_lea.vmem %s1, 160
        %v387 = vld [vmem:[%s386] sm:$0xff]
        %v388 = vld [vmem:[%s386 + $0x8] sm:$0xff]
        %v389 = vld [vmem:[%s386 + $0x10] sm:$0xff]
        %v390 = vld [vmem:[%s386 + $0x18] sm:$0xff]
        %v391 = vld [vmem:[%s386 + $0x20] sm:$0xff]
        %v392 = vld [vmem:[%s386 + $0x28] sm:$0xff]
        %v393 = vld [vmem:[%s386 + $0x30] sm:$0xff]
        %v394 = vld [vmem:[%s386 + $0x38] sm:$0xff]
        %v395 = vld [vmem:[%s386 + $0x40] sm:$0xff]
        %v396 = vld [vmem:[%s386 + $0x48] sm:$0xff]
        %s397 = scalar_lea.vmem [#allocation2], 7
        %v398 = vld [vmem:[%s397] ss:$4 sm:$0xff]
        %s399 = scalar_lea.vmem [#allocation2], 39
        %v400 = vld [vmem:[%s399] ss:$4 sm:$0xff]
        %s401 = scalar_lea.vmem [#allocation2], 71
        %v402 = vld [vmem:[%s401] ss:$4 sm:$0xff]
        %s403 = scalar_lea.vmem [#allocation2], 103
        %v404 = vld [vmem:[%s403] ss:$4 sm:$0xff]
        %s405 = scalar_lea.vmem [#allocation2], 8
        %v406 = vld [vmem:[%s405] ss:$4 sm:$0xff]
        %s407 = scalar_lea.vmem [#allocation2], 40
        %v408 = vld [vmem:[%s407] ss:$4 sm:$0xff]
        %s409 = scalar_lea.vmem [#allocation2], 72
        %v410 = vld [vmem:[%s409] ss:$4 sm:$0xff]
        %s411 = scalar_lea.vmem [#allocation2], 104
        %v412 = vld [vmem:[%s411] ss:$4 sm:$0xff]
        %v414 = vsel %vm346, %v406, 0
        %v417 = vsel %vm346, %v408, 0
        %v420 = vsel %vm346, %v410, 0
        %v423 = vsel %vm346, %v412, 0
        %425 = vmatprep.subr.mxu0 0.0
        %426 = vmatpush1.msra.mxu0 0.0
        %427 = vmatprep.subr.mxu0 0.0
        %428 = vmatpush1.msra.mxu0 0.0
        %429 = vmatprep.subr.mxu0 0.0
        %430 = vmatpush1.msra.mxu0 0.0
        %431 = vmatprep.subr.mxu0 0.0
        %432 = vmatpush1.msra.mxu0 0.0
        %433 = vmatprep.subr.mxu0 0.0
        %434 = vmatpush1.msra.mxu0 0.0
        %435 = vmatprep.subr.mxu0 0.0
        %436 = vmatpush1.msra.mxu0 0.0
        %437 = vmatprep.subr.mxu0 0.0
        %438 = vmatpush1.msra.mxu0 %v385
        %439 = vmatprep.subr.mxu0 0.0
        %440 = vmatpush1.msra.mxu0 %v384
        %441 = vmatprep.subr.mxu0 0.0
        %442 = vmatpush1.msra.mxu0 %v383
        %443 = vmatprep.subr.mxu0 0.0
        %444 = vmatpush1.msra.mxu0 %v382
        %445 = vmatprep.subr.mxu0 0.0
        %446 = vmatpush1.msra.mxu0 %v381
        %447 = vmatprep.subr.mxu0 0.0
        %448 = vmatpush1.msra.mxu0 %v380
        %449 = vmatprep.subr.mxu0 0.0
        %450 = vmatpush1.msra.mxu0 %v379
        %451 = vmatprep.subr.mxu0 0.0
        %452 = vmatpush1.msra.mxu0 %v378
        %453 = vmatprep.subr.mxu0 0.0
        %454 = vmatpush1.msra.mxu0 %v377
        %455 = vmatprep.subr.mxu0 0.0
        %456 = vmatpush1.msra.mxu0 %v376
        %457 = vmatprep.subr.mxu0 0.0
        %458 = vmatpush2.msra.mxu0 0.0
        %459 = vmatprep.subr.mxu0 0.0
        %460 = vmatpush2.msra.mxu0 0.0
        %461 = vmatprep.subr.mxu0 0.0
        %462 = vmatpush2.msra.mxu0 0.0
        %463 = vmatprep.subr.mxu0 0.0
        %464 = vmatpush2.msra.mxu0 0.0
        %465 = vmatprep.subr.mxu0 0.0
        %466 = vmatpush2.msra.mxu0 0.0
        %467 = vmatprep.subr.mxu0 0.0
        %468 = vmatpush2.msra.mxu0 0.0
        %469 = vmatprep.subr.mxu0 0.0
        %470 = vmatpush2.msra.mxu0 0.0
        %471 = vmatprep.subr.mxu0 0.0
        %472 = vmatpush2.msra.mxu0 0.0
        %473 = vmatprep.subr.mxu0 0.0
        %474 = vmatpush2.msra.mxu0 0.0
        %475 = vmatprep.subr.mxu0 0.0
        %476 = vmatpush2.msra.mxu0 0.0
        %477 = vmatprep.subr.mxu0 0.0
        %478 = vmatpush2.msra.mxu0 0.0
        %479 = vmatprep.subr.mxu0 0.0
        %480 = vmatpush2.msra.mxu0 0.0
        %481 = vmatprep.subr.mxu0 0.0
        %482 = vmatpush2.msra.mxu0 0.0
        %483 = vmatprep.subr.mxu0 0.0
        %484 = vmatpush2.msra.mxu0 0.0
        %485 = vmatprep.subr.mxu0 0.0
        %486 = vmatpush2.msra.mxu0 0.0
        %487 = vmatprep.subr.mxu0 0.0
        %488 = vmatpush2.msra.mxu0 0.0
        %489 = vmatprep.mubr.f32.mxu0 0.0
        %490 = vmatmul.mubr.f32.gmra.mxu0 %v414
        %v491 = vpop.f32.mrf.mxu0
        %v492 = vadd.f32 0.0, %v491
        %v493 = vpop.f32.mrf.mxu0
        %494 = vmatprep.mubr.f32.mxu0 0.0
        %495 = vmatmul.mubr.f32.gmra.mxu0 %v417
        %v496 = vpop.f32.mrf.mxu0
        %v497 = vadd.f32 0.0, %v496
        %v498 = vpop.f32.mrf.mxu0
        %499 = vmatprep.mubr.f32.mxu0 0.0
        %500 = vmatmul.mubr.f32.gmra.mxu0 %v420
        %v501 = vpop.f32.mrf.mxu0
        %v502 = vadd.f32 0.0, %v501
        %v503 = vpop.f32.mrf.mxu0
        %504 = vmatprep.mubr.f32.mxu0 0.0
        %505 = vmatmul.mubr.f32.gmra.mxu0 %v423
        %v506 = vpop.f32.mrf.mxu0
        %v507 = vadd.f32 0.0, %v506
        %v508 = vpop.f32.mrf.mxu0
        %509 = vdwg.mxu0
        %v511 = vsel %vm346, %v398, 0
        %v514 = vsel %vm346, %v400, 0
        %v517 = vsel %vm346, %v402, 0
        %v520 = vsel %vm346, %v404, 0
        %522 = vmatprep.subr.mxu0 0.0
        %523 = vmatpush1.msra.mxu0 0.0
        %524 = vmatprep.subr.mxu0 0.0
        %525 = vmatpush1.msra.mxu0 0.0
        %526 = vmatprep.subr.mxu0 0.0
        %527 = vmatpush1.msra.mxu0 0.0
        %528 = vmatprep.subr.mxu0 0.0
        %529 = vmatpush1.msra.mxu0 0.0
        %530 = vmatprep.subr.mxu0 0.0
        %531 = vmatpush1.msra.mxu0 0.0
        %532 = vmatprep.subr.mxu0 0.0
        %533 = vmatpush1.msra.mxu0 0.0
        %534 = vmatprep.subr.mxu0 0.0
        %535 = vmatpush1.msra.mxu0 %v374
        %536 = vmatprep.subr.mxu0 0.0
        %537 = vmatpush1.msra.mxu0 %v373
        %538 = vmatprep.subr.mxu0 0.0
        %539 = vmatpush1.msra.mxu0 %v372
        %540 = vmatprep.subr.mxu0 0.0
        %541 = vmatpush1.msra.mxu0 %v371
        %542 = vmatprep.subr.mxu0 0.0
        %543 = vmatpush1.msra.mxu0 %v370
        %544 = vmatprep.subr.mxu0 0.0
        %545 = vmatpush1.msra.mxu0 %v369
        %546 = vmatprep.subr.mxu0 0.0
        %547 = vmatpush1.msra.mxu0 %v368
        %548 = vmatprep.subr.mxu0 0.0
        %549 = vmatpush1.msra.mxu0 %v367
        %550 = vmatprep.subr.mxu0 0.0
        %551 = vmatpush1.msra.mxu0 %v366
        %552 = vmatprep.subr.mxu0 0.0
        %553 = vmatpush1.msra.mxu0 %v365
        %554 = vmatprep.subr.mxu0 0.0
        %555 = vmatpush2.msra.mxu0 0.0
        %556 = vmatprep.subr.mxu0 0.0
        %557 = vmatpush2.msra.mxu0 0.0
        %558 = vmatprep.subr.mxu0 0.0
        %559 = vmatpush2.msra.mxu0 0.0
        %560 = vmatprep.subr.mxu0 0.0
        %561 = vmatpush2.msra.mxu0 0.0
        %562 = vmatprep.subr.mxu0 0.0
        %563 = vmatpush2.msra.mxu0 0.0
        %564 = vmatprep.subr.mxu0 0.0
        %565 = vmatpush2.msra.mxu0 0.0
        %566 = vmatprep.subr.mxu0 0.0
        %567 = vmatpush2.msra.mxu0 0.0
        %568 = vmatprep.subr.mxu0 0.0
        %569 = vmatpush2.msra.mxu0 0.0
        %570 = vmatprep.subr.mxu0 0.0
        %571 = vmatpush2.msra.mxu0 0.0
        %572 = vmatprep.subr.mxu0 0.0
        %573 = vmatpush2.msra.mxu0 0.0
        %574 = vmatprep.subr.mxu0 0.0
        %575 = vmatpush2.msra.mxu0 0.0
        %576 = vmatprep.subr.mxu0 0.0
        %577 = vmatpush2.msra.mxu0 0.0
        %578 = vmatprep.subr.mxu0 0.0
        %579 = vmatpush2.msra.mxu0 0.0
        %580 = vmatprep.subr.mxu0 0.0
        %581 = vmatpush2.msra.mxu0 0.0
        %582 = vmatprep.subr.mxu0 0.0
        %583 = vmatpush2.msra.mxu0 0.0
        %584 = vmatprep.subr.mxu0 0.0
        %585 = vmatpush2.msra.mxu0 0.0
        %586 = vmatprep.mubr.f32.mxu0 0.0
        %587 = vmatmul.mubr.f32.gmra.mxu0 %v511
        %v588 = vpop.f32.mrf.mxu0
        %v589 = vadd.f32 %v492, %v588
        %v590 = vpop.f32.mrf.mxu0
        %591 = vmatprep.mubr.f32.mxu0 0.0
        %592 = vmatmul.mubr.f32.gmra.mxu0 %v514
        %v593 = vpop.f32.mrf.mxu0
        %v594 = vadd.f32 %v497, %v593
        %v595 = vpop.f32.mrf.mxu0
        %596 = vmatprep.mubr.f32.mxu0 0.0
        %597 = vmatmul.mubr.f32.gmra.mxu0 %v517
        %v598 = vpop.f32.mrf.mxu0
        %v599 = vadd.f32 %v502, %v598
        %v600 = vpop.f32.mrf.mxu0
        %601 = vmatprep.mubr.f32.mxu0 0.0
        %602 = vmatmul.mubr.f32.gmra.mxu0 %v520
        %v603 = vpop.f32.mrf.mxu0
        %v604 = vadd.f32 %v507, %v603
        %v605 = vpop.f32.mrf.mxu0
        %606 = vdwg.mxu0
        %s607 = scalar_lea.vmem [#allocation2], 9
        %v608 = vld [vmem:[%s607] ss:$4 sm:$0xff]
        %s609 = scalar_lea.vmem [#allocation2], 41
        %v610 = vld [vmem:[%s609] ss:$4 sm:$0xff]
        %s611 = scalar_lea.vmem [#allocation2], 73
        %v612 = vld [vmem:[%s611] ss:$4 sm:$0xff]
        %s613 = scalar_lea.vmem [#allocation2], 105
        %v614 = vld [vmem:[%s613] ss:$4 sm:$0xff]
        %v616 = vsel %vm346, %v608, 0
        %v619 = vsel %vm346, %v610, 0
        %v622 = vsel %vm346, %v612, 0
        %v625 = vsel %vm346, %v614, 0
        %627 = vmatprep.subr.mxu0 0.0
        %628 = vmatpush1.msra.mxu0 0.0
        %629 = vmatprep.subr.mxu0 0.0
        %630 = vmatpush1.msra.mxu0 0.0
        %631 = vmatprep.subr.mxu0 0.0
        %632 = vmatpush1.msra.mxu0 0.0
        %633 = vmatprep.subr.mxu0 0.0
        %634 = vmatpush1.msra.mxu0 0.0
        %635 = vmatprep.subr.mxu0 0.0
        %636 = vmatpush1.msra.mxu0 0.0
        %637 = vmatprep.subr.mxu0 0.0
        %638 = vmatpush1.msra.mxu0 0.0
        %639 = vmatprep.subr.mxu0 0.0
        %640 = vmatpush1.msra.mxu0 %v396
        %641 = vmatprep.subr.mxu0 0.0
        %642 = vmatpush1.msra.mxu0 %v395
        %643 = vmatprep.subr.mxu0 0.0
        %644 = vmatpush1.msra.mxu0 %v394
        %645 = vmatprep.subr.mxu0 0.0
        %646 = vmatpush1.msra.mxu0 %v393
        %647 = vmatprep.subr.mxu0 0.0
        %648 = vmatpush1.msra.mxu0 %v392
        %649 = vmatprep.subr.mxu0 0.0
        %650 = vmatpush1.msra.mxu0 %v391
        %651 = vmatprep.subr.mxu0 0.0
        %652 = vmatpush1.msra.mxu0 %v390
        %653 = vmatprep.subr.mxu0 0.0
        %654 = vmatpush1.msra.mxu0 %v389
        %655 = vmatprep.subr.mxu0 0.0
        %656 = vmatpush1.msra.mxu0 %v388
        %657 = vmatprep.subr.mxu0 0.0
        %658 = vmatpush1.msra.mxu0 %v387
        %659 = vmatprep.subr.mxu0 0.0
        %660 = vmatpush2.msra.mxu0 0.0
        %661 = vmatprep.subr.mxu0 0.0
        %662 = vmatpush2.msra.mxu0 0.0
        %663 = vmatprep.subr.mxu0 0.0
        %664 = vmatpush2.msra.mxu0 0.0
        %665 = vmatprep.subr.mxu0 0.0
        %666 = vmatpush2.msra.mxu0 0.0
        %667 = vmatprep.subr.mxu0 0.0
        %668 = vmatpush2.msra.mxu0 0.0
        %669 = vmatprep.subr.mxu0 0.0
        %670 = vmatpush2.msra.mxu0 0.0
        %671 = vmatprep.subr.mxu0 0.0
        %672 = vmatpush2.msra.mxu0 0.0
        %673 = vmatprep.subr.mxu0 0.0
        %674 = vmatpush2.msra.mxu0 0.0
        %675 = vmatprep.subr.mxu0 0.0
        %676 = vmatpush2.msra.mxu0 0.0
        %677 = vmatprep.subr.mxu0 0.0
        %678 = vmatpush2.msra.mxu0 0.0
        %679 = vmatprep.subr.mxu0 0.0
        %680 = vmatpush2.msra.mxu0 0.0
        %681 = vmatprep.subr.mxu0 0.0
        %682 = vmatpush2.msra.mxu0 0.0
        %683 = vmatprep.subr.mxu0 0.0
        %684 = vmatpush2.msra.mxu0 0.0
        %685 = vmatprep.subr.mxu0 0.0
        %686 = vmatpush2.msra.mxu0 0.0
        %687 = vmatprep.subr.mxu0 0.0
        %688 = vmatpush2.msra.mxu0 0.0
        %689 = vmatprep.subr.mxu0 0.0
        %690 = vmatpush2.msra.mxu0 0.0
        %691 = vmatprep.mubr.f32.mxu0 0.0
        %692 = vmatmul.mubr.f32.gmra.mxu0 %v616
        %v693 = vpop.f32.mrf.mxu0
        %v694 = vadd.f32 0.0, %v693
        %v695 = vpop.f32.mrf.mxu0
        %696 = vmatprep.mubr.f32.mxu0 0.0
        %697 = vmatmul.mubr.f32.gmra.mxu0 %v619
        %v698 = vpop.f32.mrf.mxu0
        %v699 = vadd.f32 0.0, %v698
        %v700 = vpop.f32.mrf.mxu0
        %701 = vmatprep.mubr.f32.mxu0 0.0
        %702 = vmatmul.mubr.f32.gmra.mxu0 %v622
        %v703 = vpop.f32.mrf.mxu0
        %v704 = vadd.f32 0.0, %v703
        %v705 = vpop.f32.mrf.mxu0
        %706 = vmatprep.mubr.f32.mxu0 0.0
        %707 = vmatmul.mubr.f32.gmra.mxu0 %v625
        %v708 = vpop.f32.mrf.mxu0
        %v709 = vadd.f32 0.0, %v708
        %v710 = vpop.f32.mrf.mxu0
        %711 = vdwg.mxu0
        %v712 = vadd.f32 %v589, %v694
        %v713 = vadd.f32 %v594, %v699
        %v714 = vadd.f32 %v599, %v704
        %v715 = vadd.f32 %v604, %v709
        %716 = vmatprep.subr.mxu0 0.0
        %717 = vmatpush1.msra.mxu0 0.0
        %718 = vmatprep.subr.mxu0 0.0
        %719 = vmatpush1.msra.mxu0 0.0
        %720 = vmatprep.subr.mxu0 0.0
        %721 = vmatpush1.msra.mxu0 0.0
        %722 = vmatprep.subr.mxu0 0.0
        %723 = vmatpush1.msra.mxu0 0.0
        %724 = vmatprep.subr.mxu0 0.0
        %725 = vmatpush1.msra.mxu0 0.0
        %726 = vmatprep.subr.mxu0 0.0
        %727 = vmatpush1.msra.mxu0 0.0
        %728 = vmatprep.subr.mxu0 0.0
        %729 = vmatpush1.msra.mxu0 %v385
        %730 = vmatprep.subr.mxu0 0.0
        %731 = vmatpush1.msra.mxu0 %v384
        %732 = vmatprep.subr.mxu0 0.0
        %733 = vmatpush1.msra.mxu0 %v383
        %734 = vmatprep.subr.mxu0 0.0
        %735 = vmatpush1.msra.mxu0 %v382
        %736 = vmatprep.subr.mxu0 0.0
        %737 = vmatpush1.msra.mxu0 %v381
        %738 = vmatprep.subr.mxu0 0.0
        %739 = vmatpush1.msra.mxu0 %v380
        %740 = vmatprep.subr.mxu0 0.0
        %741 = vmatpush1.msra.mxu0 %v379
        %742 = vmatprep.subr.mxu0 0.0
        %743 = vmatpush1.msra.mxu0 %v378
        %744 = vmatprep.subr.mxu0 0.0
        %745 = vmatpush1.msra.mxu0 %v377
        %746 = vmatprep.subr.mxu0 0.0
        %747 = vmatpush1.msra.mxu0 %v376
        %748 = vmatprep.subr.mxu0 0.0
        %749 = vmatpush2.msra.mxu0 0.0
        %750 = vmatprep.subr.mxu0 0.0
        %751 = vmatpush2.msra.mxu0 0.0
        %752 = vmatprep.subr.mxu0 0.0
        %753 = vmatpush2.msra.mxu0 0.0
        %754 = vmatprep.subr.mxu0 0.0
        %755 = vmatpush2.msra.mxu0 0.0
        %756 = vmatprep.subr.mxu0 0.0
        %757 = vmatpush2.msra.mxu0 0.0
        %758 = vmatprep.subr.mxu0 0.0
        %759 = vmatpush2.msra.mxu0 0.0
        %760 = vmatprep.subr.mxu0 0.0
        %761 = vmatpush2.msra.mxu0 0.0
        %762 = vmatprep.subr.mxu0 0.0
        %763 = vmatpush2.msra.mxu0 0.0
        %764 = vmatprep.subr.mxu0 0.0
        %765 = vmatpush2.msra.mxu0 0.0
        %766 = vmatprep.subr.mxu0 0.0
        %767 = vmatpush2.msra.mxu0 0.0
        %768 = vmatprep.subr.mxu0 0.0
        %769 = vmatpush2.msra.mxu0 0.0
        %770 = vmatprep.subr.mxu0 0.0
        %771 = vmatpush2.msra.mxu0 0.0
        %772 = vmatprep.subr.mxu0 0.0
        %773 = vmatpush2.msra.mxu0 0.0
        %774 = vmatprep.subr.mxu0 0.0
        %775 = vmatpush2.msra.mxu0 0.0
        %776 = vmatprep.subr.mxu0 0.0
        %777 = vmatpush2.msra.mxu0 0.0
        %778 = vmatprep.subr.mxu0 0.0
        %779 = vmatpush2.msra.mxu0 0.0
        %780 = vmatprep.mubr.f32.mxu0 0.0
        %781 = vmatmul.mubr.f32.gmra.mxu0 %v616
        %v782 = vpop.f32.mrf.mxu0
        %v783 = vadd.f32 0.0, %v782
        %v784 = vpop.f32.mrf.mxu0
        %785 = vmatprep.mubr.f32.mxu0 0.0
        %786 = vmatmul.mubr.f32.gmra.mxu0 %v619
        %v787 = vpop.f32.mrf.mxu0
        %v788 = vadd.f32 0.0, %v787
        %v789 = vpop.f32.mrf.mxu0
        %790 = vmatprep.mubr.f32.mxu0 0.0
        %791 = vmatmul.mubr.f32.gmra.mxu0 %v622
        %v792 = vpop.f32.mrf.mxu0
        %v793 = vadd.f32 0.0, %v792
        %v794 = vpop.f32.mrf.mxu0
        %795 = vmatprep.mubr.f32.mxu0 0.0
        %796 = vmatmul.mubr.f32.gmra.mxu0 %v625
        %v797 = vpop.f32.mrf.mxu0
        %v798 = vadd.f32 0.0, %v797
        %v799 = vpop.f32.mrf.mxu0
        %800 = vdwg.mxu0
        %801 = vmatprep.subr.mxu0 0.0
        %802 = vmatpush1.msra.mxu0 0.0
        %803 = vmatprep.subr.mxu0 0.0
        %804 = vmatpush1.msra.mxu0 0.0
        %805 = vmatprep.subr.mxu0 0.0
        %806 = vmatpush1.msra.mxu0 0.0
        %807 = vmatprep.subr.mxu0 0.0
        %808 = vmatpush1.msra.mxu0 0.0
        %809 = vmatprep.subr.mxu0 0.0
        %810 = vmatpush1.msra.mxu0 0.0
        %811 = vmatprep.subr.mxu0 0.0
        %812 = vmatpush1.msra.mxu0 0.0
        %813 = vmatprep.subr.mxu0 0.0
        %814 = vmatpush1.msra.mxu0 %v374
        %815 = vmatprep.subr.mxu0 0.0
        %816 = vmatpush1.msra.mxu0 %v373
        %817 = vmatprep.subr.mxu0 0.0
        %818 = vmatpush1.msra.mxu0 %v372
        %819 = vmatprep.subr.mxu0 0.0
        %820 = vmatpush1.msra.mxu0 %v371
        %821 = vmatprep.subr.mxu0 0.0
        %822 = vmatpush1.msra.mxu0 %v370
        %823 = vmatprep.subr.mxu0 0.0
        %824 = vmatpush1.msra.mxu0 %v369
        %825 = vmatprep.subr.mxu0 0.0
        %826 = vmatpush1.msra.mxu0 %v368
        %827 = vmatprep.subr.mxu0 0.0
        %828 = vmatpush1.msra.mxu0 %v367
        %829 = vmatprep.subr.mxu0 0.0
        %830 = vmatpush1.msra.mxu0 %v366
        %831 = vmatprep.subr.mxu0 0.0
        %832 = vmatpush1.msra.mxu0 %v365
        %833 = vmatprep.subr.mxu0 0.0
        %834 = vmatpush2.msra.mxu0 0.0
        %835 = vmatprep.subr.mxu0 0.0
        %836 = vmatpush2.msra.mxu0 0.0
        %837 = vmatprep.subr.mxu0 0.0
        %838 = vmatpush2.msra.mxu0 0.0
        %839 = vmatprep.subr.mxu0 0.0
        %840 = vmatpush2.msra.mxu0 0.0
        %841 = vmatprep.subr.mxu0 0.0
        %842 = vmatpush2.msra.mxu0 0.0
        %843 = vmatprep.subr.mxu0 0.0
        %844 = vmatpush2.msra.mxu0 0.0
        %845 = vmatprep.subr.mxu0 0.0
        %846 = vmatpush2.msra.mxu0 0.0
        %847 = vmatprep.subr.mxu0 0.0
        %848 = vmatpush2.msra.mxu0 0.0
        %849 = vmatprep.subr.mxu0 0.0
        %850 = vmatpush2.msra.mxu0 0.0
        %851 = vmatprep.subr.mxu0 0.0
        %852 = vmatpush2.msra.mxu0 0.0
        %853 = vmatprep.subr.mxu0 0.0
        %854 = vmatpush2.msra.mxu0 0.0
        %855 = vmatprep.subr.mxu0 0.0
        %856 = vmatpush2.msra.mxu0 0.0
        %857 = vmatprep.subr.mxu0 0.0
        %858 = vmatpush2.msra.mxu0 0.0
        %859 = vmatprep.subr.mxu0 0.0
        %860 = vmatpush2.msra.mxu0 0.0
        %861 = vmatprep.subr.mxu0 0.0
        %862 = vmatpush2.msra.mxu0 0.0
        %863 = vmatprep.subr.mxu0 0.0
        %864 = vmatpush2.msra.mxu0 0.0
        %865 = vmatprep.mubr.f32.mxu0 0.0
        %866 = vmatmul.mubr.f32.gmra.mxu0 %v414
        %v867 = vpop.f32.mrf.mxu0
        %v868 = vadd.f32 %v783, %v867
        %v869 = vpop.f32.mrf.mxu0
        %870 = vmatprep.mubr.f32.mxu0 0.0
        %871 = vmatmul.mubr.f32.gmra.mxu0 %v417
        %v872 = vpop.f32.mrf.mxu0
        %v873 = vadd.f32 %v788, %v872
        %v874 = vpop.f32.mrf.mxu0
        %875 = vmatprep.mubr.f32.mxu0 0.0
        %876 = vmatmul.mubr.f32.gmra.mxu0 %v420
        %v877 = vpop.f32.mrf.mxu0
        %v878 = vadd.f32 %v793, %v877
        %v879 = vpop.f32.mrf.mxu0
        %880 = vmatprep.mubr.f32.mxu0 0.0
        %881 = vmatmul.mubr.f32.gmra.mxu0 %v423
        %v882 = vpop.f32.mrf.mxu0
        %v883 = vadd.f32 %v798, %v882
        %v884 = vpop.f32.mrf.mxu0
        %885 = vdwg.mxu0
        %s886 = scalar_lea.vmem [#allocation2], 10
        %v887 = vld [vmem:[%s886] ss:$4 sm:$0xff]
        %s888 = scalar_lea.vmem [#allocation2], 42
        %v889 = vld [vmem:[%s888] ss:$4 sm:$0xff]
        %s890 = scalar_lea.vmem [#allocation2], 74
        %v891 = vld [vmem:[%s890] ss:$4 sm:$0xff]
        %s892 = scalar_lea.vmem [#allocation2], 106
        %v893 = vld [vmem:[%s892] ss:$4 sm:$0xff]
        %v895 = vsel %vm346, %v887, 0
        %v898 = vsel %vm346, %v889, 0
        %v901 = vsel %vm346, %v891, 0
        %v904 = vsel %vm346, %v893, 0
        %906 = vmatprep.subr.mxu0 0.0
        %907 = vmatpush1.msra.mxu0 0.0
        %908 = vmatprep.subr.mxu0 0.0
        %909 = vmatpush1.msra.mxu0 0.0
        %910 = vmatprep.subr.mxu0 0.0
        %911 = vmatpush1.msra.mxu0 0.0
        %912 = vmatprep.subr.mxu0 0.0
        %913 = vmatpush1.msra.mxu0 0.0
        %914 = vmatprep.subr.mxu0 0.0
        %915 = vmatpush1.msra.mxu0 0.0
        %916 = vmatprep.subr.mxu0 0.0
        %917 = vmatpush1.msra.mxu0 0.0
        %918 = vmatprep.subr.mxu0 0.0
        %919 = vmatpush1.msra.mxu0 %v396
        %920 = vmatprep.subr.mxu0 0.0
        %921 = vmatpush1.msra.mxu0 %v395
        %922 = vmatprep.subr.mxu0 0.0
        %923 = vmatpush1.msra.mxu0 %v394
        %924 = vmatprep.subr.mxu0 0.0
        %925 = vmatpush1.msra.mxu0 %v393
        %926 = vmatprep.subr.mxu0 0.0
        %927 = vmatpush1.msra.mxu0 %v392
        %928 = vmatprep.subr.mxu0 0.0
        %929 = vmatpush1.msra.mxu0 %v391
        %930 = vmatprep.subr.mxu0 0.0
        %931 = vmatpush1.msra.mxu0 %v390
        %932 = vmatprep.subr.mxu0 0.0
        %933 = vmatpush1.msra.mxu0 %v389
        %934 = vmatprep.subr.mxu0 0.0
        %935 = vmatpush1.msra.mxu0 %v388
        %936 = vmatprep.subr.mxu0 0.0
        %937 = vmatpush1.msra.mxu0 %v387
        %938 = vmatprep.subr.mxu0 0.0
        %939 = vmatpush2.msra.mxu0 0.0
        %940 = vmatprep.subr.mxu0 0.0
        %941 = vmatpush2.msra.mxu0 0.0
        %942 = vmatprep.subr.mxu0 0.0
        %943 = vmatpush2.msra.mxu0 0.0
        %944 = vmatprep.subr.mxu0 0.0
        %945 = vmatpush2.msra.mxu0 0.0
        %946 = vmatprep.subr.mxu0 0.0
        %947 = vmatpush2.msra.mxu0 0.0
        %948 = vmatprep.subr.mxu0 0.0
        %949 = vmatpush2.msra.mxu0 0.0
        %950 = vmatprep.subr.mxu0 0.0
        %951 = vmatpush2.msra.mxu0 0.0
        %952 = vmatprep.subr.mxu0 0.0
        %953 = vmatpush2.msra.mxu0 0.0
        %954 = vmatprep.subr.mxu0 0.0
        %955 = vmatpush2.msra.mxu0 0.0
        %956 = vmatprep.subr.mxu0 0.0
        %957 = vmatpush2.msra.mxu0 0.0
        %958 = vmatprep.subr.mxu0 0.0
        %959 = vmatpush2.msra.mxu0 0.0
        %960 = vmatprep.subr.mxu0 0.0
        %961 = vmatpush2.msra.mxu0 0.0
        %962 = vmatprep.subr.mxu0 0.0
        %963 = vmatpush2.msra.mxu0 0.0
        %964 = vmatprep.subr.mxu0 0.0
        %965 = vmatpush2.msra.mxu0 0.0
        %966 = vmatprep.subr.mxu0 0.0
        %967 = vmatpush2.msra.mxu0 0.0
        %968 = vmatprep.subr.mxu0 0.0
        %969 = vmatpush2.msra.mxu0 0.0
        %970 = vmatprep.mubr.f32.mxu0 0.0
        %971 = vmatmul.mubr.f32.gmra.mxu0 %v895
        %v972 = vpop.f32.mrf.mxu0
        %v973 = vadd.f32 0.0, %v972
        %v974 = vpop.f32.mrf.mxu0
        %975 = vmatprep.mubr.f32.mxu0 0.0
        %976 = vmatmul.mubr.f32.gmra.mxu0 %v898
        %v977 = vpop.f32.mrf.mxu0
        %v978 = vadd.f32 0.0, %v977
        %v979 = vpop.f32.mrf.mxu0
        %980 = vmatprep.mubr.f32.mxu0 0.0
        %981 = vmatmul.mubr.f32.gmra.mxu0 %v901
        %v982 = vpop.f32.mrf.mxu0
        %v983 = vadd.f32 0.0, %v982
        %v984 = vpop.f32.mrf.mxu0
        %985 = vmatprep.mubr.f32.mxu0 0.0
        %986 = vmatmul.mubr.f32.gmra.mxu0 %v904
        %v987 = vpop.f32.mrf.mxu0
        %v988 = vadd.f32 0.0, %v987
        %v989 = vpop.f32.mrf.mxu0
        %990 = vdwg.mxu0
        %v991 = vadd.f32 %v868, %v973
        %v992 = vadd.f32 %v873, %v978
        %v993 = vadd.f32 %v878, %v983
        %v994 = vadd.f32 %v883, %v988
        %v995 = vmax.f32 %v712, %v991
        %v996 = vmax.f32 %v713, %v992
        %v997 = vmax.f32 %v714, %v993
        %v998 = vmax.f32 %v715, %v994
        %999 = vmatprep.subr.mxu0 0.0
        %1000 = vmatpush1.msra.mxu0 0.0
        %1001 = vmatprep.subr.mxu0 0.0
        %1002 = vmatpush1.msra.mxu0 0.0
        %1003 = vmatprep.subr.mxu0 0.0
        %1004 = vmatpush1.msra.mxu0 0.0
        %1005 = vmatprep.subr.mxu0 0.0
        %1006 = vmatpush1.msra.mxu0 0.0
        %1007 = vmatprep.subr.mxu0 0.0
        %1008 = vmatpush1.msra.mxu0 0.0
        %1009 = vmatprep.subr.mxu0 0.0
        %1010 = vmatpush1.msra.mxu0 0.0
        %1011 = vmatprep.subr.mxu0 0.0
        %1012 = vmatpush1.msra.mxu0 %v385
        %1013 = vmatprep.subr.mxu0 0.0
        %1014 = vmatpush1.msra.mxu0 %v384
        %1015 = vmatprep.subr.mxu0 0.0
        %1016 = vmatpush1.msra.mxu0 %v383
        %1017 = vmatprep.subr.mxu0 0.0
        %1018 = vmatpush1.msra.mxu0 %v382
        %1019 = vmatprep.subr.mxu0 0.0
        %1020 = vmatpush1.msra.mxu0 %v381
        %1021 = vmatprep.subr.mxu0 0.0
        %1022 = vmatpush1.msra.mxu0 %v380
        %1023 = vmatprep.subr.mxu0 0.0
        %1024 = vmatpush1.msra.mxu0 %v379
        %1025 = vmatprep.subr.mxu0 0.0
        %1026 = vmatpush1.msra.mxu0 %v378
        %1027 = vmatprep.subr.mxu0 0.0
        %1028 = vmatpush1.msra.mxu0 %v377
        %1029 = vmatprep.subr.mxu0 0.0
        %1030 = vmatpush1.msra.mxu0 %v376
        %1031 = vmatprep.subr.mxu0 0.0
        %1032 = vmatpush2.msra.mxu0 0.0
        %1033 = vmatprep.subr.mxu0 0.0
        %1034 = vmatpush2.msra.mxu0 0.0
        %1035 = vmatprep.subr.mxu0 0.0
        %1036 = vmatpush2.msra.mxu0 0.0
        %1037 = vmatprep.subr.mxu0 0.0
        %1038 = vmatpush2.msra.mxu0 0.0
        %1039 = vmatprep.subr.mxu0 0.0
        %1040 = vmatpush2.msra.mxu0 0.0
        %1041 = vmatprep.subr.mxu0 0.0
        %1042 = vmatpush2.msra.mxu0 0.0
        %1043 = vmatprep.subr.mxu0 0.0
        %1044 = vmatpush2.msra.mxu0 0.0
        %1045 = vmatprep.subr.mxu0 0.0
        %1046 = vmatpush2.msra.mxu0 0.0
        %1047 = vmatprep.subr.mxu0 0.0
        %1048 = vmatpush2.msra.mxu0 0.0
        %1049 = vmatprep.subr.mxu0 0.0
        %1050 = vmatpush2.msra.mxu0 0.0
        %1051 = vmatprep.subr.mxu0 0.0
        %1052 = vmatpush2.msra.mxu0 0.0
        %1053 = vmatprep.subr.mxu0 0.0
        %1054 = vmatpush2.msra.mxu0 0.0
        %1055 = vmatprep.subr.mxu0 0.0
        %1056 = vmatpush2.msra.mxu0 0.0
        %1057 = vmatprep.subr.mxu0 0.0
        %1058 = vmatpush2.msra.mxu0 0.0
        %1059 = vmatprep.subr.mxu0 0.0
        %1060 = vmatpush2.msra.mxu0 0.0
        %1061 = vmatprep.subr.mxu0 0.0
        %1062 = vmatpush2.msra.mxu0 0.0
        %1063 = vmatprep.mubr.f32.mxu0 0.0
        %1064 = vmatmul.mubr.f32.gmra.mxu0 %v895
        %v1065 = vpop.f32.mrf.mxu0
        %v1066 = vadd.f32 0.0, %v1065
        %v1067 = vpop.f32.mrf.mxu0
        %1068 = vmatprep.mubr.f32.mxu0 0.0
        %1069 = vmatmul.mubr.f32.gmra.mxu0 %v898
        %v1070 = vpop.f32.mrf.mxu0
        %v1071 = vadd.f32 0.0, %v1070
        %v1072 = vpop.f32.mrf.mxu0
        %1073 = vmatprep.mubr.f32.mxu0 0.0
        %1074 = vmatmul.mubr.f32.gmra.mxu0 %v901
        %v1075 = vpop.f32.mrf.mxu0
        %v1076 = vadd.f32 0.0, %v1075
        %v1077 = vpop.f32.mrf.mxu0
        %1078 = vmatprep.mubr.f32.mxu0 0.0
        %1079 = vmatmul.mubr.f32.gmra.mxu0 %v904
        %v1080 = vpop.f32.mrf.mxu0
        %v1081 = vadd.f32 0.0, %v1080
        %v1082 = vpop.f32.mrf.mxu0
        %1083 = vdwg.mxu0
        %1084 = vmatprep.subr.mxu0 0.0
        %1085 = vmatpush1.msra.mxu0 0.0
        %1086 = vmatprep.subr.mxu0 0.0
        %1087 = vmatpush1.msra.mxu0 0.0
        %1088 = vmatprep.subr.mxu0 0.0
        %1089 = vmatpush1.msra.mxu0 0.0
        %1090 = vmatprep.subr.mxu0 0.0
        %1091 = vmatpush1.msra.mxu0 0.0
        %1092 = vmatprep.subr.mxu0 0.0
        %1093 = vmatpush1.msra.mxu0 0.0
        %1094 = vmatprep.subr.mxu0 0.0
        %1095 = vmatpush1.msra.mxu0 0.0
        %1096 = vmatprep.subr.mxu0 0.0
        %1097 = vmatpush1.msra.mxu0 %v374
        %1098 = vmatprep.subr.mxu0 0.0
        %1099 = vmatpush1.msra.mxu0 %v373
        %1100 = vmatprep.subr.mxu0 0.0
        %1101 = vmatpush1.msra.mxu0 %v372
        %1102 = vmatprep.subr.mxu0 0.0
        %1103 = vmatpush1.msra.mxu0 %v371
        %1104 = vmatprep.subr.mxu0 0.0
        %1105 = vmatpush1.msra.mxu0 %v370
        %1106 = vmatprep.subr.mxu0 0.0
        %1107 = vmatpush1.msra.mxu0 %v369
        %1108 = vmatprep.subr.mxu0 0.0
        %1109 = vmatpush1.msra.mxu0 %v368
        %1110 = vmatprep.subr.mxu0 0.0
        %1111 = vmatpush1.msra.mxu0 %v367
        %1112 = vmatprep.subr.mxu0 0.0
        %1113 = vmatpush1.msra.mxu0 %v366
        %1114 = vmatprep.subr.mxu0 0.0
        %1115 = vmatpush1.msra.mxu0 %v365
        %1116 = vmatprep.subr.mxu0 0.0
        %1117 = vmatpush2.msra.mxu0 0.0
        %1118 = vmatprep.subr.mxu0 0.0
        %1119 = vmatpush2.msra.mxu0 0.0
        %1120 = vmatprep.subr.mxu0 0.0
        %1121 = vmatpush2.msra.mxu0 0.0
        %1122 = vmatprep.subr.mxu0 0.0
        %1123 = vmatpush2.msra.mxu0 0.0
        %1124 = vmatprep.subr.mxu0 0.0
        %1125 = vmatpush2.msra.mxu0 0.0
        %1126 = vmatprep.subr.mxu0 0.0
        %1127 = vmatpush2.msra.mxu0 0.0
        %1128 = vmatprep.subr.mxu0 0.0
        %1129 = vmatpush2.msra.mxu0 0.0
        %1130 = vmatprep.subr.mxu0 0.0
        %1131 = vmatpush2.msra.mxu0 0.0
        %1132 = vmatprep.subr.mxu0 0.0
        %1133 = vmatpush2.msra.mxu0 0.0
        %1134 = vmatprep.subr.mxu0 0.0
        %1135 = vmatpush2.msra.mxu0 0.0
        %1136 = vmatprep.subr.mxu0 0.0
        %1137 = vmatpush2.msra.mxu0 0.0
        %1138 = vmatprep.subr.mxu0 0.0
        %1139 = vmatpush2.msra.mxu0 0.0
        %1140 = vmatprep.subr.mxu0 0.0
        %1141 = vmatpush2.msra.mxu0 0.0
        %1142 = vmatprep.subr.mxu0 0.0
        %1143 = vmatpush2.msra.mxu0 0.0
        %1144 = vmatprep.subr.mxu0 0.0
        %1145 = vmatpush2.msra.mxu0 0.0
        %1146 = vmatprep.subr.mxu0 0.0
        %1147 = vmatpush2.msra.mxu0 0.0
        %1148 = vmatprep.mubr.f32.mxu0 0.0
        %1149 = vmatmul.mubr.f32.gmra.mxu0 %v616
        %v1150 = vpop.f32.mrf.mxu0
        %v1151 = vadd.f32 %v1066, %v1150
        %v1152 = vpop.f32.mrf.mxu0
        %1153 = vmatprep.mubr.f32.mxu0 0.0
        %1154 = vmatmul.mubr.f32.gmra.mxu0 %v619
        %v1155 = vpop.f32.mrf.mxu0
        %v1156 = vadd.f32 %v1071, %v1155
        %v1157 = vpop.f32.mrf.mxu0
        %1158 = vmatprep.mubr.f32.mxu0 0.0
        %1159 = vmatmul.mubr.f32.gmra.mxu0 %v622
        %v1160 = vpop.f32.mrf.mxu0
        %v1161 = vadd.f32 %v1076, %v1160
        %v1162 = vpop.f32.mrf.mxu0
        %1163 = vmatprep.mubr.f32.mxu0 0.0
        %1164 = vmatmul.mubr.f32.gmra.mxu0 %v625
        %v1165 = vpop.f32.mrf.mxu0
        %v1166 = vadd.f32 %v1081, %v1165
        %v1167 = vpop.f32.mrf.mxu0
        %1168 = vdwg.mxu0
        %s1169 = scalar_lea.vmem [#allocation2], 11
        %v1170 = vld [vmem:[%s1169] ss:$4 sm:$0xff]
        %s1171 = scalar_lea.vmem [#allocation2], 43
        %v1172 = vld [vmem:[%s1171] ss:$4 sm:$0xff]
        %s1173 = scalar_lea.vmem [#allocation2], 75
        %v1174 = vld [vmem:[%s1173] ss:$4 sm:$0xff]
        %s1175 = scalar_lea.vmem [#allocation2], 107
        %v1176 = vld [vmem:[%s1175] ss:$4 sm:$0xff]
        %v1178 = vsel %vm346, %v1170, 0
        %v1181 = vsel %vm346, %v1172, 0
        %v1184 = vsel %vm346, %v1174, 0
        %v1187 = vsel %vm346, %v1176, 0
        %1189 = vmatprep.subr.mxu0 0.0
        %1190 = vmatpush1.msra.mxu0 0.0
        %1191 = vmatprep.subr.mxu0 0.0
        %1192 = vmatpush1.msra.mxu0 0.0
        %1193 = vmatprep.subr.mxu0 0.0
        %1194 = vmatpush1.msra.mxu0 0.0
        %1195 = vmatprep.subr.mxu0 0.0
        %1196 = vmatpush1.msra.mxu0 0.0
        %1197 = vmatprep.subr.mxu0 0.0
        %1198 = vmatpush1.msra.mxu0 0.0
        %1199 = vmatprep.subr.mxu0 0.0
        %1200 = vmatpush1.msra.mxu0 0.0
        %1201 = vmatprep.subr.mxu0 0.0
        %1202 = vmatpush1.msra.mxu0 %v396
        %1203 = vmatprep.subr.mxu0 0.0
        %1204 = vmatpush1.msra.mxu0 %v395
        %1205 = vmatprep.subr.mxu0 0.0
        %1206 = vmatpush1.msra.mxu0 %v394
        %1207 = vmatprep.subr.mxu0 0.0
        %1208 = vmatpush1.msra.mxu0 %v393
        %1209 = vmatprep.subr.mxu0 0.0
        %1210 = vmatpush1.msra.mxu0 %v392
        %1211 = vmatprep.subr.mxu0 0.0
        %1212 = vmatpush1.msra.mxu0 %v391
        %1213 = vmatprep.subr.mxu0 0.0
        %1214 = vmatpush1.msra.mxu0 %v390
        %1215 = vmatprep.subr.mxu0 0.0
        %1216 = vmatpush1.msra.mxu0 %v389
        %1217 = vmatprep.subr.mxu0 0.0
        %1218 = vmatpush1.msra.mxu0 %v388
        %1219 = vmatprep.subr.mxu0 0.0
        %1220 = vmatpush1.msra.mxu0 %v387
        %1221 = vmatprep.subr.mxu0 0.0
        %1222 = vmatpush2.msra.mxu0 0.0
        %1223 = vmatprep.subr.mxu0 0.0
        %1224 = vmatpush2.msra.mxu0 0.0
        %1225 = vmatprep.subr.mxu0 0.0
        %1226 = vmatpush2.msra.mxu0 0.0
        %1227 = vmatprep.subr.mxu0 0.0
        %1228 = vmatpush2.msra.mxu0 0.0
        %1229 = vmatprep.subr.mxu0 0.0
        %1230 = vmatpush2.msra.mxu0 0.0
        %1231 = vmatprep.subr.mxu0 0.0
        %1232 = vmatpush2.msra.mxu0 0.0
        %1233 = vmatprep.subr.mxu0 0.0
        %1234 = vmatpush2.msra.mxu0 0.0
        %1235 = vmatprep.subr.mxu0 0.0
        %1236 = vmatpush2.msra.mxu0 0.0
        %1237 = vmatprep.subr.mxu0 0.0
        %1238 = vmatpush2.msra.mxu0 0.0
        %1239 = vmatprep.subr.mxu0 0.0
        %1240 = vmatpush2.msra.mxu0 0.0
        %1241 = vmatprep.subr.mxu0 0.0
        %1242 = vmatpush2.msra.mxu0 0.0
        %1243 = vmatprep.subr.mxu0 0.0
        %1244 = vmatpush2.msra.mxu0 0.0
        %1245 = vmatprep.subr.mxu0 0.0
        %1246 = vmatpush2.msra.mxu0 0.0
        %1247 = vmatprep.subr.mxu0 0.0
        %1248 = vmatpush2.msra.mxu0 0.0
        %1249 = vmatprep.subr.mxu0 0.0
        %1250 = vmatpush2.msra.mxu0 0.0
        %1251 = vmatprep.subr.mxu0 0.0
        %1252 = vmatpush2.msra.mxu0 0.0
        %1253 = vmatprep.mubr.f32.mxu0 0.0
        %1254 = vmatmul.mubr.f32.gmra.mxu0 %v1178
        %v1255 = vpop.f32.mrf.mxu0
        %v1256 = vadd.f32 0.0, %v1255
        %v1257 = vpop.f32.mrf.mxu0
        %1258 = vmatprep.mubr.f32.mxu0 0.0
        %1259 = vmatmul.mubr.f32.gmra.mxu0 %v1181
        %v1260 = vpop.f32.mrf.mxu0
        %v1261 = vadd.f32 0.0, %v1260
        %v1262 = vpop.f32.mrf.mxu0
        %1263 = vmatprep.mubr.f32.mxu0 0.0
        %1264 = vmatmul.mubr.f32.gmra.mxu0 %v1184
        %v1265 = vpop.f32.mrf.mxu0
        %v1266 = vadd.f32 0.0, %v1265
        %v1267 = vpop.f32.mrf.mxu0
        %1268 = vmatprep.mubr.f32.mxu0 0.0
        %1269 = vmatmul.mubr.f32.gmra.mxu0 %v1187
        %v1270 = vpop.f32.mrf.mxu0
        %v1271 = vadd.f32 0.0, %v1270
        %v1272 = vpop.f32.mrf.mxu0
        %1273 = vdwg.mxu0
        %v1274 = vadd.f32 %v1151, %v1256
        %v1275 = vadd.f32 %v1156, %v1261
        %v1276 = vadd.f32 %v1161, %v1266
        %v1277 = vadd.f32 %v1166, %v1271
        %1278 = vmatprep.subr.mxu0 0.0
        %1279 = vmatpush1.msra.mxu0 0.0
        %1280 = vmatprep.subr.mxu0 0.0
        %1281 = vmatpush1.msra.mxu0 0.0
        %1282 = vmatprep.subr.mxu0 0.0
        %1283 = vmatpush1.msra.mxu0 0.0
        %1284 = vmatprep.subr.mxu0 0.0
        %1285 = vmatpush1.msra.mxu0 0.0
        %1286 = vmatprep.subr.mxu0 0.0
        %1287 = vmatpush1.msra.mxu0 0.0
        %1288 = vmatprep.subr.mxu0 0.0
        %1289 = vmatpush1.msra.mxu0 0.0
        %1290 = vmatprep.subr.mxu0 0.0
        %1291 = vmatpush1.msra.mxu0 %v385
        %1292 = vmatprep.subr.mxu0 0.0
        %1293 = vmatpush1.msra.mxu0 %v384
        %1294 = vmatprep.subr.mxu0 0.0
        %1295 = vmatpush1.msra.mxu0 %v383
        %1296 = vmatprep.subr.mxu0 0.0
        %1297 = vmatpush1.msra.mxu0 %v382
        %1298 = vmatprep.subr.mxu0 0.0
        %1299 = vmatpush1.msra.mxu0 %v381
        %1300 = vmatprep.subr.mxu0 0.0
        %1301 = vmatpush1.msra.mxu0 %v380
        %1302 = vmatprep.subr.mxu0 0.0
        %1303 = vmatpush1.msra.mxu0 %v379
        %1304 = vmatprep.subr.mxu0 0.0
        %1305 = vmatpush1.msra.mxu0 %v378
        %1306 = vmatprep.subr.mxu0 0.0
        %1307 = vmatpush1.msra.mxu0 %v377
        %1308 = vmatprep.subr.mxu0 0.0
        %1309 = vmatpush1.msra.mxu0 %v376
        %1310 = vmatprep.subr.mxu0 0.0
        %1311 = vmatpush2.msra.mxu0 0.0
        %1312 = vmatprep.subr.mxu0 0.0
        %1313 = vmatpush2.msra.mxu0 0.0
        %1314 = vmatprep.subr.mxu0 0.0
        %1315 = vmatpush2.msra.mxu0 0.0
        %1316 = vmatprep.subr.mxu0 0.0
        %1317 = vmatpush2.msra.mxu0 0.0
        %1318 = vmatprep.subr.mxu0 0.0
        %1319 = vmatpush2.msra.mxu0 0.0
        %1320 = vmatprep.subr.mxu0 0.0
        %1321 = vmatpush2.msra.mxu0 0.0
        %1322 = vmatprep.subr.mxu0 0.0
        %1323 = vmatpush2.msra.mxu0 0.0
        %1324 = vmatprep.subr.mxu0 0.0
        %1325 = vmatpush2.msra.mxu0 0.0
        %1326 = vmatprep.subr.mxu0 0.0
        %1327 = vmatpush2.msra.mxu0 0.0
        %1328 = vmatprep.subr.mxu0 0.0
        %1329 = vmatpush2.msra.mxu0 0.0
        %1330 = vmatprep.subr.mxu0 0.0
        %1331 = vmatpush2.msra.mxu0 0.0
        %1332 = vmatprep.subr.mxu0 0.0
        %1333 = vmatpush2.msra.mxu0 0.0
        %1334 = vmatprep.subr.mxu0 0.0
        %1335 = vmatpush2.msra.mxu0 0.0
        %1336 = vmatprep.subr.mxu0 0.0
        %1337 = vmatpush2.msra.mxu0 0.0
        %1338 = vmatprep.subr.mxu0 0.0
        %1339 = vmatpush2.msra.mxu0 0.0
        %1340 = vmatprep.subr.mxu0 0.0
        %1341 = vmatpush2.msra.mxu0 0.0
        %1342 = vmatprep.mubr.f32.mxu0 0.0
        %1343 = vmatmul.mubr.f32.gmra.mxu0 %v1178
        %v1344 = vpop.f32.mrf.mxu0
        %v1345 = vadd.f32 0.0, %v1344
        %v1346 = vpop.f32.mrf.mxu0
        %1347 = vmatprep.mubr.f32.mxu0 0.0
        %1348 = vmatmul.mubr.f32.gmra.mxu0 %v1181
        %v1349 = vpop.f32.mrf.mxu0
        %v1350 = vadd.f32 0.0, %v1349
        %v1351 = vpop.f32.mrf.mxu0
        %1352 = vmatprep.mubr.f32.mxu0 0.0
        %1353 = vmatmul.mubr.f32.gmra.mxu0 %v1184
        %v1354 = vpop.f32.mrf.mxu0
        %v1355 = vadd.f32 0.0, %v1354
        %v1356 = vpop.f32.mrf.mxu0
        %1357 = vmatprep.mubr.f32.mxu0 0.0
        %1358 = vmatmul.mubr.f32.gmra.mxu0 %v1187
        %v1359 = vpop.f32.mrf.mxu0
        %v1360 = vadd.f32 0.0, %v1359
        %v1361 = vpop.f32.mrf.mxu0
        %1362 = vdwg.mxu0
        %1363 = vmatprep.subr.mxu0 0.0
        %1364 = vmatpush1.msra.mxu0 0.0
        %1365 = vmatprep.subr.mxu0 0.0
        %1366 = vmatpush1.msra.mxu0 0.0
        %1367 = vmatprep.subr.mxu0 0.0
        %1368 = vmatpush1.msra.mxu0 0.0
        %1369 = vmatprep.subr.mxu0 0.0
        %1370 = vmatpush1.msra.mxu0 0.0
        %1371 = vmatprep.subr.mxu0 0.0
        %1372 = vmatpush1.msra.mxu0 0.0
        %1373 = vmatprep.subr.mxu0 0.0
        %1374 = vmatpush1.msra.mxu0 0.0
        %1375 = vmatprep.subr.mxu0 0.0
        %1376 = vmatpush1.msra.mxu0 %v374
        %1377 = vmatprep.subr.mxu0 0.0
        %1378 = vmatpush1.msra.mxu0 %v373
        %1379 = vmatprep.subr.mxu0 0.0
        %1380 = vmatpush1.msra.mxu0 %v372
        %1381 = vmatprep.subr.mxu0 0.0
        %1382 = vmatpush1.msra.mxu0 %v371
        %1383 = vmatprep.subr.mxu0 0.0
        %1384 = vmatpush1.msra.mxu0 %v370
        %1385 = vmatprep.subr.mxu0 0.0
        %1386 = vmatpush1.msra.mxu0 %v369
        %1387 = vmatprep.subr.mxu0 0.0
        %1388 = vmatpush1.msra.mxu0 %v368
        %1389 = vmatprep.subr.mxu0 0.0
        %1390 = vmatpush1.msra.mxu0 %v367
        %1391 = vmatprep.subr.mxu0 0.0
        %1392 = vmatpush1.msra.mxu0 %v366
        %1393 = vmatprep.subr.mxu0 0.0
        %1394 = vmatpush1.msra.mxu0 %v365
        %1395 = vmatprep.subr.mxu0 0.0
        %1396 = vmatpush2.msra.mxu0 0.0
        %1397 = vmatprep.subr.mxu0 0.0
        %1398 = vmatpush2.msra.mxu0 0.0
        %1399 = vmatprep.subr.mxu0 0.0
        %1400 = vmatpush2.msra.mxu0 0.0
        %1401 = vmatprep.subr.mxu0 0.0
        %1402 = vmatpush2.msra.mxu0 0.0
        %1403 = vmatprep.subr.mxu0 0.0
        %1404 = vmatpush2.msra.mxu0 0.0
        %1405 = vmatprep.subr.mxu0 0.0
        %1406 = vmatpush2.msra.mxu0 0.0
        %1407 = vmatprep.subr.mxu0 0.0
        %1408 = vmatpush2.msra.mxu0 0.0
        %1409 = vmatprep.subr.mxu0 0.0
        %1410 = vmatpush2.msra.mxu0 0.0
        %1411 = vmatprep.subr.mxu0 0.0
        %1412 = vmatpush2.msra.mxu0 0.0
        %1413 = vmatprep.subr.mxu0 0.0
        %1414 = vmatpush2.msra.mxu0 0.0
        %1415 = vmatprep.subr.mxu0 0.0
        %1416 = vmatpush2.msra.mxu0 0.0
        %1417 = vmatprep.subr.mxu0 0.0
        %1418 = vmatpush2.msra.mxu0 0.0
        %1419 = vmatprep.subr.mxu0 0.0
        %1420 = vmatpush2.msra.mxu0 0.0
        %1421 = vmatprep.subr.mxu0 0.0
        %1422 = vmatpush2.msra.mxu0 0.0
        %1423 = vmatprep.subr.mxu0 0.0
        %1424 = vmatpush2.msra.mxu0 0.0
        %1425 = vmatprep.subr.mxu0 0.0
        %1426 = vmatpush2.msra.mxu0 0.0
        %1427 = vmatprep.mubr.f32.mxu0 0.0
        %1428 = vmatmul.mubr.f32.gmra.mxu0 %v895
        %v1429 = vpop.f32.mrf.mxu0
        %v1430 = vadd.f32 %v1345, %v1429
        %v1431 = vpop.f32.mrf.mxu0
        %1432 = vmatprep.mubr.f32.mxu0 0.0
        %1433 = vmatmul.mubr.f32.gmra.mxu0 %v898
        %v1434 = vpop.f32.mrf.mxu0
        %v1435 = vadd.f32 %v1350, %v1434
        %v1436 = vpop.f32.mrf.mxu0
        %1437 = vmatprep.mubr.f32.mxu0 0.0
        %1438 = vmatmul.mubr.f32.gmra.mxu0 %v901
        %v1439 = vpop.f32.mrf.mxu0
        %v1440 = vadd.f32 %v1355, %v1439
        %v1441 = vpop.f32.mrf.mxu0
        %1442 = vmatprep.mubr.f32.mxu0 0.0
        %1443 = vmatmul.mubr.f32.gmra.mxu0 %v904
        %v1444 = vpop.f32.mrf.mxu0
        %v1445 = vadd.f32 %v1360, %v1444
        %v1446 = vpop.f32.mrf.mxu0
        %1447 = vdwg.mxu0
        %s1448 = scalar_lea.vmem [#allocation2], 12
        %v1449 = vld [vmem:[%s1448] ss:$4 sm:$0xff]
        %s1450 = scalar_lea.vmem [#allocation2], 44
        %v1451 = vld [vmem:[%s1450] ss:$4 sm:$0xff]
        %s1452 = scalar_lea.vmem [#allocation2], 76
        %v1453 = vld [vmem:[%s1452] ss:$4 sm:$0xff]
        %s1454 = scalar_lea.vmem [#allocation2], 108
        %v1455 = vld [vmem:[%s1454] ss:$4 sm:$0xff]
        %v1457 = vsel %vm346, %v1449, 0
        %v1460 = vsel %vm346, %v1451, 0
        %v1463 = vsel %vm346, %v1453, 0
        %v1466 = vsel %vm346, %v1455, 0
        %1468 = vmatprep.subr.mxu0 0.0
        %1469 = vmatpush1.msra.mxu0 0.0
        %1470 = vmatprep.subr.mxu0 0.0
        %1471 = vmatpush1.msra.mxu0 0.0
        %1472 = vmatprep.subr.mxu0 0.0
        %1473 = vmatpush1.msra.mxu0 0.0
        %1474 = vmatprep.subr.mxu0 0.0
        %1475 = vmatpush1.msra.mxu0 0.0
        %1476 = vmatprep.subr.mxu0 0.0
        %1477 = vmatpush1.msra.mxu0 0.0
        %1478 = vmatprep.subr.mxu0 0.0
        %1479 = vmatpush1.msra.mxu0 0.0
        %1480 = vmatprep.subr.mxu0 0.0
        %1481 = vmatpush1.msra.mxu0 %v396
        %1482 = vmatprep.subr.mxu0 0.0
        %1483 = vmatpush1.msra.mxu0 %v395
        %1484 = vmatprep.subr.mxu0 0.0
        %1485 = vmatpush1.msra.mxu0 %v394
        %1486 = vmatprep.subr.mxu0 0.0
        %1487 = vmatpush1.msra.mxu0 %v393
        %1488 = vmatprep.subr.mxu0 0.0
        %1489 = vmatpush1.msra.mxu0 %v392
        %1490 = vmatprep.subr.mxu0 0.0
        %1491 = vmatpush1.msra.mxu0 %v391
        %1492 = vmatprep.subr.mxu0 0.0
        %1493 = vmatpush1.msra.mxu0 %v390
        %1494 = vmatprep.subr.mxu0 0.0
        %1495 = vmatpush1.msra.mxu0 %v389
        %1496 = vmatprep.subr.mxu0 0.0
        %1497 = vmatpush1.msra.mxu0 %v388
        %1498 = vmatprep.subr.mxu0 0.0
        %1499 = vmatpush1.msra.mxu0 %v387
        %1500 = vmatprep.subr.mxu0 0.0
        %1501 = vmatpush2.msra.mxu0 0.0
        %1502 = vmatprep.subr.mxu0 0.0
        %1503 = vmatpush2.msra.mxu0 0.0
        %1504 = vmatprep.subr.mxu0 0.0
        %1505 = vmatpush2.msra.mxu0 0.0
        %1506 = vmatprep.subr.mxu0 0.0
        %1507 = vmatpush2.msra.mxu0 0.0
        %1508 = vmatprep.subr.mxu0 0.0
        %1509 = vmatpush2.msra.mxu0 0.0
        %1510 = vmatprep.subr.mxu0 0.0
        %1511 = vmatpush2.msra.mxu0 0.0
        %1512 = vmatprep.subr.mxu0 0.0
        %1513 = vmatpush2.msra.mxu0 0.0
        %1514 = vmatprep.subr.mxu0 0.0
        %1515 = vmatpush2.msra.mxu0 0.0
        %1516 = vmatprep.subr.mxu0 0.0
        %1517 = vmatpush2.msra.mxu0 0.0
        %1518 = vmatprep.subr.mxu0 0.0
        %1519 = vmatpush2.msra.mxu0 0.0
        %1520 = vmatprep.subr.mxu0 0.0
        %1521 = vmatpush2.msra.mxu0 0.0
        %1522 = vmatprep.subr.mxu0 0.0
        %1523 = vmatpush2.msra.mxu0 0.0
        %1524 = vmatprep.subr.mxu0 0.0
        %1525 = vmatpush2.msra.mxu0 0.0
        %1526 = vmatprep.subr.mxu0 0.0
        %1527 = vmatpush2.msra.mxu0 0.0
        %1528 = vmatprep.subr.mxu0 0.0
        %1529 = vmatpush2.msra.mxu0 0.0
        %1530 = vmatprep.subr.mxu0 0.0
        %1531 = vmatpush2.msra.mxu0 0.0
        %1532 = vmatprep.mubr.f32.mxu0 0.0
        %1533 = vmatmul.mubr.f32.gmra.mxu0 %v1457
        %v1534 = vpop.f32.mrf.mxu0
        %v1535 = vadd.f32 0.0, %v1534
        %v1536 = vpop.f32.mrf.mxu0
        %1537 = vmatprep.mubr.f32.mxu0 0.0
        %1538 = vmatmul.mubr.f32.gmra.mxu0 %v1460
        %v1539 = vpop.f32.mrf.mxu0
        %v1540 = vadd.f32 0.0, %v1539
        %v1541 = vpop.f32.mrf.mxu0
        %1542 = vmatprep.mubr.f32.mxu0 0.0
        %1543 = vmatmul.mubr.f32.gmra.mxu0 %v1463
        %v1544 = vpop.f32.mrf.mxu0
        %v1545 = vadd.f32 0.0, %v1544
        %v1546 = vpop.f32.mrf.mxu0
        %1547 = vmatprep.mubr.f32.mxu0 0.0
        %1548 = vmatmul.mubr.f32.gmra.mxu0 %v1466
        %v1549 = vpop.f32.mrf.mxu0
        %v1550 = vadd.f32 0.0, %v1549
        %v1551 = vpop.f32.mrf.mxu0
        %1552 = vdwg.mxu0
        %v1553 = vadd.f32 %v1430, %v1535
        %v1554 = vadd.f32 %v1435, %v1540
        %v1555 = vadd.f32 %v1440, %v1545
        %v1556 = vadd.f32 %v1445, %v1550
        %v1557 = vmax.f32 %v1274, %v1553
        %v1558 = vmax.f32 %v1275, %v1554
        %v1559 = vmax.f32 %v1276, %v1555
        %v1560 = vmax.f32 %v1277, %v1556
        %v1561 = vmax.f32 %v995, %v1557
        %v1562 = vmax.f32 %v996, %v1558
        %v1563 = vmax.f32 %v997, %v1559
        %v1564 = vmax.f32 %v998, %v1560
        %v1565 = vld [vmem:[%s2] sm:$0x1]
        %v1567 = vlaneseq
        %v1568 = vshrl.u32 %v1567, 7
        %v1569 = vsub.s32 0, %v1568
        %v1570 = vrot.slane %v1565, %v1569
        %v1572 = vadd.f32 %v1561, %v1570
        %v1573 = vadd.f32 %v1562, %v1570
        %v1574 = vadd.f32 %v1563, %v1570
        %v1575 = vadd.f32 %v1564, %v1570
        %v1576 = vmax.f32 %v1572, 0.0
        %v1577 = vmax.f32 %v1573, 0.0
        %v1578 = vmax.f32 %v1574, 0.0
        %v1579 = vmax.f32 %v1575, 0.0
        %vm1580 = vcmask 261120
        %1581 = vst.msk [vmem:[#allocation3] sm:$0xff] %vm1580, 0.0
        %1582 = vst.msk [vmem:[#allocation3 + $0x28] sm:$0xff] %vm1580, 0.0
        %1583 = vst.msk [vmem:[#allocation3 + $0x8] sm:$0xff] %vm1580, %v1576
        %1584 = vst.msk [vmem:[#allocation3 + $0x10] sm:$0xff] %vm1580, %v1577
        %1585 = vst.msk [vmem:[#allocation3 + $0x18] sm:$0xff] %vm1580, %v1578
        %1586 = vst.msk [vmem:[#allocation3 + $0x20] sm:$0xff] %vm1580, %v1579
        %v1587 = vld [vmem:[%s3] sm:$0xff]
        %v1588 = vld [vmem:[%s3 + $0x8] sm:$0xff]
        %v1589 = vld [vmem:[%s3 + $0x10] sm:$0xff]
        %v1590 = vld [vmem:[%s3 + $0x18] sm:$0xff]
        %s1591 = scalar_lea.vmem %s3, 32
        %v1592 = vld [vmem:[%s1591] sm:$0xff]
        %v1593 = vld [vmem:[%s1591 + $0x8] sm:$0xff]
        %v1594 = vld [vmem:[%s1591 + $0x10] sm:$0xff]
        %v1595 = vld [vmem:[%s1591 + $0x18] sm:$0xff]
        %s1596 = scalar_lea.vmem %s3, 64
        %v1597 = vld [vmem:[%s1596] sm:$0xff]
        %v1598 = vld [vmem:[%s1596 + $0x8] sm:$0xff]
        %v1599 = vld [vmem:[%s1596 + $0x10] sm:$0xff]
        %v1600 = vld [vmem:[%s1596 + $0x18] sm:$0xff]
        %s1601 = scalar_lea.vmem [#allocation3], 7
        %v1602 = vld [vmem:[%s1601] ss:$4 sm:$0xff]
        %s1603 = scalar_lea.vmem [#allocation3], 8
        %v1604 = vld [vmem:[%s1603] ss:$4 sm:$0xff]
        %v1606 = vsel %vm1580, %v1604, 0
        %1608 = vmatprep.subr.mxu0 0.0
        %1609 = vmatpush1.msra.mxu0 0.0
        %1610 = vmatprep.subr.mxu0 0.0
        %1611 = vmatpush1.msra.mxu0 0.0
        %1612 = vmatprep.subr.mxu0 0.0
        %1613 = vmatpush1.msra.mxu0 0.0
        %1614 = vmatprep.subr.mxu0 0.0
        %1615 = vmatpush1.msra.mxu0 0.0
        %1616 = vmatprep.subr.mxu0 0.0
        %1617 = vmatpush1.msra.mxu0 0.0
        %1618 = vmatprep.subr.mxu0 0.0
        %1619 = vmatpush1.msra.mxu0 0.0
        %1620 = vmatprep.subr.mxu0 0.0
        %1621 = vmatpush1.msra.mxu0 0.0
        %1622 = vmatprep.subr.mxu0 0.0
        %1623 = vmatpush1.msra.mxu0 0.0
        %1624 = vmatprep.subr.mxu0 0.0
        %1625 = vmatpush1.msra.mxu0 0.0
        %1626 = vmatprep.subr.mxu0 0.0
        %1627 = vmatpush1.msra.mxu0 0.0
        %1628 = vmatprep.subr.mxu0 0.0
        %1629 = vmatpush1.msra.mxu0 0.0
        %1630 = vmatprep.subr.mxu0 0.0
        %1631 = vmatpush1.msra.mxu0 0.0
        %1632 = vmatprep.subr.mxu0 0.0
        %1633 = vmatpush1.msra.mxu0 %v1595
        %1634 = vmatprep.subr.mxu0 0.0
        %1635 = vmatpush1.msra.mxu0 %v1594
        %1636 = vmatprep.subr.mxu0 0.0
        %1637 = vmatpush1.msra.mxu0 %v1593
        %1638 = vmatprep.subr.mxu0 0.0
        %1639 = vmatpush1.msra.mxu0 %v1592
        %1640 = vmatprep.subr.mxu0 0.0
        %1641 = vmatpush2.msra.mxu0 0.0
        %1642 = vmatprep.subr.mxu0 0.0
        %1643 = vmatpush2.msra.mxu0 0.0
        %1644 = vmatprep.subr.mxu0 0.0
        %1645 = vmatpush2.msra.mxu0 0.0
        %1646 = vmatprep.subr.mxu0 0.0
        %1647 = vmatpush2.msra.mxu0 0.0
        %1648 = vmatprep.subr.mxu0 0.0
        %1649 = vmatpush2.msra.mxu0 0.0
        %1650 = vmatprep.subr.mxu0 0.0
        %1651 = vmatpush2.msra.mxu0 0.0
        %1652 = vmatprep.subr.mxu0 0.0
        %1653 = vmatpush2.msra.mxu0 0.0
        %1654 = vmatprep.subr.mxu0 0.0
        %1655 = vmatpush2.msra.mxu0 0.0
        %1656 = vmatprep.subr.mxu0 0.0
        %1657 = vmatpush2.msra.mxu0 0.0
        %1658 = vmatprep.subr.mxu0 0.0
        %1659 = vmatpush2.msra.mxu0 0.0
        %1660 = vmatprep.subr.mxu0 0.0
        %1661 = vmatpush2.msra.mxu0 0.0
        %1662 = vmatprep.subr.mxu0 0.0
        %1663 = vmatpush2.msra.mxu0 0.0
        %1664 = vmatprep.subr.mxu0 0.0
        %1665 = vmatpush2.msra.mxu0 0.0
        %1666 = vmatprep.subr.mxu0 0.0
        %1667 = vmatpush2.msra.mxu0 0.0
        %1668 = vmatprep.subr.mxu0 0.0
        %1669 = vmatpush2.msra.mxu0 0.0
        %1670 = vmatprep.subr.mxu0 0.0
        %1671 = vmatpush2.msra.mxu0 0.0
        %1672 = vmatprep.mubr.f32.mxu0 0.0
        %1673 = vmatmul.mubr.f32.gmra.mxu0 %v1606
        %v1674 = vpop.f32.mrf.mxu0
        %v1675 = vadd.f32 0.0, %v1674
        %v1676 = vpop.f32.mrf.mxu0
        %1677 = vdwg.mxu0
        %v1679 = vsel %vm1580, %v1602, 0
        %1681 = vmatprep.subr.mxu0 0.0
        %1682 = vmatpush1.msra.mxu0 0.0
        %1683 = vmatprep.subr.mxu0 0.0
        %1684 = vmatpush1.msra.mxu0 0.0
        %1685 = vmatprep.subr.mxu0 0.0
        %1686 = vmatpush1.msra.mxu0 0.0
        %1687 = vmatprep.subr.mxu0 0.0
        %1688 = vmatpush1.msra.mxu0 0.0
        %1689 = vmatprep.subr.mxu0 0.0
        %1690 = vmatpush1.msra.mxu0 0.0
        %1691 = vmatprep.subr.mxu0 0.0
        %1692 = vmatpush1.msra.mxu0 0.0
        %1693 = vmatprep.subr.mxu0 0.0
        %1694 = vmatpush1.msra.mxu0 0.0
        %1695 = vmatprep.subr.mxu0 0.0
        %1696 = vmatpush1.msra.mxu0 0.0
        %1697 = vmatprep.subr.mxu0 0.0
        %1698 = vmatpush1.msra.mxu0 0.0
        %1699 = vmatprep.subr.mxu0 0.0
        %1700 = vmatpush1.msra.mxu0 0.0
        %1701 = vmatprep.subr.mxu0 0.0
        %1702 = vmatpush1.msra.mxu0 0.0
        %1703 = vmatprep.subr.mxu0 0.0
        %1704 = vmatpush1.msra.mxu0 0.0
        %1705 = vmatprep.subr.mxu0 0.0
        %1706 = vmatpush1.msra.mxu0 %v1590
        %1707 = vmatprep.subr.mxu0 0.0
        %1708 = vmatpush1.msra.mxu0 %v1589
        %1709 = vmatprep.subr.mxu0 0.0
        %1710 = vmatpush1.msra.mxu0 %v1588
        %1711 = vmatprep.subr.mxu0 0.0
        %1712 = vmatpush1.msra.mxu0 %v1587
        %1713 = vmatprep.subr.mxu0 0.0
        %1714 = vmatpush2.msra.mxu0 0.0
        %1715 = vmatprep.subr.mxu0 0.0
        %1716 = vmatpush2.msra.mxu0 0.0
        %1717 = vmatprep.subr.mxu0 0.0
        %1718 = vmatpush2.msra.mxu0 0.0
        %1719 = vmatprep.subr.mxu0 0.0
        %1720 = vmatpush2.msra.mxu0 0.0
        %1721 = vmatprep.subr.mxu0 0.0
        %1722 = vmatpush2.msra.mxu0 0.0
        %1723 = vmatprep.subr.mxu0 0.0
        %1724 = vmatpush2.msra.mxu0 0.0
        %1725 = vmatprep.subr.mxu0 0.0
        %1726 = vmatpush2.msra.mxu0 0.0
        %1727 = vmatprep.subr.mxu0 0.0
        %1728 = vmatpush2.msra.mxu0 0.0
        %1729 = vmatprep.subr.mxu0 0.0
        %1730 = vmatpush2.msra.mxu0 0.0
        %1731 = vmatprep.subr.mxu0 0.0
        %1732 = vmatpush2.msra.mxu0 0.0
        %1733 = vmatprep.subr.mxu0 0.0
        %1734 = vmatpush2.msra.mxu0 0.0
        %1735 = vmatprep.subr.mxu0 0.0
        %1736 = vmatpush2.msra.mxu0 0.0
        %1737 = vmatprep.subr.mxu0 0.0
        %1738 = vmatpush2.msra.mxu0 0.0
        %1739 = vmatprep.subr.mxu0 0.0
        %1740 = vmatpush2.msra.mxu0 0.0
        %1741 = vmatprep.subr.mxu0 0.0
        %1742 = vmatpush2.msra.mxu0 0.0
        %1743 = vmatprep.subr.mxu0 0.0
        %1744 = vmatpush2.msra.mxu0 0.0
        %1745 = vmatprep.mubr.f32.mxu0 0.0
        %1746 = vmatmul.mubr.f32.gmra.mxu0 %v1679
        %v1747 = vpop.f32.mrf.mxu0
        %v1748 = vadd.f32 %v1675, %v1747
        %v1749 = vpop.f32.mrf.mxu0
        %1750 = vdwg.mxu0
        %s1751 = scalar_lea.vmem [#allocation3], 9
        %v1752 = vld [vmem:[%s1751] ss:$4 sm:$0xff]
        %v1754 = vsel %vm1580, %v1752, 0
        %1756 = vmatprep.subr.mxu0 0.0
        %1757 = vmatpush1.msra.mxu0 0.0
        %1758 = vmatprep.subr.mxu0 0.0
        %1759 = vmatpush1.msra.mxu0 0.0
        %1760 = vmatprep.subr.mxu0 0.0
        %1761 = vmatpush1.msra.mxu0 0.0
        %1762 = vmatprep.subr.mxu0 0.0
        %1763 = vmatpush1.msra.mxu0 0.0
        %1764 = vmatprep.subr.mxu0 0.0
        %1765 = vmatpush1.msra.mxu0 0.0
        %1766 = vmatprep.subr.mxu0 0.0
        %1767 = vmatpush1.msra.mxu0 0.0
        %1768 = vmatprep.subr.mxu0 0.0
        %1769 = vmatpush1.msra.mxu0 0.0
        %1770 = vmatprep.subr.mxu0 0.0
        %1771 = vmatpush1.msra.mxu0 0.0
        %1772 = vmatprep.subr.mxu0 0.0
        %1773 = vmatpush1.msra.mxu0 0.0
        %1774 = vmatprep.subr.mxu0 0.0
        %1775 = vmatpush1.msra.mxu0 0.0
        %1776 = vmatprep.subr.mxu0 0.0
        %1777 = vmatpush1.msra.mxu0 0.0
        %1778 = vmatprep.subr.mxu0 0.0
        %1779 = vmatpush1.msra.mxu0 0.0
        %1780 = vmatprep.subr.mxu0 0.0
        %1781 = vmatpush1.msra.mxu0 %v1600
        %1782 = vmatprep.subr.mxu0 0.0
        %1783 = vmatpush1.msra.mxu0 %v1599
        %1784 = vmatprep.subr.mxu0 0.0
        %1785 = vmatpush1.msra.mxu0 %v1598
        %1786 = vmatprep.subr.mxu0 0.0
        %1787 = vmatpush1.msra.mxu0 %v1597
        %1788 = vmatprep.subr.mxu0 0.0
        %1789 = vmatpush2.msra.mxu0 0.0
        %1790 = vmatprep.subr.mxu0 0.0
        %1791 = vmatpush2.msra.mxu0 0.0
        %1792 = vmatprep.subr.mxu0 0.0
        %1793 = vmatpush2.msra.mxu0 0.0
        %1794 = vmatprep.subr.mxu0 0.0
        %1795 = vmatpush2.msra.mxu0 0.0
        %1796 = vmatprep.subr.mxu0 0.0
        %1797 = vmatpush2.msra.mxu0 0.0
        %1798 = vmatprep.subr.mxu0 0.0
        %1799 = vmatpush2.msra.mxu0 0.0
        %1800 = vmatprep.subr.mxu0 0.0
        %1801 = vmatpush2.msra.mxu0 0.0
        %1802 = vmatprep.subr.mxu0 0.0
        %1803 = vmatpush2.msra.mxu0 0.0
        %1804 = vmatprep.subr.mxu0 0.0
        %1805 = vmatpush2.msra.mxu0 0.0
        %1806 = vmatprep.subr.mxu0 0.0
        %1807 = vmatpush2.msra.mxu0 0.0
        %1808 = vmatprep.subr.mxu0 0.0
        %1809 = vmatpush2.msra.mxu0 0.0
        %1810 = vmatprep.subr.mxu0 0.0
        %1811 = vmatpush2.msra.mxu0 0.0
        %1812 = vmatprep.subr.mxu0 0.0
        %1813 = vmatpush2.msra.mxu0 0.0
        %1814 = vmatprep.subr.mxu0 0.0
        %1815 = vmatpush2.msra.mxu0 0.0
        %1816 = vmatprep.subr.mxu0 0.0
        %1817 = vmatpush2.msra.mxu0 0.0
        %1818 = vmatprep.subr.mxu0 0.0
        %1819 = vmatpush2.msra.mxu0 0.0
        %1820 = vmatprep.mubr.f32.mxu0 0.0
        %1821 = vmatmul.mubr.f32.gmra.mxu0 %v1754
        %v1822 = vpop.f32.mrf.mxu0
        %v1823 = vadd.f32 0.0, %v1822
        %v1824 = vpop.f32.mrf.mxu0
        %1825 = vdwg.mxu0
        %v1826 = vadd.f32 %v1748, %v1823
        %1827 = vmatprep.subr.mxu0 0.0
        %1828 = vmatpush1.msra.mxu0 0.0
        %1829 = vmatprep.subr.mxu0 0.0
        %1830 = vmatpush1.msra.mxu0 0.0
        %1831 = vmatprep.subr.mxu0 0.0
        %1832 = vmatpush1.msra.mxu0 0.0
        %1833 = vmatprep.subr.mxu0 0.0
        %1834 = vmatpush1.msra.mxu0 0.0
        %1835 = vmatprep.subr.mxu0 0.0
        %1836 = vmatpush1.msra.mxu0 0.0
        %1837 = vmatprep.subr.mxu0 0.0
        %1838 = vmatpush1.msra.mxu0 0.0
        %1839 = vmatprep.subr.mxu0 0.0
        %1840 = vmatpush1.msra.mxu0 0.0
        %1841 = vmatprep.subr.mxu0 0.0
        %1842 = vmatpush1.msra.mxu0 0.0
        %1843 = vmatprep.subr.mxu0 0.0
        %1844 = vmatpush1.msra.mxu0 0.0
        %1845 = vmatprep.subr.mxu0 0.0
        %1846 = vmatpush1.msra.mxu0 0.0
        %1847 = vmatprep.subr.mxu0 0.0
        %1848 = vmatpush1.msra.mxu0 0.0
        %1849 = vmatprep.subr.mxu0 0.0
        %1850 = vmatpush1.msra.mxu0 0.0
        %1851 = vmatprep.subr.mxu0 0.0
        %1852 = vmatpush1.msra.mxu0 %v1595
        %1853 = vmatprep.subr.mxu0 0.0
        %1854 = vmatpush1.msra.mxu0 %v1594
        %1855 = vmatprep.subr.mxu0 0.0
        %1856 = vmatpush1.msra.mxu0 %v1593
        %1857 = vmatprep.subr.mxu0 0.0
        %1858 = vmatpush1.msra.mxu0 %v1592
        %1859 = vmatprep.subr.mxu0 0.0
        %1860 = vmatpush2.msra.mxu0 0.0
        %1861 = vmatprep.subr.mxu0 0.0
        %1862 = vmatpush2.msra.mxu0 0.0
        %1863 = vmatprep.subr.mxu0 0.0
        %1864 = vmatpush2.msra.mxu0 0.0
        %1865 = vmatprep.subr.mxu0 0.0
        %1866 = vmatpush2.msra.mxu0 0.0
        %1867 = vmatprep.subr.mxu0 0.0
        %1868 = vmatpush2.msra.mxu0 0.0
        %1869 = vmatprep.subr.mxu0 0.0
        %1870 = vmatpush2.msra.mxu0 0.0
        %1871 = vmatprep.subr.mxu0 0.0
        %1872 = vmatpush2.msra.mxu0 0.0
        %1873 = vmatprep.subr.mxu0 0.0
        %1874 = vmatpush2.msra.mxu0 0.0
        %1875 = vmatprep.subr.mxu0 0.0
        %1876 = vmatpush2.msra.mxu0 0.0
        %1877 = vmatprep.subr.mxu0 0.0
        %1878 = vmatpush2.msra.mxu0 0.0
        %1879 = vmatprep.subr.mxu0 0.0
        %1880 = vmatpush2.msra.mxu0 0.0
        %1881 = vmatprep.subr.mxu0 0.0
        %1882 = vmatpush2.msra.mxu0 0.0
        %1883 = vmatprep.subr.mxu0 0.0
        %1884 = vmatpush2.msra.mxu0 0.0
        %1885 = vmatprep.subr.mxu0 0.0
        %1886 = vmatpush2.msra.mxu0 0.0
        %1887 = vmatprep.subr.mxu0 0.0
        %1888 = vmatpush2.msra.mxu0 0.0
        %1889 = vmatprep.subr.mxu0 0.0
        %1890 = vmatpush2.msra.mxu0 0.0
        %1891 = vmatprep.mubr.f32.mxu0 0.0
        %1892 = vmatmul.mubr.f32.gmra.mxu0 %v1754
        %v1893 = vpop.f32.mrf.mxu0
        %v1894 = vadd.f32 0.0, %v1893
        %v1895 = vpop.f32.mrf.mxu0
        %1896 = vdwg.mxu0
        %1897 = vmatprep.subr.mxu0 0.0
        %1898 = vmatpush1.msra.mxu0 0.0
        %1899 = vmatprep.subr.mxu0 0.0
        %1900 = vmatpush1.msra.mxu0 0.0
        %1901 = vmatprep.subr.mxu0 0.0
        %1902 = vmatpush1.msra.mxu0 0.0
        %1903 = vmatprep.subr.mxu0 0.0
        %1904 = vmatpush1.msra.mxu0 0.0
        %1905 = vmatprep.subr.mxu0 0.0
        %1906 = vmatpush1.msra.mxu0 0.0
        %1907 = vmatprep.subr.mxu0 0.0
        %1908 = vmatpush1.msra.mxu0 0.0
        %1909 = vmatprep.subr.mxu0 0.0
        %1910 = vmatpush1.msra.mxu0 0.0
        %1911 = vmatprep.subr.mxu0 0.0
        %1912 = vmatpush1.msra.mxu0 0.0
        %1913 = vmatprep.subr.mxu0 0.0
        %1914 = vmatpush1.msra.mxu0 0.0
        %1915 = vmatprep.subr.mxu0 0.0
        %1916 = vmatpush1.msra.mxu0 0.0
        %1917 = vmatprep.subr.mxu0 0.0
        %1918 = vmatpush1.msra.mxu0 0.0
        %1919 = vmatprep.subr.mxu0 0.0
        %1920 = vmatpush1.msra.mxu0 0.0
        %1921 = vmatprep.subr.mxu0 0.0
        %1922 = vmatpush1.msra.mxu0 %v1590
        %1923 = vmatprep.subr.mxu0 0.0
        %1924 = vmatpush1.msra.mxu0 %v1589
        %1925 = vmatprep.subr.mxu0 0.0
        %1926 = vmatpush1.msra.mxu0 %v1588
        %1927 = vmatprep.subr.mxu0 0.0
        %1928 = vmatpush1.msra.mxu0 %v1587
        %1929 = vmatprep.subr.mxu0 0.0
        %1930 = vmatpush2.msra.mxu0 0.0
        %1931 = vmatprep.subr.mxu0 0.0
        %1932 = vmatpush2.msra.mxu0 0.0
        %1933 = vmatprep.subr.mxu0 0.0
        %1934 = vmatpush2.msra.mxu0 0.0
        %1935 = vmatprep.subr.mxu0 0.0
        %1936 = vmatpush2.msra.mxu0 0.0
        %1937 = vmatprep.subr.mxu0 0.0
        %1938 = vmatpush2.msra.mxu0 0.0
        %1939 = vmatprep.subr.mxu0 0.0
        %1940 = vmatpush2.msra.mxu0 0.0
        %1941 = vmatprep.subr.mxu0 0.0
        %1942 = vmatpush2.msra.mxu0 0.0
        %1943 = vmatprep.subr.mxu0 0.0
        %1944 = vmatpush2.msra.mxu0 0.0
        %1945 = vmatprep.subr.mxu0 0.0
        %1946 = vmatpush2.msra.mxu0 0.0
        %1947 = vmatprep.subr.mxu0 0.0
        %1948 = vmatpush2.msra.mxu0 0.0
        %1949 = vmatprep.subr.mxu0 0.0
        %1950 = vmatpush2.msra.mxu0 0.0
        %1951 = vmatprep.subr.mxu0 0.0
        %1952 = vmatpush2.msra.mxu0 0.0
        %1953 = vmatprep.subr.mxu0 0.0
        %1954 = vmatpush2.msra.mxu0 0.0
        %1955 = vmatprep.subr.mxu0 0.0
        %1956 = vmatpush2.msra.mxu0 0.0
        %1957 = vmatprep.subr.mxu0 0.0
        %1958 = vmatpush2.msra.mxu0 0.0
        %1959 = vmatprep.subr.mxu0 0.0
        %1960 = vmatpush2.msra.mxu0 0.0
        %1961 = vmatprep.mubr.f32.mxu0 0.0
        %1962 = vmatmul.mubr.f32.gmra.mxu0 %v1606
        %v1963 = vpop.f32.mrf.mxu0
        %v1964 = vadd.f32 %v1894, %v1963
        %v1965 = vpop.f32.mrf.mxu0
        %1966 = vdwg.mxu0
        %s1967 = scalar_lea.vmem [#allocation3], 10
        %v1968 = vld [vmem:[%s1967] ss:$4 sm:$0xff]
        %v1970 = vsel %vm1580, %v1968, 0
        %1972 = vmatprep.subr.mxu0 0.0
        %1973 = vmatpush1.msra.mxu0 0.0
        %1974 = vmatprep.subr.mxu0 0.0
        %1975 = vmatpush1.msra.mxu0 0.0
        %1976 = vmatprep.subr.mxu0 0.0
        %1977 = vmatpush1.msra.mxu0 0.0
        %1978 = vmatprep.subr.mxu0 0.0
        %1979 = vmatpush1.msra.mxu0 0.0
        %1980 = vmatprep.subr.mxu0 0.0
        %1981 = vmatpush1.msra.mxu0 0.0
        %1982 = vmatprep.subr.mxu0 0.0
        %1983 = vmatpush1.msra.mxu0 0.0
        %1984 = vmatprep.subr.mxu0 0.0
        %1985 = vmatpush1.msra.mxu0 0.0
        %1986 = vmatprep.subr.mxu0 0.0
        %1987 = vmatpush1.msra.mxu0 0.0
        %1988 = vmatprep.subr.mxu0 0.0
        %1989 = vmatpush1.msra.mxu0 0.0
        %1990 = vmatprep.subr.mxu0 0.0
        %1991 = vmatpush1.msra.mxu0 0.0
        %1992 = vmatprep.subr.mxu0 0.0
        %1993 = vmatpush1.msra.mxu0 0.0
        %1994 = vmatprep.subr.mxu0 0.0
        %1995 = vmatpush1.msra.mxu0 0.0
        %1996 = vmatprep.subr.mxu0 0.0
        %1997 = vmatpush1.msra.mxu0 %v1600
        %1998 = vmatprep.subr.mxu0 0.0
        %1999 = vmatpush1.msra.mxu0 %v1599
        %2000 = vmatprep.subr.mxu0 0.0
        %2001 = vmatpush1.msra.mxu0 %v1598
        %2002 = vmatprep.subr.mxu0 0.0
        %2003 = vmatpush1.msra.mxu0 %v1597
        %2004 = vmatprep.subr.mxu0 0.0
        %2005 = vmatpush2.msra.mxu0 0.0
        %2006 = vmatprep.subr.mxu0 0.0
        %2007 = vmatpush2.msra.mxu0 0.0
        %2008 = vmatprep.subr.mxu0 0.0
        %2009 = vmatpush2.msra.mxu0 0.0
        %2010 = vmatprep.subr.mxu0 0.0
        %2011 = vmatpush2.msra.mxu0 0.0
        %2012 = vmatprep.subr.mxu0 0.0
        %2013 = vmatpush2.msra.mxu0 0.0
        %2014 = vmatprep.subr.mxu0 0.0
        %2015 = vmatpush2.msra.mxu0 0.0
        %2016 = vmatprep.subr.mxu0 0.0
        %2017 = vmatpush2.msra.mxu0 0.0
        %2018 = vmatprep.subr.mxu0 0.0
        %2019 = vmatpush2.msra.mxu0 0.0
        %2020 = vmatprep.subr.mxu0 0.0
        %2021 = vmatpush2.msra.mxu0 0.0
        %2022 = vmatprep.subr.mxu0 0.0
        %2023 = vmatpush2.msra.mxu0 0.0
        %2024 = vmatprep.subr.mxu0 0.0
        %2025 = vmatpush2.msra.mxu0 0.0
        %2026 = vmatprep.subr.mxu0 0.0
        %2027 = vmatpush2.msra.mxu0 0.0
        %2028 = vmatprep.subr.mxu0 0.0
        %2029 = vmatpush2.msra.mxu0 0.0
        %2030 = vmatprep.subr.mxu0 0.0
        %2031 = vmatpush2.msra.mxu0 0.0
        %2032 = vmatprep.subr.mxu0 0.0
        %2033 = vmatpush2.msra.mxu0 0.0
        %2034 = vmatprep.subr.mxu0 0.0
        %2035 = vmatpush2.msra.mxu0 0.0
        %2036 = vmatprep.mubr.f32.mxu0 0.0
        %2037 = vmatmul.mubr.f32.gmra.mxu0 %v1970
        %v2038 = vpop.f32.mrf.mxu0
        %v2039 = vadd.f32 0.0, %v2038
        %v2040 = vpop.f32.mrf.mxu0
        %2041 = vdwg.mxu0
        %v2042 = vadd.f32 %v1964, %v2039
        %v2043 = vmax.f32 %v1826, %v2042
        %2044 = vmatprep.subr.mxu0 0.0
        %2045 = vmatpush1.msra.mxu0 0.0
        %2046 = vmatprep.subr.mxu0 0.0
        %2047 = vmatpush1.msra.mxu0 0.0
        %2048 = vmatprep.subr.mxu0 0.0
        %2049 = vmatpush1.msra.mxu0 0.0
        %2050 = vmatprep.subr.mxu0 0.0
        %2051 = vmatpush1.msra.mxu0 0.0
        %2052 = vmatprep.subr.mxu0 0.0
        %2053 = vmatpush1.msra.mxu0 0.0
        %2054 = vmatprep.subr.mxu0 0.0
        %2055 = vmatpush1.msra.mxu0 0.0
        %2056 = vmatprep.subr.mxu0 0.0
        %2057 = vmatpush1.msra.mxu0 0.0
        %2058 = vmatprep.subr.mxu0 0.0
        %2059 = vmatpush1.msra.mxu0 0.0
        %2060 = vmatprep.subr.mxu0 0.0
        %2061 = vmatpush1.msra.mxu0 0.0
        %2062 = vmatprep.subr.mxu0 0.0
        %2063 = vmatpush1.msra.mxu0 0.0
        %2064 = vmatprep.subr.mxu0 0.0
        %2065 = vmatpush1.msra.mxu0 0.0
        %2066 = vmatprep.subr.mxu0 0.0
        %2067 = vmatpush1.msra.mxu0 0.0
        %2068 = vmatprep.subr.mxu0 0.0
        %2069 = vmatpush1.msra.mxu0 %v1595
        %2070 = vmatprep.subr.mxu0 0.0
        %2071 = vmatpush1.msra.mxu0 %v1594
        %2072 = vmatprep.subr.mxu0 0.0
        %2073 = vmatpush1.msra.mxu0 %v1593
        %2074 = vmatprep.subr.mxu0 0.0
        %2075 = vmatpush1.msra.mxu0 %v1592
        %2076 = vmatprep.subr.mxu0 0.0
        %2077 = vmatpush2.msra.mxu0 0.0
        %2078 = vmatprep.subr.mxu0 0.0
        %2079 = vmatpush2.msra.mxu0 0.0
        %2080 = vmatprep.subr.mxu0 0.0
        %2081 = vmatpush2.msra.mxu0 0.0
        %2082 = vmatprep.subr.mxu0 0.0
        %2083 = vmatpush2.msra.mxu0 0.0
        %2084 = vmatprep.subr.mxu0 0.0
        %2085 = vmatpush2.msra.mxu0 0.0
        %2086 = vmatprep.subr.mxu0 0.0
        %2087 = vmatpush2.msra.mxu0 0.0
        %2088 = vmatprep.subr.mxu0 0.0
        %2089 = vmatpush2.msra.mxu0 0.0
        %2090 = vmatprep.subr.mxu0 0.0
        %2091 = vmatpush2.msra.mxu0 0.0
        %2092 = vmatprep.subr.mxu0 0.0
        %2093 = vmatpush2.msra.mxu0 0.0
        %2094 = vmatprep.subr.mxu0 0.0
        %2095 = vmatpush2.msra.mxu0 0.0
        %2096 = vmatprep.subr.mxu0 0.0
        %2097 = vmatpush2.msra.mxu0 0.0
        %2098 = vmatprep.subr.mxu0 0.0
        %2099 = vmatpush2.msra.mxu0 0.0
        %2100 = vmatprep.subr.mxu0 0.0
        %2101 = vmatpush2.msra.mxu0 0.0
        %2102 = vmatprep.subr.mxu0 0.0
        %2103 = vmatpush2.msra.mxu0 0.0
        %2104 = vmatprep.subr.mxu0 0.0
        %2105 = vmatpush2.msra.mxu0 0.0
        %2106 = vmatprep.subr.mxu0 0.0
        %2107 = vmatpush2.msra.mxu0 0.0
        %2108 = vmatprep.mubr.f32.mxu0 0.0
        %2109 = vmatmul.mubr.f32.gmra.mxu0 %v1970
        %v2110 = vpop.f32.mrf.mxu0
        %v2111 = vadd.f32 0.0, %v2110
        %v2112 = vpop.f32.mrf.mxu0
        %2113 = vdwg.mxu0
        %2114 = vmatprep.subr.mxu0 0.0
        %2115 = vmatpush1.msra.mxu0 0.0
        %2116 = vmatprep.subr.mxu0 0.0
        %2117 = vmatpush1.msra.mxu0 0.0
        %2118 = vmatprep.subr.mxu0 0.0
        %2119 = vmatpush1.msra.mxu0 0.0
        %2120 = vmatprep.subr.mxu0 0.0
        %2121 = vmatpush1.msra.mxu0 0.0
        %2122 = vmatprep.subr.mxu0 0.0
        %2123 = vmatpush1.msra.mxu0 0.0
        %2124 = vmatprep.subr.mxu0 0.0
        %2125 = vmatpush1.msra.mxu0 0.0
        %2126 = vmatprep.subr.mxu0 0.0
        %2127 = vmatpush1.msra.mxu0 0.0
        %2128 = vmatprep.subr.mxu0 0.0
        %2129 = vmatpush1.msra.mxu0 0.0
        %2130 = vmatprep.subr.mxu0 0.0
        %2131 = vmatpush1.msra.mxu0 0.0
        %2132 = vmatprep.subr.mxu0 0.0
        %2133 = vmatpush1.msra.mxu0 0.0
        %2134 = vmatprep.subr.mxu0 0.0
        %2135 = vmatpush1.msra.mxu0 0.0
        %2136 = vmatprep.subr.mxu0 0.0
        %2137 = vmatpush1.msra.mxu0 0.0
        %2138 = vmatprep.subr.mxu0 0.0
        %2139 = vmatpush1.msra.mxu0 %v1590
        %2140 = vmatprep.subr.mxu0 0.0
        %2141 = vmatpush1.msra.mxu0 %v1589
        %2142 = vmatprep.subr.mxu0 0.0
        %2143 = vmatpush1.msra.mxu0 %v1588
        %2144 = vmatprep.subr.mxu0 0.0
        %2145 = vmatpush1.msra.mxu0 %v1587
        %2146 = vmatprep.subr.mxu0 0.0
        %2147 = vmatpush2.msra.mxu0 0.0
        %2148 = vmatprep.subr.mxu0 0.0
        %2149 = vmatpush2.msra.mxu0 0.0
        %2150 = vmatprep.subr.mxu0 0.0
        %2151 = vmatpush2.msra.mxu0 0.0
        %2152 = vmatprep.subr.mxu0 0.0
        %2153 = vmatpush2.msra.mxu0 0.0
        %2154 = vmatprep.subr.mxu0 0.0
        %2155 = vmatpush2.msra.mxu0 0.0
        %2156 = vmatprep.subr.mxu0 0.0
        %2157 = vmatpush2.msra.mxu0 0.0
        %2158 = vmatprep.subr.mxu0 0.0
        %2159 = vmatpush2.msra.mxu0 0.0
        %2160 = vmatprep.subr.mxu0 0.0
        %2161 = vmatpush2.msra.mxu0 0.0
        %2162 = vmatprep.subr.mxu0 0.0
        %2163 = vmatpush2.msra.mxu0 0.0
        %2164 = vmatprep.subr.mxu0 0.0
        %2165 = vmatpush2.msra.mxu0 0.0
        %2166 = vmatprep.subr.mxu0 0.0
        %2167 = vmatpush2.msra.mxu0 0.0
        %2168 = vmatprep.subr.mxu0 0.0
        %2169 = vmatpush2.msra.mxu0 0.0
        %2170 = vmatprep.subr.mxu0 0.0
        %2171 = vmatpush2.msra.mxu0 0.0
        %2172 = vmatprep.subr.mxu0 0.0
        %2173 = vmatpush2.msra.mxu0 0.0
        %2174 = vmatprep.subr.mxu0 0.0
        %2175 = vmatpush2.msra.mxu0 0.0
        %2176 = vmatprep.subr.mxu0 0.0
        %2177 = vmatpush2.msra.mxu0 0.0
        %2178 = vmatprep.mubr.f32.mxu0 0.0
        %2179 = vmatmul.mubr.f32.gmra.mxu0 %v1754
        %v2180 = vpop.f32.mrf.mxu0
        %v2181 = vadd.f32 %v2111, %v2180
        %v2182 = vpop.f32.mrf.mxu0
        %2183 = vdwg.mxu0
        %s2184 = scalar_lea.vmem [#allocation3], 11
        %v2185 = vld [vmem:[%s2184] ss:$4 sm:$0xff]
        %v2187 = vsel %vm1580, %v2185, 0
        %2189 = vmatprep.subr.mxu0 0.0
        %2190 = vmatpush1.msra.mxu0 0.0
        %2191 = vmatprep.subr.mxu0 0.0
        %2192 = vmatpush1.msra.mxu0 0.0
        %2193 = vmatprep.subr.mxu0 0.0
        %2194 = vmatpush1.msra.mxu0 0.0
        %2195 = vmatprep.subr.mxu0 0.0
        %2196 = vmatpush1.msra.mxu0 0.0
        %2197 = vmatprep.subr.mxu0 0.0
        %2198 = vmatpush1.msra.mxu0 0.0
        %2199 = vmatprep.subr.mxu0 0.0
        %2200 = vmatpush1.msra.mxu0 0.0
        %2201 = vmatprep.subr.mxu0 0.0
        %2202 = vmatpush1.msra.mxu0 0.0
        %2203 = vmatprep.subr.mxu0 0.0
        %2204 = vmatpush1.msra.mxu0 0.0
        %2205 = vmatprep.subr.mxu0 0.0
        %2206 = vmatpush1.msra.mxu0 0.0
        %2207 = vmatprep.subr.mxu0 0.0
        %2208 = vmatpush1.msra.mxu0 0.0
        %2209 = vmatprep.subr.mxu0 0.0
        %2210 = vmatpush1.msra.mxu0 0.0
        %2211 = vmatprep.subr.mxu0 0.0
        %2212 = vmatpush1.msra.mxu0 0.0
        %2213 = vmatprep.subr.mxu0 0.0
        %2214 = vmatpush1.msra.mxu0 %v1600
        %2215 = vmatprep.subr.mxu0 0.0
        %2216 = vmatpush1.msra.mxu0 %v1599
        %2217 = vmatprep.subr.mxu0 0.0
        %2218 = vmatpush1.msra.mxu0 %v1598
        %2219 = vmatprep.subr.mxu0 0.0
        %2220 = vmatpush1.msra.mxu0 %v1597
        %2221 = vmatprep.subr.mxu0 0.0
        %2222 = vmatpush2.msra.mxu0 0.0
        %2223 = vmatprep.subr.mxu0 0.0
        %2224 = vmatpush2.msra.mxu0 0.0
        %2225 = vmatprep.subr.mxu0 0.0
        %2226 = vmatpush2.msra.mxu0 0.0
        %2227 = vmatprep.subr.mxu0 0.0
        %2228 = vmatpush2.msra.mxu0 0.0
        %2229 = vmatprep.subr.mxu0 0.0
        %2230 = vmatpush2.msra.mxu0 0.0
        %2231 = vmatprep.subr.mxu0 0.0
        %2232 = vmatpush2.msra.mxu0 0.0
        %2233 = vmatprep.subr.mxu0 0.0
        %2234 = vmatpush2.msra.mxu0 0.0
        %2235 = vmatprep.subr.mxu0 0.0
        %2236 = vmatpush2.msra.mxu0 0.0
        %2237 = vmatprep.subr.mxu0 0.0
        %2238 = vmatpush2.msra.mxu0 0.0
        %2239 = vmatprep.subr.mxu0 0.0
        %2240 = vmatpush2.msra.mxu0 0.0
        %2241 = vmatprep.subr.mxu0 0.0
        %2242 = vmatpush2.msra.mxu0 0.0
        %2243 = vmatprep.subr.mxu0 0.0
        %2244 = vmatpush2.msra.mxu0 0.0
        %2245 = vmatprep.subr.mxu0 0.0
        %2246 = vmatpush2.msra.mxu0 0.0
        %2247 = vmatprep.subr.mxu0 0.0
        %2248 = vmatpush2.msra.mxu0 0.0
        %2249 = vmatprep.subr.mxu0 0.0
        %2250 = vmatpush2.msra.mxu0 0.0
        %2251 = vmatprep.subr.mxu0 0.0
        %2252 = vmatpush2.msra.mxu0 0.0
        %2253 = vmatprep.mubr.f32.mxu0 0.0
        %2254 = vmatmul.mubr.f32.gmra.mxu0 %v2187
        %v2255 = vpop.f32.mrf.mxu0
        %v2256 = vadd.f32 0.0, %v2255
        %v2257 = vpop.f32.mrf.mxu0
        %2258 = vdwg.mxu0
        %v2259 = vadd.f32 %v2181, %v2256
        %2260 = vmatprep.subr.mxu0 0.0
        %2261 = vmatpush1.msra.mxu0 0.0
        %2262 = vmatprep.subr.mxu0 0.0
        %2263 = vmatpush1.msra.mxu0 0.0
        %2264 = vmatprep.subr.mxu0 0.0
        %2265 = vmatpush1.msra.mxu0 0.0
        %2266 = vmatprep.subr.mxu0 0.0
        %2267 = vmatpush1.msra.mxu0 0.0
        %2268 = vmatprep.subr.mxu0 0.0
        %2269 = vmatpush1.msra.mxu0 0.0
        %2270 = vmatprep.subr.mxu0 0.0
        %2271 = vmatpush1.msra.mxu0 0.0
        %2272 = vmatprep.subr.mxu0 0.0
        %2273 = vmatpush1.msra.mxu0 0.0
        %2274 = vmatprep.subr.mxu0 0.0
        %2275 = vmatpush1.msra.mxu0 0.0
        %2276 = vmatprep.subr.mxu0 0.0
        %2277 = vmatpush1.msra.mxu0 0.0
        %2278 = vmatprep.subr.mxu0 0.0
        %2279 = vmatpush1.msra.mxu0 0.0
        %2280 = vmatprep.subr.mxu0 0.0
        %2281 = vmatpush1.msra.mxu0 0.0
        %2282 = vmatprep.subr.mxu0 0.0
        %2283 = vmatpush1.msra.mxu0 0.0
        %2284 = vmatprep.subr.mxu0 0.0
        %2285 = vmatpush1.msra.mxu0 %v1595
        %2286 = vmatprep.subr.mxu0 0.0
        %2287 = vmatpush1.msra.mxu0 %v1594
        %2288 = vmatprep.subr.mxu0 0.0
        %2289 = vmatpush1.msra.mxu0 %v1593
        %2290 = vmatprep.subr.mxu0 0.0
        %2291 = vmatpush1.msra.mxu0 %v1592
        %2292 = vmatprep.subr.mxu0 0.0
        %2293 = vmatpush2.msra.mxu0 0.0
        %2294 = vmatprep.subr.mxu0 0.0
        %2295 = vmatpush2.msra.mxu0 0.0
        %2296 = vmatprep.subr.mxu0 0.0
        %2297 = vmatpush2.msra.mxu0 0.0
        %2298 = vmatprep.subr.mxu0 0.0
        %2299 = vmatpush2.msra.mxu0 0.0
        %2300 = vmatprep.subr.mxu0 0.0
        %2301 = vmatpush2.msra.mxu0 0.0
        %2302 = vmatprep.subr.mxu0 0.0
        %2303 = vmatpush2.msra.mxu0 0.0
        %2304 = vmatprep.subr.mxu0 0.0
        %2305 = vmatpush2.msra.mxu0 0.0
        %2306 = vmatprep.subr.mxu0 0.0
        %2307 = vmatpush2.msra.mxu0 0.0
        %2308 = vmatprep.subr.mxu0 0.0
        %2309 = vmatpush2.msra.mxu0 0.0
        %2310 = vmatprep.subr.mxu0 0.0
        %2311 = vmatpush2.msra.mxu0 0.0
        %2312 = vmatprep.subr.mxu0 0.0
        %2313 = vmatpush2.msra.mxu0 0.0
        %2314 = vmatprep.subr.mxu0 0.0
        %2315 = vmatpush2.msra.mxu0 0.0
        %2316 = vmatprep.subr.mxu0 0.0
        %2317 = vmatpush2.msra.mxu0 0.0
        %2318 = vmatprep.subr.mxu0 0.0
        %2319 = vmatpush2.msra.mxu0 0.0
        %2320 = vmatprep.subr.mxu0 0.0
        %2321 = vmatpush2.msra.mxu0 0.0
        %2322 = vmatprep.subr.mxu0 0.0
        %2323 = vmatpush2.msra.mxu0 0.0
        %2324 = vmatprep.mubr.f32.mxu0 0.0
        %2325 = vmatmul.mubr.f32.gmra.mxu0 %v2187
        %v2326 = vpop.f32.mrf.mxu0
        %v2327 = vadd.f32 0.0, %v2326
        %v2328 = vpop.f32.mrf.mxu0
        %2329 = vdwg.mxu0
        %2330 = vmatprep.subr.mxu0 0.0
        %2331 = vmatpush1.msra.mxu0 0.0
        %2332 = vmatprep.subr.mxu0 0.0
        %2333 = vmatpush1.msra.mxu0 0.0
        %2334 = vmatprep.subr.mxu0 0.0
        %2335 = vmatpush1.msra.mxu0 0.0
        %2336 = vmatprep.subr.mxu0 0.0
        %2337 = vmatpush1.msra.mxu0 0.0
        %2338 = vmatprep.subr.mxu0 0.0
        %2339 = vmatpush1.msra.mxu0 0.0
        %2340 = vmatprep.subr.mxu0 0.0
        %2341 = vmatpush1.msra.mxu0 0.0
        %2342 = vmatprep.subr.mxu0 0.0
        %2343 = vmatpush1.msra.mxu0 0.0
        %2344 = vmatprep.subr.mxu0 0.0
        %2345 = vmatpush1.msra.mxu0 0.0
        %2346 = vmatprep.subr.mxu0 0.0
        %2347 = vmatpush1.msra.mxu0 0.0
        %2348 = vmatprep.subr.mxu0 0.0
        %2349 = vmatpush1.msra.mxu0 0.0
        %2350 = vmatprep.subr.mxu0 0.0
        %2351 = vmatpush1.msra.mxu0 0.0
        %2352 = vmatprep.subr.mxu0 0.0
        %2353 = vmatpush1.msra.mxu0 0.0
        %2354 = vmatprep.subr.mxu0 0.0
        %2355 = vmatpush1.msra.mxu0 %v1590
        %2356 = vmatprep.subr.mxu0 0.0
        %2357 = vmatpush1.msra.mxu0 %v1589
        %2358 = vmatprep.subr.mxu0 0.0
        %2359 = vmatpush1.msra.mxu0 %v1588
        %2360 = vmatprep.subr.mxu0 0.0
        %2361 = vmatpush1.msra.mxu0 %v1587
        %2362 = vmatprep.subr.mxu0 0.0
        %2363 = vmatpush2.msra.mxu0 0.0
        %2364 = vmatprep.subr.mxu0 0.0
        %2365 = vmatpush2.msra.mxu0 0.0
        %2366 = vmatprep.subr.mxu0 0.0
        %2367 = vmatpush2.msra.mxu0 0.0
        %2368 = vmatprep.subr.mxu0 0.0
        %2369 = vmatpush2.msra.mxu0 0.0
        %2370 = vmatprep.subr.mxu0 0.0
        %2371 = vmatpush2.msra.mxu0 0.0
        %2372 = vmatprep.subr.mxu0 0.0
        %2373 = vmatpush2.msra.mxu0 0.0
        %2374 = vmatprep.subr.mxu0 0.0
        %2375 = vmatpush2.msra.mxu0 0.0
        %2376 = vmatprep.subr.mxu0 0.0
        %2377 = vmatpush2.msra.mxu0 0.0
        %2378 = vmatprep.subr.mxu0 0.0
        %2379 = vmatpush2.msra.mxu0 0.0
        %2380 = vmatprep.subr.mxu0 0.0
        %2381 = vmatpush2.msra.mxu0 0.0
        %2382 = vmatprep.subr.mxu0 0.0
        %2383 = vmatpush2.msra.mxu0 0.0
        %2384 = vmatprep.subr.mxu0 0.0
        %2385 = vmatpush2.msra.mxu0 0.0
        %2386 = vmatprep.subr.mxu0 0.0
        %2387 = vmatpush2.msra.mxu0 0.0
        %2388 = vmatprep.subr.mxu0 0.0
        %2389 = vmatpush2.msra.mxu0 0.0
        %2390 = vmatprep.subr.mxu0 0.0
        %2391 = vmatpush2.msra.mxu0 0.0
        %2392 = vmatprep.subr.mxu0 0.0
        %2393 = vmatpush2.msra.mxu0 0.0
        %2394 = vmatprep.mubr.f32.mxu0 0.0
        %2395 = vmatmul.mubr.f32.gmra.mxu0 %v1970
        %v2396 = vpop.f32.mrf.mxu0
        %v2397 = vadd.f32 %v2327, %v2396
        %v2398 = vpop.f32.mrf.mxu0
        %2399 = vdwg.mxu0
        %s2400 = scalar_lea.vmem [#allocation3], 12
        %v2401 = vld [vmem:[%s2400] ss:$4 sm:$0xff]
        %v2403 = vsel %vm1580, %v2401, 0
        %2405 = vmatprep.subr.mxu0 0.0
        %2406 = vmatpush1.msra.mxu0 0.0
        %2407 = vmatprep.subr.mxu0 0.0
        %2408 = vmatpush1.msra.mxu0 0.0
        %2409 = vmatprep.subr.mxu0 0.0
        %2410 = vmatpush1.msra.mxu0 0.0
        %2411 = vmatprep.subr.mxu0 0.0
        %2412 = vmatpush1.msra.mxu0 0.0
        %2413 = vmatprep.subr.mxu0 0.0
        %2414 = vmatpush1.msra.mxu0 0.0
        %2415 = vmatprep.subr.mxu0 0.0
        %2416 = vmatpush1.msra.mxu0 0.0
        %2417 = vmatprep.subr.mxu0 0.0
        %2418 = vmatpush1.msra.mxu0 0.0
        %2419 = vmatprep.subr.mxu0 0.0
        %2420 = vmatpush1.msra.mxu0 0.0
        %2421 = vmatprep.subr.mxu0 0.0
        %2422 = vmatpush1.msra.mxu0 0.0
        %2423 = vmatprep.subr.mxu0 0.0
        %2424 = vmatpush1.msra.mxu0 0.0
        %2425 = vmatprep.subr.mxu0 0.0
        %2426 = vmatpush1.msra.mxu0 0.0
        %2427 = vmatprep.subr.mxu0 0.0
        %2428 = vmatpush1.msra.mxu0 0.0
        %2429 = vmatprep.subr.mxu0 0.0
        %2430 = vmatpush1.msra.mxu0 %v1600
        %2431 = vmatprep.subr.mxu0 0.0
        %2432 = vmatpush1.msra.mxu0 %v1599
        %2433 = vmatprep.subr.mxu0 0.0
        %2434 = vmatpush1.msra.mxu0 %v1598
        %2435 = vmatprep.subr.mxu0 0.0
        %2436 = vmatpush1.msra.mxu0 %v1597
        %2437 = vmatprep.subr.mxu0 0.0
        %2438 = vmatpush2.msra.mxu0 0.0
        %2439 = vmatprep.subr.mxu0 0.0
        %2440 = vmatpush2.msra.mxu0 0.0
        %2441 = vmatprep.subr.mxu0 0.0
        %2442 = vmatpush2.msra.mxu0 0.0
        %2443 = vmatprep.subr.mxu0 0.0
        %2444 = vmatpush2.msra.mxu0 0.0
        %2445 = vmatprep.subr.mxu0 0.0
        %2446 = vmatpush2.msra.mxu0 0.0
        %2447 = vmatprep.subr.mxu0 0.0
        %2448 = vmatpush2.msra.mxu0 0.0
        %2449 = vmatprep.subr.mxu0 0.0
        %2450 = vmatpush2.msra.mxu0 0.0
        %2451 = vmatprep.subr.mxu0 0.0
        %2452 = vmatpush2.msra.mxu0 0.0
        %2453 = vmatprep.subr.mxu0 0.0
        %2454 = vmatpush2.msra.mxu0 0.0
        %2455 = vmatprep.subr.mxu0 0.0
        %2456 = vmatpush2.msra.mxu0 0.0
        %2457 = vmatprep.subr.mxu0 0.0
        %2458 = vmatpush2.msra.mxu0 0.0
        %2459 = vmatprep.subr.mxu0 0.0
        %2460 = vmatpush2.msra.mxu0 0.0
        %2461 = vmatprep.subr.mxu0 0.0
        %2462 = vmatpush2.msra.mxu0 0.0
        %2463 = vmatprep.subr.mxu0 0.0
        %2464 = vmatpush2.msra.mxu0 0.0
        %2465 = vmatprep.subr.mxu0 0.0
        %2466 = vmatpush2.msra.mxu0 0.0
        %2467 = vmatprep.subr.mxu0 0.0
        %2468 = vmatpush2.msra.mxu0 0.0
        %2469 = vmatprep.mubr.f32.mxu0 0.0
        %2470 = vmatmul.mubr.f32.gmra.mxu0 %v2403
        %v2471 = vpop.f32.mrf.mxu0
        %v2472 = vadd.f32 0.0, %v2471
        %v2473 = vpop.f32.mrf.mxu0
        %2474 = vdwg.mxu0
        %v2475 = vadd.f32 %v2397, %v2472
        %v2476 = vmax.f32 %v2259, %v2475
        %v2477 = vmax.f32 %v2043, %v2476
        %v2478 = vld [vmem:[%s4] sm:$0x1]
        %v2480 = vlaneseq
        %v2481 = vshrl.u32 %v2480, 7
        %v2482 = vsub.s32 0, %v2481
        %v2483 = vrot.slane %v2478, %v2482
        %v2485 = vadd.f32 %v2477, %v2483
        %v2486 = vmax.f32 %v2485, 0.0
        %vm2487 = vcmask 523264
        %2488 = vst.msk [vmem:[#allocation4] sm:$0xff] %vm2487, 0.0
        %2489 = vst.msk [vmem:[#allocation4 + $0x10] sm:$0xff] %vm2487, 0.0
        %2490 = vst.msk [vmem:[#allocation4 + $0x8] sm:$0xff] %vm2487, %v2486
        %v2491 = vld [vmem:[%s5] sm:$0xff]
        %v2492 = vld [vmem:[%s5 + $0x8] sm:$0xff]
        %v2493 = vld [vmem:[%s5 + $0x10] sm:$0xff]
        %v2494 = vld [vmem:[%s5 + $0x18] sm:$0xff]
        %v2495 = vld [vmem:[%s5 + $0x20] sm:$0xff]
        %v2496 = vld [vmem:[%s5 + $0x28] sm:$0xff]
        %v2497 = vld [vmem:[%s5 + $0x30] sm:$0xff]
        %v2498 = vld [vmem:[%s5 + $0x38] sm:$0xff]
        %s2499 = scalar_lea.vmem %s5, 64
        %v2500 = vld [vmem:[%s2499] sm:$0xff]
        %v2501 = vld [vmem:[%s2499 + $0x8] sm:$0xff]
        %v2502 = vld [vmem:[%s2499 + $0x10] sm:$0xff]
        %v2503 = vld [vmem:[%s2499 + $0x18] sm:$0xff]
        %v2504 = vld [vmem:[%s2499 + $0x20] sm:$0xff]
        %v2505 = vld [vmem:[%s2499 + $0x28] sm:$0xff]
        %v2506 = vld [vmem:[%s2499 + $0x30] sm:$0xff]
        %v2507 = vld [vmem:[%s2499 + $0x38] sm:$0xff]
        %s2508 = scalar_lea.vmem %s5, 128
        %v2509 = vld [vmem:[%s2508] sm:$0xff]
        %v2510 = vld [vmem:[%s2508 + $0x8] sm:$0xff]
        %v2511 = vld [vmem:[%s2508 + $0x10] sm:$0xff]
        %v2512 = vld [vmem:[%s2508 + $0x18] sm:$0xff]
        %v2513 = vld [vmem:[%s2508 + $0x20] sm:$0xff]
        %v2514 = vld [vmem:[%s2508 + $0x28] sm:$0xff]
        %v2515 = vld [vmem:[%s2508 + $0x30] sm:$0xff]
        %v2516 = vld [vmem:[%s2508 + $0x38] sm:$0xff]
        %s2517 = scalar_lea.vmem [#allocation4], 7
        %v2518 = vld [vmem:[%s2517] ss:$4 sm:$0x3]
        %s2519 = scalar_lea.vmem [#allocation4], 8
        %v2520 = vld [vmem:[%s2519] ss:$4 sm:$0x3]
        %v2522 = vsel %vm2487, %v2520, 0
        %2524 = vmatprep.subr.mxu0 0.0
        %2525 = vmatpush1.msra.mxu0 0.0
        %2526 = vmatprep.subr.mxu0 0.0
        %2527 = vmatpush1.msra.mxu0 0.0
        %2528 = vmatprep.subr.mxu0 0.0
        %2529 = vmatpush1.msra.mxu0 0.0
        %2530 = vmatprep.subr.mxu0 0.0
        %2531 = vmatpush1.msra.mxu0 0.0
        %2532 = vmatprep.subr.mxu0 0.0
        %2533 = vmatpush1.msra.mxu0 0.0
        %2534 = vmatprep.subr.mxu0 0.0
        %2535 = vmatpush1.msra.mxu0 0.0
        %2536 = vmatprep.subr.mxu0 0.0
        %2537 = vmatpush1.msra.mxu0 0.0
        %2538 = vmatprep.subr.mxu0 0.0
        %2539 = vmatpush1.msra.mxu0 0.0
        %2540 = vmatprep.subr.mxu0 0.0
        %2541 = vmatpush1.msra.mxu0 %v2507
        %2542 = vmatprep.subr.mxu0 0.0
        %2543 = vmatpush1.msra.mxu0 %v2506
        %2544 = vmatprep.subr.mxu0 0.0
        %2545 = vmatpush1.msra.mxu0 %v2505
        %2546 = vmatprep.subr.mxu0 0.0
        %2547 = vmatpush1.msra.mxu0 %v2504
        %2548 = vmatprep.subr.mxu0 0.0
        %2549 = vmatpush1.msra.mxu0 %v2503
        %2550 = vmatprep.subr.mxu0 0.0
        %2551 = vmatpush1.msra.mxu0 %v2502
        %2552 = vmatprep.subr.mxu0 0.0
        %2553 = vmatpush1.msra.mxu0 %v2501
        %2554 = vmatprep.subr.mxu0 0.0
        %2555 = vmatpush1.msra.mxu0 %v2500
        %2556 = vmatprep.subr.mxu0 0.0
        %2557 = vmatpush2.msra.mxu0 0.0
        %2558 = vmatprep.subr.mxu0 0.0
        %2559 = vmatpush2.msra.mxu0 0.0
        %2560 = vmatprep.subr.mxu0 0.0
        %2561 = vmatpush2.msra.mxu0 0.0
        %2562 = vmatprep.subr.mxu0 0.0
        %2563 = vmatpush2.msra.mxu0 0.0
        %2564 = vmatprep.subr.mxu0 0.0
        %2565 = vmatpush2.msra.mxu0 0.0
        %2566 = vmatprep.subr.mxu0 0.0
        %2567 = vmatpush2.msra.mxu0 0.0
        %2568 = vmatprep.subr.mxu0 0.0
        %2569 = vmatpush2.msra.mxu0 0.0
        %2570 = vmatprep.subr.mxu0 0.0
        %2571 = vmatpush2.msra.mxu0 0.0
        %2572 = vmatprep.subr.mxu0 0.0
        %2573 = vmatpush2.msra.mxu0 0.0
        %2574 = vmatprep.subr.mxu0 0.0
        %2575 = vmatpush2.msra.mxu0 0.0
        %2576 = vmatprep.subr.mxu0 0.0
        %2577 = vmatpush2.msra.mxu0 0.0
        %2578 = vmatprep.subr.mxu0 0.0
        %2579 = vmatpush2.msra.mxu0 0.0
        %2580 = vmatprep.subr.mxu0 0.0
        %2581 = vmatpush2.msra.mxu0 0.0
        %2582 = vmatprep.subr.mxu0 0.0
        %2583 = vmatpush2.msra.mxu0 0.0
        %2584 = vmatprep.subr.mxu0 0.0
        %2585 = vmatpush2.msra.mxu0 0.0
        %2586 = vmatprep.subr.mxu0 0.0
        %2587 = vmatpush2.msra.mxu0 0.0
        %2588 = vmatprep.mubr.f32.mxu0 0.0
        %2589 = vmatmul.mubr.f32.gmra.mxu0 %v2522
        %v2590 = vpop.f32.mrf.mxu0
        %v2591 = vadd.f32 0.0, %v2590
        %v2592 = vpop.f32.mrf.mxu0
        %2593 = vdwg.mxu0
        %v2595 = vsel %vm2487, %v2518, 0
        %2597 = vmatprep.subr.mxu0 0.0
        %2598 = vmatpush1.msra.mxu0 0.0
        %2599 = vmatprep.subr.mxu0 0.0
        %2600 = vmatpush1.msra.mxu0 0.0
        %2601 = vmatprep.subr.mxu0 0.0
        %2602 = vmatpush1.msra.mxu0 0.0
        %2603 = vmatprep.subr.mxu0 0.0
        %2604 = vmatpush1.msra.mxu0 0.0
        %2605 = vmatprep.subr.mxu0 0.0
        %2606 = vmatpush1.msra.mxu0 0.0
        %2607 = vmatprep.subr.mxu0 0.0
        %2608 = vmatpush1.msra.mxu0 0.0
        %2609 = vmatprep.subr.mxu0 0.0
        %2610 = vmatpush1.msra.mxu0 0.0
        %2611 = vmatprep.subr.mxu0 0.0
        %2612 = vmatpush1.msra.mxu0 0.0
        %2613 = vmatprep.subr.mxu0 0.0
        %2614 = vmatpush1.msra.mxu0 %v2498
        %2615 = vmatprep.subr.mxu0 0.0
        %2616 = vmatpush1.msra.mxu0 %v2497
        %2617 = vmatprep.subr.mxu0 0.0
        %2618 = vmatpush1.msra.mxu0 %v2496
        %2619 = vmatprep.subr.mxu0 0.0
        %2620 = vmatpush1.msra.mxu0 %v2495
        %2621 = vmatprep.subr.mxu0 0.0
        %2622 = vmatpush1.msra.mxu0 %v2494
        %2623 = vmatprep.subr.mxu0 0.0
        %2624 = vmatpush1.msra.mxu0 %v2493
        %2625 = vmatprep.subr.mxu0 0.0
        %2626 = vmatpush1.msra.mxu0 %v2492
        %2627 = vmatprep.subr.mxu0 0.0
        %2628 = vmatpush1.msra.mxu0 %v2491
        %2629 = vmatprep.subr.mxu0 0.0
        %2630 = vmatpush2.msra.mxu0 0.0
        %2631 = vmatprep.subr.mxu0 0.0
        %2632 = vmatpush2.msra.mxu0 0.0
        %2633 = vmatprep.subr.mxu0 0.0
        %2634 = vmatpush2.msra.mxu0 0.0
        %2635 = vmatprep.subr.mxu0 0.0
        %2636 = vmatpush2.msra.mxu0 0.0
        %2637 = vmatprep.subr.mxu0 0.0
        %2638 = vmatpush2.msra.mxu0 0.0
        %2639 = vmatprep.subr.mxu0 0.0
        %2640 = vmatpush2.msra.mxu0 0.0
        %2641 = vmatprep.subr.mxu0 0.0
        %2642 = vmatpush2.msra.mxu0 0.0
        %2643 = vmatprep.subr.mxu0 0.0
        %2644 = vmatpush2.msra.mxu0 0.0
        %2645 = vmatprep.subr.mxu0 0.0
        %2646 = vmatpush2.msra.mxu0 0.0
        %2647 = vmatprep.subr.mxu0 0.0
        %2648 = vmatpush2.msra.mxu0 0.0
        %2649 = vmatprep.subr.mxu0 0.0
        %2650 = vmatpush2.msra.mxu0 0.0
        %2651 = vmatprep.subr.mxu0 0.0
        %2652 = vmatpush2.msra.mxu0 0.0
        %2653 = vmatprep.subr.mxu0 0.0
        %2654 = vmatpush2.msra.mxu0 0.0
        %2655 = vmatprep.subr.mxu0 0.0
        %2656 = vmatpush2.msra.mxu0 0.0
        %2657 = vmatprep.subr.mxu0 0.0
        %2658 = vmatpush2.msra.mxu0 0.0
        %2659 = vmatprep.subr.mxu0 0.0
        %2660 = vmatpush2.msra.mxu0 0.0
        %2661 = vmatprep.mubr.f32.mxu0 0.0
        %2662 = vmatmul.mubr.f32.gmra.mxu0 %v2595
        %v2663 = vpop.f32.mrf.mxu0
        %v2664 = vadd.f32 %v2591, %v2663
        %v2665 = vpop.f32.mrf.mxu0
        %2666 = vdwg.mxu0
        %s2667 = scalar_lea.vmem [#allocation4], 9
        %v2668 = vld [vmem:[%s2667] ss:$4 sm:$0x3]
        %v2670 = vsel %vm2487, %v2668, 0
        %2672 = vmatprep.subr.mxu0 0.0
        %2673 = vmatpush1.msra.mxu0 0.0
        %2674 = vmatprep.subr.mxu0 0.0
        %2675 = vmatpush1.msra.mxu0 0.0
        %2676 = vmatprep.subr.mxu0 0.0
        %2677 = vmatpush1.msra.mxu0 0.0
        %2678 = vmatprep.subr.mxu0 0.0
        %2679 = vmatpush1.msra.mxu0 0.0
        %2680 = vmatprep.subr.mxu0 0.0
        %2681 = vmatpush1.msra.mxu0 0.0
        %2682 = vmatprep.subr.mxu0 0.0
        %2683 = vmatpush1.msra.mxu0 0.0
        %2684 = vmatprep.subr.mxu0 0.0
        %2685 = vmatpush1.msra.mxu0 0.0
        %2686 = vmatprep.subr.mxu0 0.0
        %2687 = vmatpush1.msra.mxu0 0.0
        %2688 = vmatprep.subr.mxu0 0.0
        %2689 = vmatpush1.msra.mxu0 %v2516
        %2690 = vmatprep.subr.mxu0 0.0
        %2691 = vmatpush1.msra.mxu0 %v2515
        %2692 = vmatprep.subr.mxu0 0.0
        %2693 = vmatpush1.msra.mxu0 %v2514
        %2694 = vmatprep.subr.mxu0 0.0
        %2695 = vmatpush1.msra.mxu0 %v2513
        %2696 = vmatprep.subr.mxu0 0.0
        %2697 = vmatpush1.msra.mxu0 %v2512
        %2698 = vmatprep.subr.mxu0 0.0
        %2699 = vmatpush1.msra.mxu0 %v2511
        %2700 = vmatprep.subr.mxu0 0.0
        %2701 = vmatpush1.msra.mxu0 %v2510
        %2702 = vmatprep.subr.mxu0 0.0
        %2703 = vmatpush1.msra.mxu0 %v2509
        %2704 = vmatprep.subr.mxu0 0.0
        %2705 = vmatpush2.msra.mxu0 0.0
        %2706 = vmatprep.subr.mxu0 0.0
        %2707 = vmatpush2.msra.mxu0 0.0
        %2708 = vmatprep.subr.mxu0 0.0
        %2709 = vmatpush2.msra.mxu0 0.0
        %2710 = vmatprep.subr.mxu0 0.0
        %2711 = vmatpush2.msra.mxu0 0.0
        %2712 = vmatprep.subr.mxu0 0.0
        %2713 = vmatpush2.msra.mxu0 0.0
        %2714 = vmatprep.subr.mxu0 0.0
        %2715 = vmatpush2.msra.mxu0 0.0
        %2716 = vmatprep.subr.mxu0 0.0
        %2717 = vmatpush2.msra.mxu0 0.0
        %2718 = vmatprep.subr.mxu0 0.0
        %2719 = vmatpush2.msra.mxu0 0.0
        %2720 = vmatprep.subr.mxu0 0.0
        %2721 = vmatpush2.msra.mxu0 0.0
        %2722 = vmatprep.subr.mxu0 0.0
        %2723 = vmatpush2.msra.mxu0 0.0
        %2724 = vmatprep.subr.mxu0 0.0
        %2725 = vmatpush2.msra.mxu0 0.0
        %2726 = vmatprep.subr.mxu0 0.0
        %2727 = vmatpush2.msra.mxu0 0.0
        %2728 = vmatprep.subr.mxu0 0.0
        %2729 = vmatpush2.msra.mxu0 0.0
        %2730 = vmatprep.subr.mxu0 0.0
        %2731 = vmatpush2.msra.mxu0 0.0
        %2732 = vmatprep.subr.mxu0 0.0
        %2733 = vmatpush2.msra.mxu0 0.0
        %2734 = vmatprep.subr.mxu0 0.0
        %2735 = vmatpush2.msra.mxu0 0.0
        %2736 = vmatprep.mubr.f32.mxu0 0.0
        %2737 = vmatmul.mubr.f32.gmra.mxu0 %v2670
        %v2738 = vpop.f32.mrf.mxu0
        %v2739 = vadd.f32 0.0, %v2738
        %v2740 = vpop.f32.mrf.mxu0
        %2741 = vdwg.mxu0
        %v2742 = vadd.f32 %v2664, %v2739
        %2743 = vmatprep.subr.mxu0 0.0
        %2744 = vmatpush1.msra.mxu0 0.0
        %2745 = vmatprep.subr.mxu0 0.0
        %2746 = vmatpush1.msra.mxu0 0.0
        %2747 = vmatprep.subr.mxu0 0.0
        %2748 = vmatpush1.msra.mxu0 0.0
        %2749 = vmatprep.subr.mxu0 0.0
        %2750 = vmatpush1.msra.mxu0 0.0
        %2751 = vmatprep.subr.mxu0 0.0
        %2752 = vmatpush1.msra.mxu0 0.0
        %2753 = vmatprep.subr.mxu0 0.0
        %2754 = vmatpush1.msra.mxu0 0.0
        %2755 = vmatprep.subr.mxu0 0.0
        %2756 = vmatpush1.msra.mxu0 0.0
        %2757 = vmatprep.subr.mxu0 0.0
        %2758 = vmatpush1.msra.mxu0 0.0
        %2759 = vmatprep.subr.mxu0 0.0
        %2760 = vmatpush1.msra.mxu0 %v2507
        %2761 = vmatprep.subr.mxu0 0.0
        %2762 = vmatpush1.msra.mxu0 %v2506
        %2763 = vmatprep.subr.mxu0 0.0
        %2764 = vmatpush1.msra.mxu0 %v2505
        %2765 = vmatprep.subr.mxu0 0.0
        %2766 = vmatpush1.msra.mxu0 %v2504
        %2767 = vmatprep.subr.mxu0 0.0
        %2768 = vmatpush1.msra.mxu0 %v2503
        %2769 = vmatprep.subr.mxu0 0.0
        %2770 = vmatpush1.msra.mxu0 %v2502
        %2771 = vmatprep.subr.mxu0 0.0
        %2772 = vmatpush1.msra.mxu0 %v2501
        %2773 = vmatprep.subr.mxu0 0.0
        %2774 = vmatpush1.msra.mxu0 %v2500
        %2775 = vmatprep.subr.mxu0 0.0
        %2776 = vmatpush2.msra.mxu0 0.0
        %2777 = vmatprep.subr.mxu0 0.0
        %2778 = vmatpush2.msra.mxu0 0.0
        %2779 = vmatprep.subr.mxu0 0.0
        %2780 = vmatpush2.msra.mxu0 0.0
        %2781 = vmatprep.subr.mxu0 0.0
        %2782 = vmatpush2.msra.mxu0 0.0
        %2783 = vmatprep.subr.mxu0 0.0
        %2784 = vmatpush2.msra.mxu0 0.0
        %2785 = vmatprep.subr.mxu0 0.0
        %2786 = vmatpush2.msra.mxu0 0.0
        %2787 = vmatprep.subr.mxu0 0.0
        %2788 = vmatpush2.msra.mxu0 0.0
        %2789 = vmatprep.subr.mxu0 0.0
        %2790 = vmatpush2.msra.mxu0 0.0
        %2791 = vmatprep.subr.mxu0 0.0
        %2792 = vmatpush2.msra.mxu0 0.0
        %2793 = vmatprep.subr.mxu0 0.0
        %2794 = vmatpush2.msra.mxu0 0.0
        %2795 = vmatprep.subr.mxu0 0.0
        %2796 = vmatpush2.msra.mxu0 0.0
        %2797 = vmatprep.subr.mxu0 0.0
        %2798 = vmatpush2.msra.mxu0 0.0
        %2799 = vmatprep.subr.mxu0 0.0
        %2800 = vmatpush2.msra.mxu0 0.0
        %2801 = vmatprep.subr.mxu0 0.0
        %2802 = vmatpush2.msra.mxu0 0.0
        %2803 = vmatprep.subr.mxu0 0.0
        %2804 = vmatpush2.msra.mxu0 0.0
        %2805 = vmatprep.subr.mxu0 0.0
        %2806 = vmatpush2.msra.mxu0 0.0
        %2807 = vmatprep.mubr.f32.mxu0 0.0
        %2808 = vmatmul.mubr.f32.gmra.mxu0 %v2670
        %v2809 = vpop.f32.mrf.mxu0
        %v2810 = vadd.f32 0.0, %v2809
        %v2811 = vpop.f32.mrf.mxu0
        %2812 = vdwg.mxu0
        %2813 = vmatprep.subr.mxu0 0.0
        %2814 = vmatpush1.msra.mxu0 0.0
        %2815 = vmatprep.subr.mxu0 0.0
        %2816 = vmatpush1.msra.mxu0 0.0
        %2817 = vmatprep.subr.mxu0 0.0
        %2818 = vmatpush1.msra.mxu0 0.0
        %2819 = vmatprep.subr.mxu0 0.0
        %2820 = vmatpush1.msra.mxu0 0.0
        %2821 = vmatprep.subr.mxu0 0.0
        %2822 = vmatpush1.msra.mxu0 0.0
        %2823 = vmatprep.subr.mxu0 0.0
        %2824 = vmatpush1.msra.mxu0 0.0
        %2825 = vmatprep.subr.mxu0 0.0
        %2826 = vmatpush1.msra.mxu0 0.0
        %2827 = vmatprep.subr.mxu0 0.0
        %2828 = vmatpush1.msra.mxu0 0.0
        %2829 = vmatprep.subr.mxu0 0.0
        %2830 = vmatpush1.msra.mxu0 %v2498
        %2831 = vmatprep.subr.mxu0 0.0
        %2832 = vmatpush1.msra.mxu0 %v2497
        %2833 = vmatprep.subr.mxu0 0.0
        %2834 = vmatpush1.msra.mxu0 %v2496
        %2835 = vmatprep.subr.mxu0 0.0
        %2836 = vmatpush1.msra.mxu0 %v2495
        %2837 = vmatprep.subr.mxu0 0.0
        %2838 = vmatpush1.msra.mxu0 %v2494
        %2839 = vmatprep.subr.mxu0 0.0
        %2840 = vmatpush1.msra.mxu0 %v2493
        %2841 = vmatprep.subr.mxu0 0.0
        %2842 = vmatpush1.msra.mxu0 %v2492
        %2843 = vmatprep.subr.mxu0 0.0
        %2844 = vmatpush1.msra.mxu0 %v2491
        %2845 = vmatprep.subr.mxu0 0.0
        %2846 = vmatpush2.msra.mxu0 0.0
        %2847 = vmatprep.subr.mxu0 0.0
        %2848 = vmatpush2.msra.mxu0 0.0
        %2849 = vmatprep.subr.mxu0 0.0
        %2850 = vmatpush2.msra.mxu0 0.0
        %2851 = vmatprep.subr.mxu0 0.0
        %2852 = vmatpush2.msra.mxu0 0.0
        %2853 = vmatprep.subr.mxu0 0.0
        %2854 = vmatpush2.msra.mxu0 0.0
        %2855 = vmatprep.subr.mxu0 0.0
        %2856 = vmatpush2.msra.mxu0 0.0
        %2857 = vmatprep.subr.mxu0 0.0
        %2858 = vmatpush2.msra.mxu0 0.0
        %2859 = vmatprep.subr.mxu0 0.0
        %2860 = vmatpush2.msra.mxu0 0.0
        %2861 = vmatprep.subr.mxu0 0.0
        %2862 = vmatpush2.msra.mxu0 0.0
        %2863 = vmatprep.subr.mxu0 0.0
        %2864 = vmatpush2.msra.mxu0 0.0
        %2865 = vmatprep.subr.mxu0 0.0
        %2866 = vmatpush2.msra.mxu0 0.0
        %2867 = vmatprep.subr.mxu0 0.0
        %2868 = vmatpush2.msra.mxu0 0.0
        %2869 = vmatprep.subr.mxu0 0.0
        %2870 = vmatpush2.msra.mxu0 0.0
        %2871 = vmatprep.subr.mxu0 0.0
        %2872 = vmatpush2.msra.mxu0 0.0
        %2873 = vmatprep.subr.mxu0 0.0
        %2874 = vmatpush2.msra.mxu0 0.0
        %2875 = vmatprep.subr.mxu0 0.0
        %2876 = vmatpush2.msra.mxu0 0.0
        %2877 = vmatprep.mubr.f32.mxu0 0.0
        %2878 = vmatmul.mubr.f32.gmra.mxu0 %v2522
        %v2879 = vpop.f32.mrf.mxu0
        %v2880 = vadd.f32 %v2810, %v2879
        %v2881 = vpop.f32.mrf.mxu0
        %2882 = vdwg.mxu0
        %s2883 = scalar_lea.vmem [#allocation4], 10
        %v2884 = vld [vmem:[%s2883] ss:$4 sm:$0x3]
        %v2886 = vsel %vm2487, %v2884, 0
        %2888 = vmatprep.subr.mxu0 0.0
        %2889 = vmatpush1.msra.mxu0 0.0
        %2890 = vmatprep.subr.mxu0 0.0
        %2891 = vmatpush1.msra.mxu0 0.0
        %2892 = vmatprep.subr.mxu0 0.0
        %2893 = vmatpush1.msra.mxu0 0.0
        %2894 = vmatprep.subr.mxu0 0.0
        %2895 = vmatpush1.msra.mxu0 0.0
        %2896 = vmatprep.subr.mxu0 0.0
        %2897 = vmatpush1.msra.mxu0 0.0
        %2898 = vmatprep.subr.mxu0 0.0
        %2899 = vmatpush1.msra.mxu0 0.0
        %2900 = vmatprep.subr.mxu0 0.0
        %2901 = vmatpush1.msra.mxu0 0.0
        %2902 = vmatprep.subr.mxu0 0.0
        %2903 = vmatpush1.msra.mxu0 0.0
        %2904 = vmatprep.subr.mxu0 0.0
        %2905 = vmatpush1.msra.mxu0 %v2516
        %2906 = vmatprep.subr.mxu0 0.0
        %2907 = vmatpush1.msra.mxu0 %v2515
        %2908 = vmatprep.subr.mxu0 0.0
        %2909 = vmatpush1.msra.mxu0 %v2514
        %2910 = vmatprep.subr.mxu0 0.0
        %2911 = vmatpush1.msra.mxu0 %v2513
        %2912 = vmatprep.subr.mxu0 0.0
        %2913 = vmatpush1.msra.mxu0 %v2512
        %2914 = vmatprep.subr.mxu0 0.0
        %2915 = vmatpush1.msra.mxu0 %v2511
        %2916 = vmatprep.subr.mxu0 0.0
        %2917 = vmatpush1.msra.mxu0 %v2510
        %2918 = vmatprep.subr.mxu0 0.0
        %2919 = vmatpush1.msra.mxu0 %v2509
        %2920 = vmatprep.subr.mxu0 0.0
        %2921 = vmatpush2.msra.mxu0 0.0
        %2922 = vmatprep.subr.mxu0 0.0
        %2923 = vmatpush2.msra.mxu0 0.0
        %2924 = vmatprep.subr.mxu0 0.0
        %2925 = vmatpush2.msra.mxu0 0.0
        %2926 = vmatprep.subr.mxu0 0.0
        %2927 = vmatpush2.msra.mxu0 0.0
        %2928 = vmatprep.subr.mxu0 0.0
        %2929 = vmatpush2.msra.mxu0 0.0
        %2930 = vmatprep.subr.mxu0 0.0
        %2931 = vmatpush2.msra.mxu0 0.0
        %2932 = vmatprep.subr.mxu0 0.0
        %2933 = vmatpush2.msra.mxu0 0.0
        %2934 = vmatprep.subr.mxu0 0.0
        %2935 = vmatpush2.msra.mxu0 0.0
        %2936 = vmatprep.subr.mxu0 0.0
        %2937 = vmatpush2.msra.mxu0 0.0
        %2938 = vmatprep.subr.mxu0 0.0
        %2939 = vmatpush2.msra.mxu0 0.0
        %2940 = vmatprep.subr.mxu0 0.0
        %2941 = vmatpush2.msra.mxu0 0.0
        %2942 = vmatprep.subr.mxu0 0.0
        %2943 = vmatpush2.msra.mxu0 0.0
        %2944 = vmatprep.subr.mxu0 0.0
        %2945 = vmatpush2.msra.mxu0 0.0
        %2946 = vmatprep.subr.mxu0 0.0
        %2947 = vmatpush2.msra.mxu0 0.0
        %2948 = vmatprep.subr.mxu0 0.0
        %2949 = vmatpush2.msra.mxu0 0.0
        %2950 = vmatprep.subr.mxu0 0.0
        %2951 = vmatpush2.msra.mxu0 0.0
        %2952 = vmatprep.mubr.f32.mxu0 0.0
        %2953 = vmatmul.mubr.f32.gmra.mxu0 %v2886
        %v2954 = vpop.f32.mrf.mxu0
        %v2955 = vadd.f32 0.0, %v2954
        %v2956 = vpop.f32.mrf.mxu0
        %2957 = vdwg.mxu0
        %v2958 = vadd.f32 %v2880, %v2955
        %v2959 = vmax.f32 %v2742, %v2958
        %2960 = vmatprep.subr.mxu0 0.0
        %2961 = vmatpush1.msra.mxu0 0.0
        %2962 = vmatprep.subr.mxu0 0.0
        %2963 = vmatpush1.msra.mxu0 0.0
        %2964 = vmatprep.subr.mxu0 0.0
        %2965 = vmatpush1.msra.mxu0 0.0
        %2966 = vmatprep.subr.mxu0 0.0
        %2967 = vmatpush1.msra.mxu0 0.0
        %2968 = vmatprep.subr.mxu0 0.0
        %2969 = vmatpush1.msra.mxu0 0.0
        %2970 = vmatprep.subr.mxu0 0.0
        %2971 = vmatpush1.msra.mxu0 0.0
        %2972 = vmatprep.subr.mxu0 0.0
        %2973 = vmatpush1.msra.mxu0 0.0
        %2974 = vmatprep.subr.mxu0 0.0
        %2975 = vmatpush1.msra.mxu0 0.0
        %2976 = vmatprep.subr.mxu0 0.0
        %2977 = vmatpush1.msra.mxu0 %v2507
        %2978 = vmatprep.subr.mxu0 0.0
        %2979 = vmatpush1.msra.mxu0 %v2506
        %2980 = vmatprep.subr.mxu0 0.0
        %2981 = vmatpush1.msra.mxu0 %v2505
        %2982 = vmatprep.subr.mxu0 0.0
        %2983 = vmatpush1.msra.mxu0 %v2504
        %2984 = vmatprep.subr.mxu0 0.0
        %2985 = vmatpush1.msra.mxu0 %v2503
        %2986 = vmatprep.subr.mxu0 0.0
        %2987 = vmatpush1.msra.mxu0 %v2502
        %2988 = vmatprep.subr.mxu0 0.0
        %2989 = vmatpush1.msra.mxu0 %v2501
        %2990 = vmatprep.subr.mxu0 0.0
        %2991 = vmatpush1.msra.mxu0 %v2500
        %2992 = vmatprep.subr.mxu0 0.0
        %2993 = vmatpush2.msra.mxu0 0.0
        %2994 = vmatprep.subr.mxu0 0.0
        %2995 = vmatpush2.msra.mxu0 0.0
        %2996 = vmatprep.subr.mxu0 0.0
        %2997 = vmatpush2.msra.mxu0 0.0
        %2998 = vmatprep.subr.mxu0 0.0
        %2999 = vmatpush2.msra.mxu0 0.0
        %3000 = vmatprep.subr.mxu0 0.0
        %3001 = vmatpush2.msra.mxu0 0.0
        %3002 = vmatprep.subr.mxu0 0.0
        %3003 = vmatpush2.msra.mxu0 0.0
        %3004 = vmatprep.subr.mxu0 0.0
        %3005 = vmatpush2.msra.mxu0 0.0
        %3006 = vmatprep.subr.mxu0 0.0
        %3007 = vmatpush2.msra.mxu0 0.0
        %3008 = vmatprep.subr.mxu0 0.0
        %3009 = vmatpush2.msra.mxu0 0.0
        %3010 = vmatprep.subr.mxu0 0.0
        %3011 = vmatpush2.msra.mxu0 0.0
        %3012 = vmatprep.subr.mxu0 0.0
        %3013 = vmatpush2.msra.mxu0 0.0
        %3014 = vmatprep.subr.mxu0 0.0
        %3015 = vmatpush2.msra.mxu0 0.0
        %3016 = vmatprep.subr.mxu0 0.0
        %3017 = vmatpush2.msra.mxu0 0.0
        %3018 = vmatprep.subr.mxu0 0.0
        %3019 = vmatpush2.msra.mxu0 0.0
        %3020 = vmatprep.subr.mxu0 0.0
        %3021 = vmatpush2.msra.mxu0 0.0
        %3022 = vmatprep.subr.mxu0 0.0
        %3023 = vmatpush2.msra.mxu0 0.0
        %3024 = vmatprep.mubr.f32.mxu0 0.0
        %3025 = vmatmul.mubr.f32.gmra.mxu0 %v2886
        %v3026 = vpop.f32.mrf.mxu0
        %v3027 = vadd.f32 0.0, %v3026
        %v3028 = vpop.f32.mrf.mxu0
        %3029 = vdwg.mxu0
        %3030 = vmatprep.subr.mxu0 0.0
        %3031 = vmatpush1.msra.mxu0 0.0
        %3032 = vmatprep.subr.mxu0 0.0
        %3033 = vmatpush1.msra.mxu0 0.0
        %3034 = vmatprep.subr.mxu0 0.0
        %3035 = vmatpush1.msra.mxu0 0.0
        %3036 = vmatprep.subr.mxu0 0.0
        %3037 = vmatpush1.msra.mxu0 0.0
        %3038 = vmatprep.subr.mxu0 0.0
        %3039 = vmatpush1.msra.mxu0 0.0
        %3040 = vmatprep.subr.mxu0 0.0
        %3041 = vmatpush1.msra.mxu0 0.0
        %3042 = vmatprep.subr.mxu0 0.0
        %3043 = vmatpush1.msra.mxu0 0.0
        %3044 = vmatprep.subr.mxu0 0.0
        %3045 = vmatpush1.msra.mxu0 0.0
        %3046 = vmatprep.subr.mxu0 0.0
        %3047 = vmatpush1.msra.mxu0 %v2498
        %3048 = vmatprep.subr.mxu0 0.0
        %3049 = vmatpush1.msra.mxu0 %v2497
        %3050 = vmatprep.subr.mxu0 0.0
        %3051 = vmatpush1.msra.mxu0 %v2496
        %3052 = vmatprep.subr.mxu0 0.0
        %3053 = vmatpush1.msra.mxu0 %v2495
        %3054 = vmatprep.subr.mxu0 0.0
        %3055 = vmatpush1.msra.mxu0 %v2494
        %3056 = vmatprep.subr.mxu0 0.0
        %3057 = vmatpush1.msra.mxu0 %v2493
        %3058 = vmatprep.subr.mxu0 0.0
        %3059 = vmatpush1.msra.mxu0 %v2492
        %3060 = vmatprep.subr.mxu0 0.0
        %3061 = vmatpush1.msra.mxu0 %v2491
        %3062 = vmatprep.subr.mxu0 0.0
        %3063 = vmatpush2.msra.mxu0 0.0
        %3064 = vmatprep.subr.mxu0 0.0
        %3065 = vmatpush2.msra.mxu0 0.0
        %3066 = vmatprep.subr.mxu0 0.0
        %3067 = vmatpush2.msra.mxu0 0.0
        %3068 = vmatprep.subr.mxu0 0.0
        %3069 = vmatpush2.msra.mxu0 0.0
        %3070 = vmatprep.subr.mxu0 0.0
        %3071 = vmatpush2.msra.mxu0 0.0
        %3072 = vmatprep.subr.mxu0 0.0
        %3073 = vmatpush2.msra.mxu0 0.0
        %3074 = vmatprep.subr.mxu0 0.0
        %3075 = vmatpush2.msra.mxu0 0.0
        %3076 = vmatprep.subr.mxu0 0.0
        %3077 = vmatpush2.msra.mxu0 0.0
        %3078 = vmatprep.subr.mxu0 0.0
        %3079 = vmatpush2.msra.mxu0 0.0
        %3080 = vmatprep.subr.mxu0 0.0
        %3081 = vmatpush2.msra.mxu0 0.0
        %3082 = vmatprep.subr.mxu0 0.0
        %3083 = vmatpush2.msra.mxu0 0.0
        %3084 = vmatprep.subr.mxu0 0.0
        %3085 = vmatpush2.msra.mxu0 0.0
        %3086 = vmatprep.subr.mxu0 0.0
        %3087 = vmatpush2.msra.mxu0 0.0
        %3088 = vmatprep.subr.mxu0 0.0
        %3089 = vmatpush2.msra.mxu0 0.0
        %3090 = vmatprep.subr.mxu0 0.0
        %3091 = vmatpush2.msra.mxu0 0.0
        %3092 = vmatprep.subr.mxu0 0.0
        %3093 = vmatpush2.msra.mxu0 0.0
        %3094 = vmatprep.mubr.f32.mxu0 0.0
        %3095 = vmatmul.mubr.f32.gmra.mxu0 %v2670
        %v3096 = vpop.f32.mrf.mxu0
        %v3097 = vadd.f32 %v3027, %v3096
        %v3098 = vpop.f32.mrf.mxu0
        %3099 = vdwg.mxu0
        %s3100 = scalar_lea.vmem [#allocation4], 11
        %v3101 = vld [vmem:[%s3100] ss:$4 sm:$0x3]
        %v3103 = vsel %vm2487, %v3101, 0
        %3105 = vmatprep.subr.mxu0 0.0
        %3106 = vmatpush1.msra.mxu0 0.0
        %3107 = vmatprep.subr.mxu0 0.0
        %3108 = vmatpush1.msra.mxu0 0.0
        %3109 = vmatprep.subr.mxu0 0.0
        %3110 = vmatpush1.msra.mxu0 0.0
        %3111 = vmatprep.subr.mxu0 0.0
        %3112 = vmatpush1.msra.mxu0 0.0
        %3113 = vmatprep.subr.mxu0 0.0
        %3114 = vmatpush1.msra.mxu0 0.0
        %3115 = vmatprep.subr.mxu0 0.0
        %3116 = vmatpush1.msra.mxu0 0.0
        %3117 = vmatprep.subr.mxu0 0.0
        %3118 = vmatpush1.msra.mxu0 0.0
        %3119 = vmatprep.subr.mxu0 0.0
        %3120 = vmatpush1.msra.mxu0 0.0
        %3121 = vmatprep.subr.mxu0 0.0
        %3122 = vmatpush1.msra.mxu0 %v2516
        %3123 = vmatprep.subr.mxu0 0.0
        %3124 = vmatpush1.msra.mxu0 %v2515
        %3125 = vmatprep.subr.mxu0 0.0
        %3126 = vmatpush1.msra.mxu0 %v2514
        %3127 = vmatprep.subr.mxu0 0.0
        %3128 = vmatpush1.msra.mxu0 %v2513
        %3129 = vmatprep.subr.mxu0 0.0
        %3130 = vmatpush1.msra.mxu0 %v2512
        %3131 = vmatprep.subr.mxu0 0.0
        %3132 = vmatpush1.msra.mxu0 %v2511
        %3133 = vmatprep.subr.mxu0 0.0
        %3134 = vmatpush1.msra.mxu0 %v2510
        %3135 = vmatprep.subr.mxu0 0.0
        %3136 = vmatpush1.msra.mxu0 %v2509
        %3137 = vmatprep.subr.mxu0 0.0
        %3138 = vmatpush2.msra.mxu0 0.0
        %3139 = vmatprep.subr.mxu0 0.0
        %3140 = vmatpush2.msra.mxu0 0.0
        %3141 = vmatprep.subr.mxu0 0.0
        %3142 = vmatpush2.msra.mxu0 0.0
        %3143 = vmatprep.subr.mxu0 0.0
        %3144 = vmatpush2.msra.mxu0 0.0
        %3145 = vmatprep.subr.mxu0 0.0
        %3146 = vmatpush2.msra.mxu0 0.0
        %3147 = vmatprep.subr.mxu0 0.0
        %3148 = vmatpush2.msra.mxu0 0.0
        %3149 = vmatprep.subr.mxu0 0.0
        %3150 = vmatpush2.msra.mxu0 0.0
        %3151 = vmatprep.subr.mxu0 0.0
        %3152 = vmatpush2.msra.mxu0 0.0
        %3153 = vmatprep.subr.mxu0 0.0
        %3154 = vmatpush2.msra.mxu0 0.0
        %3155 = vmatprep.subr.mxu0 0.0
        %3156 = vmatpush2.msra.mxu0 0.0
        %3157 = vmatprep.subr.mxu0 0.0
        %3158 = vmatpush2.msra.mxu0 0.0
        %3159 = vmatprep.subr.mxu0 0.0
        %3160 = vmatpush2.msra.mxu0 0.0
        %3161 = vmatprep.subr.mxu0 0.0
        %3162 = vmatpush2.msra.mxu0 0.0
        %3163 = vmatprep.subr.mxu0 0.0
        %3164 = vmatpush2.msra.mxu0 0.0
        %3165 = vmatprep.subr.mxu0 0.0
        %3166 = vmatpush2.msra.mxu0 0.0
        %3167 = vmatprep.subr.mxu0 0.0
        %3168 = vmatpush2.msra.mxu0 0.0
        %3169 = vmatprep.mubr.f32.mxu0 0.0
        %3170 = vmatmul.mubr.f32.gmra.mxu0 %v3103
        %v3171 = vpop.f32.mrf.mxu0
        %v3172 = vadd.f32 0.0, %v3171
        %v3173 = vpop.f32.mrf.mxu0
        %3174 = vdwg.mxu0
        %v3175 = vadd.f32 %v3097, %v3172
        %3176 = vmatprep.subr.mxu0 0.0
        %3177 = vmatpush1.msra.mxu0 0.0
        %3178 = vmatprep.subr.mxu0 0.0
        %3179 = vmatpush1.msra.mxu0 0.0
        %3180 = vmatprep.subr.mxu0 0.0
        %3181 = vmatpush1.msra.mxu0 0.0
        %3182 = vmatprep.subr.mxu0 0.0
        %3183 = vmatpush1.msra.mxu0 0.0
        %3184 = vmatprep.subr.mxu0 0.0
        %3185 = vmatpush1.msra.mxu0 0.0
        %3186 = vmatprep.subr.mxu0 0.0
        %3187 = vmatpush1.msra.mxu0 0.0
        %3188 = vmatprep.subr.mxu0 0.0
        %3189 = vmatpush1.msra.mxu0 0.0
        %3190 = vmatprep.subr.mxu0 0.0
        %3191 = vmatpush1.msra.mxu0 0.0
        %3192 = vmatprep.subr.mxu0 0.0
        %3193 = vmatpush1.msra.mxu0 %v2507
        %3194 = vmatprep.subr.mxu0 0.0
        %3195 = vmatpush1.msra.mxu0 %v2506
        %3196 = vmatprep.subr.mxu0 0.0
        %3197 = vmatpush1.msra.mxu0 %v2505
        %3198 = vmatprep.subr.mxu0 0.0
        %3199 = vmatpush1.msra.mxu0 %v2504
        %3200 = vmatprep.subr.mxu0 0.0
        %3201 = vmatpush1.msra.mxu0 %v2503
        %3202 = vmatprep.subr.mxu0 0.0
        %3203 = vmatpush1.msra.mxu0 %v2502
        %3204 = vmatprep.subr.mxu0 0.0
        %3205 = vmatpush1.msra.mxu0 %v2501
        %3206 = vmatprep.subr.mxu0 0.0
        %3207 = vmatpush1.msra.mxu0 %v2500
        %3208 = vmatprep.subr.mxu0 0.0
        %3209 = vmatpush2.msra.mxu0 0.0
        %3210 = vmatprep.subr.mxu0 0.0
        %3211 = vmatpush2.msra.mxu0 0.0
        %3212 = vmatprep.subr.mxu0 0.0
        %3213 = vmatpush2.msra.mxu0 0.0
        %3214 = vmatprep.subr.mxu0 0.0
        %3215 = vmatpush2.msra.mxu0 0.0
        %3216 = vmatprep.subr.mxu0 0.0
        %3217 = vmatpush2.msra.mxu0 0.0
        %3218 = vmatprep.subr.mxu0 0.0
        %3219 = vmatpush2.msra.mxu0 0.0
        %3220 = vmatprep.subr.mxu0 0.0
        %3221 = vmatpush2.msra.mxu0 0.0
        %3222 = vmatprep.subr.mxu0 0.0
        %3223 = vmatpush2.msra.mxu0 0.0
        %3224 = vmatprep.subr.mxu0 0.0
        %3225 = vmatpush2.msra.mxu0 0.0
        %3226 = vmatprep.subr.mxu0 0.0
        %3227 = vmatpush2.msra.mxu0 0.0
        %3228 = vmatprep.subr.mxu0 0.0
        %3229 = vmatpush2.msra.mxu0 0.0
        %3230 = vmatprep.subr.mxu0 0.0
        %3231 = vmatpush2.msra.mxu0 0.0
        %3232 = vmatprep.subr.mxu0 0.0
        %3233 = vmatpush2.msra.mxu0 0.0
        %3234 = vmatprep.subr.mxu0 0.0
        %3235 = vmatpush2.msra.mxu0 0.0
        %3236 = vmatprep.subr.mxu0 0.0
        %3237 = vmatpush2.msra.mxu0 0.0
        %3238 = vmatprep.subr.mxu0 0.0
        %3239 = vmatpush2.msra.mxu0 0.0
        %3240 = vmatprep.mubr.f32.mxu0 0.0
        %3241 = vmatmul.mubr.f32.gmra.mxu0 %v3103
        %v3242 = vpop.f32.mrf.mxu0
        %v3243 = vadd.f32 0.0, %v3242
        %v3244 = vpop.f32.mrf.mxu0
        %3245 = vdwg.mxu0
        %3246 = vmatprep.subr.mxu0 0.0
        %3247 = vmatpush1.msra.mxu0 0.0
        %3248 = vmatprep.subr.mxu0 0.0
        %3249 = vmatpush1.msra.mxu0 0.0
        %3250 = vmatprep.subr.mxu0 0.0
        %3251 = vmatpush1.msra.mxu0 0.0
        %3252 = vmatprep.subr.mxu0 0.0
        %3253 = vmatpush1.msra.mxu0 0.0
        %3254 = vmatprep.subr.mxu0 0.0
        %3255 = vmatpush1.msra.mxu0 0.0
        %3256 = vmatprep.subr.mxu0 0.0
        %3257 = vmatpush1.msra.mxu0 0.0
        %3258 = vmatprep.subr.mxu0 0.0
        %3259 = vmatpush1.msra.mxu0 0.0
        %3260 = vmatprep.subr.mxu0 0.0
        %3261 = vmatpush1.msra.mxu0 0.0
        %3262 = vmatprep.subr.mxu0 0.0
        %3263 = vmatpush1.msra.mxu0 %v2498
        %3264 = vmatprep.subr.mxu0 0.0
        %3265 = vmatpush1.msra.mxu0 %v2497
        %3266 = vmatprep.subr.mxu0 0.0
        %3267 = vmatpush1.msra.mxu0 %v2496
        %3268 = vmatprep.subr.mxu0 0.0
        %3269 = vmatpush1.msra.mxu0 %v2495
        %3270 = vmatprep.subr.mxu0 0.0
        %3271 = vmatpush1.msra.mxu0 %v2494
        %3272 = vmatprep.subr.mxu0 0.0
        %3273 = vmatpush1.msra.mxu0 %v2493
        %3274 = vmatprep.subr.mxu0 0.0
        %3275 = vmatpush1.msra.mxu0 %v2492
        %3276 = vmatprep.subr.mxu0 0.0
        %3277 = vmatpush1.msra.mxu0 %v2491
        %3278 = vmatprep.subr.mxu0 0.0
        %3279 = vmatpush2.msra.mxu0 0.0
        %3280 = vmatprep.subr.mxu0 0.0
        %3281 = vmatpush2.msra.mxu0 0.0
        %3282 = vmatprep.subr.mxu0 0.0
        %3283 = vmatpush2.msra.mxu0 0.0
        %3284 = vmatprep.subr.mxu0 0.0
        %3285 = vmatpush2.msra.mxu0 0.0
        %3286 = vmatprep.subr.mxu0 0.0
        %3287 = vmatpush2.msra.mxu0 0.0
        %3288 = vmatprep.subr.mxu0 0.0
        %3289 = vmatpush2.msra.mxu0 0.0
        %3290 = vmatprep.subr.mxu0 0.0
        %3291 = vmatpush2.msra.mxu0 0.0
        %3292 = vmatprep.subr.mxu0 0.0
        %3293 = vmatpush2.msra.mxu0 0.0
        %3294 = vmatprep.subr.mxu0 0.0
        %3295 = vmatpush2.msra.mxu0 0.0
        %3296 = vmatprep.subr.mxu0 0.0
        %3297 = vmatpush2.msra.mxu0 0.0
        %3298 = vmatprep.subr.mxu0 0.0
        %3299 = vmatpush2.msra.mxu0 0.0
        %3300 = vmatprep.subr.mxu0 0.0
        %3301 = vmatpush2.msra.mxu0 0.0
        %3302 = vmatprep.subr.mxu0 0.0
        %3303 = vmatpush2.msra.mxu0 0.0
        %3304 = vmatprep.subr.mxu0 0.0
        %3305 = vmatpush2.msra.mxu0 0.0
        %3306 = vmatprep.subr.mxu0 0.0
        %3307 = vmatpush2.msra.mxu0 0.0
        %3308 = vmatprep.subr.mxu0 0.0
        %3309 = vmatpush2.msra.mxu0 0.0
        %3310 = vmatprep.mubr.f32.mxu0 0.0
        %3311 = vmatmul.mubr.f32.gmra.mxu0 %v2886
        %v3312 = vpop.f32.mrf.mxu0
        %v3313 = vadd.f32 %v3243, %v3312
        %v3314 = vpop.f32.mrf.mxu0
        %3315 = vdwg.mxu0
        %s3316 = scalar_lea.vmem [#allocation4], 12
        %v3317 = vld [vmem:[%s3316] ss:$4 sm:$0x3]
        %v3319 = vsel %vm2487, %v3317, 0
        %3321 = vmatprep.subr.mxu0 0.0
        %3322 = vmatpush1.msra.mxu0 0.0
        %3323 = vmatprep.subr.mxu0 0.0
        %3324 = vmatpush1.msra.mxu0 0.0
        %3325 = vmatprep.subr.mxu0 0.0
        %3326 = vmatpush1.msra.mxu0 0.0
        %3327 = vmatprep.subr.mxu0 0.0
        %3328 = vmatpush1.msra.mxu0 0.0
        %3329 = vmatprep.subr.mxu0 0.0
        %3330 = vmatpush1.msra.mxu0 0.0
        %3331 = vmatprep.subr.mxu0 0.0
        %3332 = vmatpush1.msra.mxu0 0.0
        %3333 = vmatprep.subr.mxu0 0.0
        %3334 = vmatpush1.msra.mxu0 0.0
        %3335 = vmatprep.subr.mxu0 0.0
        %3336 = vmatpush1.msra.mxu0 0.0
        %3337 = vmatprep.subr.mxu0 0.0
        %3338 = vmatpush1.msra.mxu0 %v2516
        %3339 = vmatprep.subr.mxu0 0.0
        %3340 = vmatpush1.msra.mxu0 %v2515
        %3341 = vmatprep.subr.mxu0 0.0
        %3342 = vmatpush1.msra.mxu0 %v2514
        %3343 = vmatprep.subr.mxu0 0.0
        %3344 = vmatpush1.msra.mxu0 %v2513
        %3345 = vmatprep.subr.mxu0 0.0
        %3346 = vmatpush1.msra.mxu0 %v2512
        %3347 = vmatprep.subr.mxu0 0.0
        %3348 = vmatpush1.msra.mxu0 %v2511
        %3349 = vmatprep.subr.mxu0 0.0
        %3350 = vmatpush1.msra.mxu0 %v2510
        %3351 = vmatprep.subr.mxu0 0.0
        %3352 = vmatpush1.msra.mxu0 %v2509
        %3353 = vmatprep.subr.mxu0 0.0
        %3354 = vmatpush2.msra.mxu0 0.0
        %3355 = vmatprep.subr.mxu0 0.0
        %3356 = vmatpush2.msra.mxu0 0.0
        %3357 = vmatprep.subr.mxu0 0.0
        %3358 = vmatpush2.msra.mxu0 0.0
        %3359 = vmatprep.subr.mxu0 0.0
        %3360 = vmatpush2.msra.mxu0 0.0
        %3361 = vmatprep.subr.mxu0 0.0
        %3362 = vmatpush2.msra.mxu0 0.0
        %3363 = vmatprep.subr.mxu0 0.0
        %3364 = vmatpush2.msra.mxu0 0.0
        %3365 = vmatprep.subr.mxu0 0.0
        %3366 = vmatpush2.msra.mxu0 0.0
        %3367 = vmatprep.subr.mxu0 0.0
        %3368 = vmatpush2.msra.mxu0 0.0
        %3369 = vmatprep.subr.mxu0 0.0
        %3370 = vmatpush2.msra.mxu0 0.0
        %3371 = vmatprep.subr.mxu0 0.0
        %3372 = vmatpush2.msra.mxu0 0.0
        %3373 = vmatprep.subr.mxu0 0.0
        %3374 = vmatpush2.msra.mxu0 0.0
        %3375 = vmatprep.subr.mxu0 0.0
        %3376 = vmatpush2.msra.mxu0 0.0
        %3377 = vmatprep.subr.mxu0 0.0
        %3378 = vmatpush2.msra.mxu0 0.0
        %3379 = vmatprep.subr.mxu0 0.0
        %3380 = vmatpush2.msra.mxu0 0.0
        %3381 = vmatprep.subr.mxu0 0.0
        %3382 = vmatpush2.msra.mxu0 0.0
        %3383 = vmatprep.subr.mxu0 0.0
        %3384 = vmatpush2.msra.mxu0 0.0
        %3385 = vmatprep.mubr.f32.mxu0 0.0
        %3386 = vmatmul.mubr.f32.gmra.mxu0 %v3319
        %v3387 = vpop.f32.mrf.mxu0
        %v3388 = vadd.f32 0.0, %v3387
        %v3389 = vpop.f32.mrf.mxu0
        %3390 = vdwg.mxu0
        %v3391 = vadd.f32 %v3313, %v3388
        %v3392 = vmax.f32 %v3175, %v3391
        %v3393 = vmax.f32 %v2959, %v3392
        %v3394 = vld [vmem:[%s6] sm:$0x1]
        %v3396 = vlaneseq
        %v3397 = vshrl.u32 %v3396, 7
        %v3398 = vsub.s32 0, %v3397
        %v3399 = vrot.slane %v3394, %v3398
        %v3401 = vadd.f32 %v3393, %v3399
        %v3402 = vmax.f32 %v3401, 0.0
        %vm3403 = vcmask 517120
        %v3404 = vsel %vm3403, %v3402, 0.0
        %v3405 = vrot.slane %v3404, 4
        %v3406 = vadd.f32 %v3404, %v3405
        %v3407 = vrot.slane %v3406, 2
        %v3408 = vadd.f32 %v3406, %v3407
        %v3409 = vrot.slane %v3408, 1
        %v3410 = vadd.f32 %v3408, %v3409
        %v3411 = vrcp.pop 2.0
        %v3412 = vmul.f32 %v3410, %v3411
        %v3413 = vld [vmem:[%s7] sm:$0xff]
        %v3414 = vld [vmem:[%s7 + $0x8] sm:$0xff]
        %v3415 = vld [vmem:[%s7 + $0x10] sm:$0xff]
        %v3416 = vld [vmem:[%s7 + $0x18] sm:$0xff]
        %v3417 = vld [vmem:[%s7 + $0x20] sm:$0xff]
        %v3418 = vld [vmem:[%s7 + $0x28] sm:$0xff]
        %v3419 = vld [vmem:[%s7 + $0x30] sm:$0xff]
        %v3420 = vld [vmem:[%s7 + $0x38] sm:$0xff]
        %v3421 = vld [vmem:[%s8] sm:$0x1]
        %v3423 = vsel %vm2487, %v3412, 0
        %3425 = vmatprep.subr.mxu0 0.0
        %3426 = vmatpush1.msra.mxu0 0.0
        %3427 = vmatprep.subr.mxu0 0.0
        %3428 = vmatpush1.msra.mxu0 0.0
        %3429 = vmatprep.subr.mxu0 0.0
        %3430 = vmatpush1.msra.mxu0 0.0
        %3431 = vmatprep.subr.mxu0 0.0
        %3432 = vmatpush1.msra.mxu0 0.0
        %3433 = vmatprep.subr.mxu0 0.0
        %3434 = vmatpush1.msra.mxu0 0.0
        %3435 = vmatprep.subr.mxu0 0.0
        %3436 = vmatpush1.msra.mxu0 0.0
        %3437 = vmatprep.subr.mxu0 0.0
        %3438 = vmatpush1.msra.mxu0 0.0
        %3439 = vmatprep.subr.mxu0 0.0
        %3440 = vmatpush1.msra.mxu0 0.0
        %3441 = vmatprep.subr.mxu0 0.0
        %3442 = vmatpush1.msra.mxu0 %v3420
        %3443 = vmatprep.subr.mxu0 0.0
        %3444 = vmatpush1.msra.mxu0 %v3419
        %3445 = vmatprep.subr.mxu0 0.0
        %3446 = vmatpush1.msra.mxu0 %v3418
        %3447 = vmatprep.subr.mxu0 0.0
        %3448 = vmatpush1.msra.mxu0 %v3417
        %3449 = vmatprep.subr.mxu0 0.0
        %3450 = vmatpush1.msra.mxu0 %v3416
        %3451 = vmatprep.subr.mxu0 0.0
        %3452 = vmatpush1.msra.mxu0 %v3415
        %3453 = vmatprep.subr.mxu0 0.0
        %3454 = vmatpush1.msra.mxu0 %v3414
        %3455 = vmatprep.subr.mxu0 0.0
        %3456 = vmatpush1.msra.mxu0 %v3413
        %3457 = vmatprep.subr.mxu0 0.0
        %3458 = vmatpush2.msra.mxu0 0.0
        %3459 = vmatprep.subr.mxu0 0.0
        %3460 = vmatpush2.msra.mxu0 0.0
        %3461 = vmatprep.subr.mxu0 0.0
        %3462 = vmatpush2.msra.mxu0 0.0
        %3463 = vmatprep.subr.mxu0 0.0
        %3464 = vmatpush2.msra.mxu0 0.0
        %3465 = vmatprep.subr.mxu0 0.0
        %3466 = vmatpush2.msra.mxu0 0.0
        %3467 = vmatprep.subr.mxu0 0.0
        %3468 = vmatpush2.msra.mxu0 0.0
        %3469 = vmatprep.subr.mxu0 0.0
        %3470 = vmatpush2.msra.mxu0 0.0
        %3471 = vmatprep.subr.mxu0 0.0
        %3472 = vmatpush2.msra.mxu0 0.0
        %3473 = vmatprep.subr.mxu0 0.0
        %3474 = vmatpush2.msra.mxu0 0.0
        %3475 = vmatprep.subr.mxu0 0.0
        %3476 = vmatpush2.msra.mxu0 0.0
        %3477 = vmatprep.subr.mxu0 0.0
        %3478 = vmatpush2.msra.mxu0 0.0
        %3479 = vmatprep.subr.mxu0 0.0
        %3480 = vmatpush2.msra.mxu0 0.0
        %3481 = vmatprep.subr.mxu0 0.0
        %3482 = vmatpush2.msra.mxu0 0.0
        %3483 = vmatprep.subr.mxu0 0.0
        %3484 = vmatpush2.msra.mxu0 0.0
        %3485 = vmatprep.subr.mxu0 0.0
        %3486 = vmatpush2.msra.mxu0 0.0
        %3487 = vmatprep.subr.mxu0 0.0
        %3488 = vmatpush2.msra.mxu0 0.0
        %3489 = vmatprep.mubr.f32.mxu0 0.0
        %3490 = vmatmul.mubr.f32.gmra.mxu0 %v3423
        %v3491 = vpop.f32.mrf.mxu0
        %v3492 = vadd.f32 %v3421, %v3491
        %v3493 = vpop.f32.mrf.mxu0
        %3494 = vdwg.mxu0
        %vm3495 = vcmask 278528
        %v3496 = vsel %vm3495, %v3492, -inf
        %3497 = vmax.xlane.f32.xlu0 %v3496
        %v3498 = vpop.xlane.xlu0 %3497
        %v3499 = vsub.f32 %v3492, %v3498
        %v3500 = vmul.f32 %v3499, 1.442695
        %v3501 = vpow.pop %v3500
        %v3502 = vsel %vm3495, %v3501, 0.0
        %3503 = vadd.xlane.f32.xlu0 %v3502
        %v3504 = vpop.xlane.xlu0 %3503
        %v3505 = vlog2.pop %v3504
        %v3506 = vmul.f32 %v3505, 0.6931472
        %v3507 = vsub.f32 %v3499, %v3506
        %3508 = vst.msk [vmem:[%s324] sm:$0x1] %vm3495, %v3507
        %s3509 = sand.u32 %s225, 1
        %s3510 = scalar_lea.sflag [#allocation6], %s3509
        %s3511 = sand.u32 %s225, 1
        %s3512 = scalar_lea.vmem [#allocation5], %s3511
        // Predicated region
        $region57: #{m5_forward.1} parent=55 // pred_check
          %p3513 = pneg %p235
        $region58: #{m5_forward.1} parent=55 // pred_check_branch
          %3515 = sbr.rel (%p3513) target = $region60
        $region59: #{m5_forward.1} parent=55 // pred_region
          %s3517 = ssub.s32 16, 16
          %3518 = vsyncadd %s3510, %s3517
          %s3519 = smul.addr %s23, 16
          %s3520 = scalar_lea.hbm %s9, %s3519
          %s3522 = sshll.u32 %s3512, 4
          %s3523 = int_to_ptr.vmem [resolvable:$true] %s3522
          %3525 = dma.vmem_to_hbm [thread:$0]  %s3523, 16, %s3520, %s3510
        $region60: #{m5_forward.1} parent=55 // pred_fallthru
          _
      $region56: #{m5_forward.1} parent=5 // pred_fallthru
        _
      %p3526 = scmp.le.s32.totalorder 2, %s18
      // Predicated region
      $region61: #{m5_forward.1} parent=5 // pred_check
        %p3527 = pneg %p3526
      $region62: #{m5_forward.1} parent=5 // pred_check_branch
        %3529 = sbr.rel (%p3527) target = $region64
      $region63: #{m5_forward.1} parent=5 // pred_region
        %s3530 = ssub.s32 %s18, 2
        // Predicated region
        $region65: #{m5_forward.1} parent=63 // pred_check
          %p3531 = pneg %p241
        $region66: #{m5_forward.1} parent=63 // pred_check_branch
          %3533 = sbr.rel (%p3531) target = $region68
        $region67: #{m5_forward.1} parent=63 // pred_region
          %s3534 = sand.u32 %s226, 1
          %s3535 = scalar_lea.sflag [#allocation6], %s3534
          %s3536 = sand.u32 %s226, 1
          %s3537 = scalar_lea.vmem [#allocation5], %s3536
          %3538 = dma.done %s3535, 16
        $region68: #{m5_forward.1} parent=63 // pred_fallthru
          _
      $region64: #{m5_forward.1} parent=5 // pred_fallthru
        _
    $region6: #{m5_forward.1} parent=1 // loop_footer
      %s22 = sadd.s32 1, %s18
    $region7: #{m5_forward.1} parent=1 // loop_footer_branch
      %17 = sbr.rel target = $region3
    $region8: #{m5_forward.1} parent=1 // loop_exit
      _
    %3539 = vsyncpa [#allocation6], 1
    %s3540 = scalar_lea.sflag [#allocation6], 1
    %3541 = vsyncpa %s3540, 1

</llo_original>
